<compile_context>
chip_gen: v7x
topology: tpu7x:2x2x1
jax: 0.10.0
libtpu: 0.0.40
codegen_flags: <defaults>
</compile_context>

<pallas_src>
import jax
import jax.numpy as jnp
from jax.experimental import pallas as pl
from jax.experimental.pallas import tpu as pltpu


COMPUTE_DTYPE = jnp.bfloat16   # MXU operand dtype; accumulation stays f32


# ----------------------------------------------------------------------------
# Single-block helpers (whole working set < 100 KB -> fully VMEM resident).
# ----------------------------------------------------------------------------
def _full_spec(shape):
    nd = len(shape)
    return pl.BlockSpec(shape, lambda i, _nd=nd: (0,) * _nd)


# ----------------------------------------------------------------------------
# In-kernel bi-LSTM (both directions in lockstep) + element-wise max over time.
# Prepared weight layout (built once at trace time in prepare_params):
#   wih_int : (D1, 8H)  per gate g in {i,f,c,o}: columns [g_fwd | g_bwd]
#   whh_bd  : (2H, 8H)  block diagonal: rows 0:H drive fwd cols, H:2H bwd cols
#   b_int   : (1, 8H)   b_ih + b_hh in the same column layout (f32)
# Returns (N, 2H) = [max_t h_fwd | max_t h_bwd]  (== torch cat([fwd,bwd]) max).
# ----------------------------------------------------------------------------
def _bilstm_maxpool(x, wih_int, whh_bd, b_int, H):
    N, L, _ = x.shape
    G = 8 * H
    # Input projections for every timestep at once; bias folded in here so the
    # serial recurrence carries no per-step bias broadcast.
    xg = jnp.einsum('nld,dg->nlg', x, wih_int,
                    preferred_element_type=jnp.float32) + b_int        # (N,L,8H)
    # Forward columns read time t, backward columns read time L-1-t.
    col = jax.lax.broadcasted_iota(jnp.int32, (1, G), 1)
    is_fwd = (col % (2 * H)) < H
    xg_steps = [jnp.where(is_fwd, xg[:, t, :], xg[:, L - 1 - t, :])
                for t in range(L)]                       # independent of state

    hc = jnp.zeros((N, 2 * H), jnp.float32)
    cc = jnp.zeros((N, 2 * H), jnp.float32)
    m = jnp.full((N, 2 * H), -jnp.inf, jnp.float32)
    for t in range(L):   # static unroll; strictly serial recurrence
        g = xg_steps[t] + jnp.dot(hc.astype(COMPUTE_DTYPE), whh_bd,
                                  preferred_element_type=jnp.float32)
        i_g = jax.nn.sigmoid(g[:, 0:2 * H])
        f_g = jax.nn.sigmoid(g[:, 2 * H:4 * H])
        c_g = jnp.tanh(g[:, 4 * H:6 * H])
        o_g = jax.nn.sigmoid(g[:, 6 * H:8 * H])
        cc = f_g * cc + i_g * c_g
        hc = o_g * jnp.tanh(cc)
        m = jnp.maximum(m, hc)                           # running max over time
    return m


# ----------------------------------------------------------------------------
# Fully fused forward kernel.
# ----------------------------------------------------------------------------
def _fused_kernel(xt_ref, xh_ref, sp_ref, lsp_ref,
                  wih_t_ref, whh_t_ref, b_t_ref,
                  wih_h_ref, whh_h_ref, b_h_ref,
                  wt_ref, bt_ref,
                  wsl_ref, bsl_ref,
                  wp_ref, bp_ref,
                  watt_ref,
                  w1_ref, b1_ref, w2_ref, b2_ref,
                  out_ref):
    xt = xt_ref[...]          # (T*B, L, D1)  turn-major embedded turn tokens
    xh = xh_ref[...]          # (B, Lh, D1)   embedded hypothesis tokens
    sp = sp_ref[...]          # (B, T, P)     one-hot speaker per turn (f32)
    lsp = lsp_ref[...]        # (B, P)        one-hot last speaker (f32)
    H = wt_ref.shape[1]
    TB = xt.shape[0]
    B = xh.shape[0]
    T = TB // B
    P = sp.shape[-1]

    # --- encoders: all T turns in one batched recurrence; hypothesis separate
    m_turn = _bilstm_maxpool(xt, wih_t_ref[...], whh_t_ref[...], b_t_ref[...], H)
    m_hyp = _bilstm_maxpool(xh, wih_h_ref[...], whh_h_ref[...], b_h_ref[...], H)

    # shared lstm_transform on turns + hypothesis in one matmul
    pooled = jnp.concatenate([m_turn, m_hyp], axis=0)                  # (TB+B,2H)
    hs_all = jnp.dot(pooled.astype(COMPUTE_DTYPE), wt_ref[...],
                     preferred_element_type=jnp.float32) + bt_ref[...]  # (TB+B,H)
    hsh = hs_all[TB:, :]                                               # (B, H)

    # --- speaker_w / listener_w fused and hoisted out of the serial loop ---
    tsl = jnp.maximum(
        jnp.dot(hs_all[:TB, :].astype(COMPUTE_DTYPE), wsl_ref[...],
                preferred_element_type=jnp.float32) + bsl_ref[...], 0.0)  # (TB,2H)

    # Per-turn update terms (do not depend on the participants recurrence).
    w = 0.9
    th_sum = jnp.zeros((B, H), jnp.float32)
    upd = []
    for i in range(T):
        hs_i = hs_all[i * B:(i + 1) * B, :]                            # (B, H)
        th_sum = th_sum + hs_i
        t_s = tsl[i * B:(i + 1) * B, 0:H]
        t_l = tsl[i * B:(i + 1) * B, H:2 * H]
        sm = sp[:, i, :][:, :, None]                                   # (B, P, 1)
        upd.append(w * (t_s[:, None, :] * sm + t_l[:, None, :] * (1.0 - sm)))

    # --- sequential participants update (reference adds participants twice) ---
    wp = wp_ref[...]
    bp = bp_ref[...]
    participants = jnp.zeros((B, P, H), jnp.float32)
    for i in range(T):
        s = upd[i] + 2.0 * participants
        z = jnp.einsum('bph,hk->bpk', s.astype(COMPUTE_DTYPE), wp,
                       preferred_element_type=jnp.float32) + bp
        participants = jnp.where(z >= 0, z, 0.01 * z)      # LeakyReLU(0.01)

    # --- head ---
    # GeneralAttention('dotp') with identical key rows: each softmax row sums
    # to 1, so   einsum('bij,bik->bk', attn, xs) == sum_t xs[:, t, :]
    #          == (sum_t turn_history[:, t, :]) @ W_att.
    # TODO(synk): reference `weighted_turns, _ = self.turn_att(...)` unpacks a
    # (B, H) tensor (latent bug); we use the full attention output (intent).
    weighted = jnp.dot(th_sum.astype(COMPUTE_DTYPE), watt_ref[...],
                       preferred_element_type=jnp.float32)             # (B, H)
    # participants[arange(B), speakers[:, -1], :] via one-hot contraction
    last_speaker = jnp.sum(lsp[:, :, None] * participants, axis=1)     # (B, H)

    # classifier: split-weight partial sums instead of a (B, 3H) lane concat
    w1 = w1_ref[...]
    hid = (jnp.dot(hsh.astype(COMPUTE_DTYPE), w1[0:H, :],
                   preferred_element_type=jnp.float32)
           + jnp.dot(last_speaker.astype(COMPUTE_DTYPE), w1[H:2 * H, :],
                     preferred_element_type=jnp.float32)
           + jnp.dot(weighted.astype(COMPUTE_DTYPE), w1[2 * H:3 * H, :],
                     preferred_element_type=jnp.float32)
           + b1_ref[...])
    hid = jnp.where(hid >= 0, hid, 0.01 * hid)                         # LeakyReLU
    out_ref[...] = jnp.dot(hid.astype(COMPUTE_DTYPE), w2_ref[...],
                           preferred_element_type=jnp.float32) + b2_ref[...]


def _fused_call(xt, xh, sp, lsp, kp):
    B = xh.shape[0]
    labels = kp['w2'].shape[1]
    inputs = (xt, xh, sp, lsp,
              *kp['lstm'], *kp['lstm_hyp'],
              kp['wt'], kp['bt'],
              kp['wsl'], kp['bsl'],
              kp['wp'], kp['bp'],
              kp['watt'],
              kp['w1'], kp['b1'], kp['w2'], kp['b2'])
    return pl.pallas_call(
        _fused_kernel,
        out_shape=jax.ShapeDtypeStruct((B, labels), jnp.float32),
        grid=(1,),
        in_specs=[_full_spec(tuple(a.shape)) for a in inputs],
        out_specs=_full_spec((B, labels)),
        compiler_params=pltpu.CompilerParams(
            dimension_semantics=("arbitrary",)),
    )(*inputs)


# ----------------------------------------------------------------------------
# Parameter init (deterministic, synthetic) + kernel-ready preparation.
# ----------------------------------------------------------------------------
def init_params(key, vocab, dim1, dim2, labels):
    H = dim2
    dim3 = 2 * dim2
    cdim = 3 * dim2
    keys = iter(jax.random.split(key, 32))

    def nrm(shape, scale=0.1):
        return scale * jax.random.normal(next(keys), shape, jnp.float32)

    emb = nrm((vocab, dim1))
    emb = emb.at[0].set(0.0)             # padding_idx=0 -> zero embedding row

    def lstm():
        # forward + reverse direction; gate order (i, f, c, o); bias = bih+bhh
        return (nrm((dim1, 4 * H)), nrm((H, 4 * H)), nrm((1, 4 * H)),
                nrm((dim1, 4 * H)), nrm((H, 4 * H)), nrm((1, 4 * H)))

    return {
        'emb': emb,
        'lstm': lstm(),
        'lstm_hyp': lstm(),
        'lstm_transform': (nrm((dim3, H)), nrm((1, H))),
        'speaker_w': (nrm((H, H)), nrm((1, H))),
        'listener_w': (nrm((H, H)), nrm((1, H))),
        'part_transform': (nrm((H, H)), nrm((1, H))),
        'att_w': nrm((H, H)),                               # bias=False
        'classifier': (nrm((cdim, cdim // 2)), nrm((1, cdim // 2)),
                       nrm((cdim // 2, labels)), nrm((1, labels))),
    }


def _interleave_gates(a_f, a_b, H):
    # (..., 4H) x 2 -> (..., 8H): per gate g in {i,f,c,o}: [g_fwd | g_bwd]
    parts = []
    for gi in range(4):
        parts.append(a_f[:, gi * H:(gi + 1) * H])
        parts.append(a_b[:, gi * H:(gi + 1) * H])
    return jnp.concatenate(parts, axis=-1)


def _block_diag_rec(whh_f, whh_b, H):
    # (H,4H) x 2 -> (2H, 8H) block-diagonal recurrent matrix (lockstep bi-LSTM)
    z = jnp.zeros((H, H), whh_f.dtype)
    top, bot = [], []
    for gi in range(4):
        top += [whh_f[:, gi * H:(gi + 1) * H], z]
        bot += [z, whh_b[:, gi * H:(gi + 1) * H]]
    return jnp.concatenate(
        [jnp.concatenate(top, axis=-1), jnp.concatenate(bot, axis=-1)], axis=0)


def prepare_params(params):
    """Build the kernel-ready (bf16, pre-interleaved / fused) parameter set."""
    H = params['lstm_transform'][0].shape[1]

    def prep_lstm(lstm):
        wih_f, whh_f, b_f, wih_b, whh_b, b_b = lstm
        return (_interleave_gates(wih_f, wih_b, H).astype(COMPUTE_DTYPE),
                _block_diag_rec(whh_f, whh_b, H).astype(COMPUTE_DTYPE),
                _interleave_gates(b_f, b_b, H).astype(jnp.float32))

    ws, bs = params['speaker_w']
    wl, bl = params['listener_w']
    wt, bt = params['lstm_transform']
    wp, bp = params['part_transform']
    w1, b1, w2, b2 = params['classifier']
    return {
        'emb': params['emb'].astype(COMPUTE_DTYPE),
        'lstm': prep_lstm(params['lstm']),
        'lstm_hyp': prep_lstm(params['lstm_hyp']),
        'wt': wt.astype(COMPUTE_DTYPE), 'bt': bt.astype(jnp.float32),
        'wsl': jnp.concatenate([ws, wl], axis=-1).astype(COMPUTE_DTYPE),
        'bsl': jnp.concatenate([bs, bl], axis=-1).astype(jnp.float32),
        'wp': wp.astype(COMPUTE_DTYPE), 'bp': bp.astype(jnp.float32),
        'watt': params['att_w'].astype(COMPUTE_DTYPE),
        'w1': w1.astype(COMPUTE_DTYPE), 'b1': b1.astype(jnp.float32),
        'w2': w2.astype(COMPUTE_DTYPE), 'b2': b2.astype(jnp.float32),
    }


# ----------------------------------------------------------------------------
# Full forward pass: two embedding gathers + one-hots (glue), one fused kernel.
# ----------------------------------------------------------------------------
@jax.jit
def hierarchical_forward(kparams, p, h, speakers):
    """p: (B, T, L) int tokens, h: (B, Lh) int tokens, speakers: (B, T) ints
    (T == number of participant slots == 5 in the reference)."""
    B, T, L = p.shape
    P = speakers.shape[-1]
    emb = kparams['emb']
    # One gather for all turns (turn-major so turn i is a contiguous B-row
    # block inside the batched encoder), one for the hypothesis.
    xt = jnp.take(emb, jnp.transpose(p, (1, 0, 2)).reshape(T * B, L), axis=0)
    xh = jnp.take(emb, h, axis=0)
    sp_onehot = jax.nn.one_hot(speakers, P, dtype=jnp.float32)        # (B, T, P)
    last_onehot = jax.nn.one_hot(speakers[:, -1], P, dtype=jnp.float32)
    return _fused_call(xt, xh, sp_onehot, last_onehot, kparams)


if __name__ == "__main__":
    vocab, dim1, dim2, labels = 50, 16, 32, 3
    B, T, L, P, Lh = 2, 5, 8, 5, 8   # T must equal P (=5) per reference code

    key = jax.random.PRNGKey(0)
    kp, kh, ks, kparam = jax.random.split(key, 4)
    p = jax.random.randint(kp, (B, T, L), 0, vocab, dtype=jnp.int32)
    h = jax.random.randint(kh, (B, Lh), 0, vocab, dtype=jnp.int32)
    speakers = jax.random.randint(ks, (B, P), 0, P, dtype=jnp.int32)

    params = init_params(kparam, vocab, dim1, dim2, labels)
    kparams = prepare_params(params)

    logits = hierarchical_forward(kparams, p, h, speakers)
    logits = jax.block_until_ready(logits)
    assert logits.shape == (B, labels)
    assert bool(jnp.all(jnp.isfinite(logits)))
    print("KERNEL_OK")
</pallas_src>

<mosaic_0001>
module attributes {stable_mosaic.version = 11 : i64} {
  func.func @_fused_kernel(%arg0: i32, %arg1: memref<10x8x16xbf16, #tpu.memory_space<vmem>>, %arg2: memref<2x8x16xbf16, #tpu.memory_space<vmem>>, %arg3: memref<2x5x5xf32, #tpu.memory_space<vmem>>, %arg4: memref<2x5xf32, #tpu.memory_space<vmem>>, %arg5: memref<16x256xbf16, #tpu.memory_space<vmem>>, %arg6: memref<64x256xbf16, #tpu.memory_space<vmem>>, %arg7: memref<1x256xf32, #tpu.memory_space<vmem>>, %arg8: memref<16x256xbf16, #tpu.memory_space<vmem>>, %arg9: memref<64x256xbf16, #tpu.memory_space<vmem>>, %arg10: memref<1x256xf32, #tpu.memory_space<vmem>>, %arg11: memref<64x32xbf16, #tpu.memory_space<vmem>>, %arg12: memref<1x32xf32, #tpu.memory_space<vmem>>, %arg13: memref<32x64xbf16, #tpu.memory_space<vmem>>, %arg14: memref<1x64xf32, #tpu.memory_space<vmem>>, %arg15: memref<32x32xbf16, #tpu.memory_space<vmem>>, %arg16: memref<1x32xf32, #tpu.memory_space<vmem>>, %arg17: memref<32x32xbf16, #tpu.memory_space<vmem>>, %arg18: memref<96x48xbf16, #tpu.memory_space<vmem>>, %arg19: memref<1x48xf32, #tpu.memory_space<vmem>>, %arg20: memref<48x3xbf16, #tpu.memory_space<vmem>>, %arg21: memref<1x3xf32, #tpu.memory_space<vmem>>, %arg22: memref<2x3xf32, #tpu.memory_space<vmem>>) attributes {dimension_semantics = [#tpu.dimension_semantics<arbitrary>], iteration_bounds = array<i64: 1>, scalar_prefetch = 0 : i64, scratch_operands = 0 : i64, tpu.core_type = #tpu.core_type<tc>, window_params = [{pipeline_mode = #tpu.pipeline_mode<synchronous>, transform_indices = @transform_0, window_bounds = array<i64: 10, 8, 16>}, {pipeline_mode = #tpu.pipeline_mode<synchronous>, transform_indices = @transform_1, window_bounds = array<i64: 2, 8, 16>}, {pipeline_mode = #tpu.pipeline_mode<synchronous>, transform_indices = @transform_2, window_bounds = array<i64: 2, 5, 5>}, {pipeline_mode = #tpu.pipeline_mode<synchronous>, transform_indices = @transform_3, window_bounds = array<i64: 2, 5>}, {pipeline_mode = #tpu.pipeline_mode<synchronous>, transform_indices = @transform_4, window_bounds = array<i64: 16, 256>}, {pipeline_mode = #tpu.pipeline_mode<synchronous>, transform_indices = @transform_5, window_bounds = array<i64: 64, 256>}, {pipeline_mode = #tpu.pipeline_mode<synchronous>, transform_indices = @transform_6, window_bounds = array<i64: 1, 256>}, {pipeline_mode = #tpu.pipeline_mode<synchronous>, transform_indices = @transform_7, window_bounds = array<i64: 16, 256>}, {pipeline_mode = #tpu.pipeline_mode<synchronous>, transform_indices = @transform_8, window_bounds = array<i64: 64, 256>}, {pipeline_mode = #tpu.pipeline_mode<synchronous>, transform_indices = @transform_9, window_bounds = array<i64: 1, 256>}, {pipeline_mode = #tpu.pipeline_mode<synchronous>, transform_indices = @transform_10, window_bounds = array<i64: 64, 32>}, {pipeline_mode = #tpu.pipeline_mode<synchronous>, transform_indices = @transform_11, window_bounds = array<i64: 1, 32>}, {pipeline_mode = #tpu.pipeline_mode<synchronous>, transform_indices = @transform_12, window_bounds = array<i64: 32, 64>}, {pipeline_mode = #tpu.pipeline_mode<synchronous>, transform_indices = @transform_13, window_bounds = array<i64: 1, 64>}, {pipeline_mode = #tpu.pipeline_mode<synchronous>, transform_indices = @transform_14, window_bounds = array<i64: 32, 32>}, {pipeline_mode = #tpu.pipeline_mode<synchronous>, transform_indices = @transform_15, window_bounds = array<i64: 1, 32>}, {pipeline_mode = #tpu.pipeline_mode<synchronous>, transform_indices = @transform_16, window_bounds = array<i64: 32, 32>}, {pipeline_mode = #tpu.pipeline_mode<synchronous>, transform_indices = @transform_17, window_bounds = array<i64: 96, 48>}, {pipeline_mode = #tpu.pipeline_mode<synchronous>, transform_indices = @transform_18, window_bounds = array<i64: 1, 48>}, {pipeline_mode = #tpu.pipeline_mode<synchronous>, transform_indices = @transform_19, window_bounds = array<i64: 48, 3>}, {pipeline_mode = #tpu.pipeline_mode<synchronous>, transform_indices = @transform_20, window_bounds = array<i64: 1, 3>}, {pipeline_mode = #tpu.pipeline_mode<synchronous>, transform_indices = @transform_21, window_bounds = array<i64: 2, 3>}]} {
    %c0 = arith.constant 0 : index
    %c0_0 = arith.constant 0 : index
    %c0_1 = arith.constant 0 : index
    %0 = vector.load %arg1[%c0, %c0_0, %c0_1] : memref<10x8x16xbf16, #tpu.memory_space<vmem>>, vector<10x8x16xbf16>
    %c0_2 = arith.constant 0 : index
    %c0_3 = arith.constant 0 : index
    %c0_4 = arith.constant 0 : index
    %1 = vector.load %arg2[%c0_2, %c0_3, %c0_4] : memref<2x8x16xbf16, #tpu.memory_space<vmem>>, vector<2x8x16xbf16>
    %c0_5 = arith.constant 0 : index
    %c0_6 = arith.constant 0 : index
    %c0_7 = arith.constant 0 : index
    %2 = vector.load %arg3[%c0_5, %c0_6, %c0_7] : memref<2x5x5xf32, #tpu.memory_space<vmem>>, vector<2x5x5xf32>
    %c0_8 = arith.constant 0 : index
    %c0_9 = arith.constant 0 : index
    %3 = vector.load %arg4[%c0_8, %c0_9] : memref<2x5xf32, #tpu.memory_space<vmem>>, vector<2x5xf32>
    %c0_10 = arith.constant 0 : index
    %c0_11 = arith.constant 0 : index
    %4 = vector.load %arg5[%c0_10, %c0_11] : memref<16x256xbf16, #tpu.memory_space<vmem>>, vector<16x256xbf16>
    %c0_12 = arith.constant 0 : index
    %c0_13 = arith.constant 0 : index
    %5 = vector.load %arg6[%c0_12, %c0_13] : memref<64x256xbf16, #tpu.memory_space<vmem>>, vector<64x256xbf16>
    %c0_14 = arith.constant 0 : index
    %c0_15 = arith.constant 0 : index
    %6 = vector.load %arg7[%c0_14, %c0_15] : memref<1x256xf32, #tpu.memory_space<vmem>>, vector<1x256xf32>
    "tpu.trace_start"() <{level = 10 : i32, message = "nld,dg->nlg"}> : () -> ()
    %cst = arith.constant dense<0.000000e+00> : vector<10x8x256xf32>
    %7 = tpu.matmul %0, %4, %cst {dimension_numbers = #tpu.dot_dimension_numbers<[2], [0], [0, 1], [1], [0, 0, 0, 1, 1, 1], [], []>} : vector<10x8x16xbf16>, vector<16x256xbf16>, vector<10x8x256xf32> -> vector<10x8x256xf32>
    "tpu.trace_stop"() : () -> ()
    %8 = vector.shape_cast %6 : vector<1x256xf32> to vector<1x1x256xf32>
    %9 = vector.broadcast %8 : vector<1x1x256xf32> to vector<10x8x256xf32>
    %10 = arith.addf %7, %9 : vector<10x8x256xf32>
    %11 = tpu.iota {dimensions = array<i32: 1>} : vector<1x256xi32>
    %c64_i32 = arith.constant 64 : i32
    %c0_i32 = arith.constant 0 : i32
    %12 = arith.cmpi eq, %c64_i32, %c0_i32 : i32
    %c1_i32 = arith.constant 1 : i32
    %13 = arith.select %12, %c1_i32, %c64_i32 : i32
    %14 = vector.broadcast %13 : i32 to vector<1x256xi32>
    %15 = arith.remsi %11, %14 : vector<1x256xi32>
    %c0_i32_16 = arith.constant 0 : i32
    %16 = vector.broadcast %c0_i32_16 : i32 to vector<1x256xi32>
    %17 = arith.cmpi ne, %15, %16 : vector<1x256xi32>
    %c0_i32_17 = arith.constant 0 : i32
    %18 = vector.broadcast %c0_i32_17 : i32 to vector<1x256xi32>
    %19 = arith.cmpi slt, %15, %18 : vector<1x256xi32>
    %c0_i32_18 = arith.constant 0 : i32
    %20 = arith.cmpi slt, %13, %c0_i32_18 : i32
    %21 = vector.broadcast %20 : i1 to vector<1x256xi1>
    %22 = vector.broadcast %21 : vector<1x256xi1> to vector<1x256xi1>
    %23 = arith.xori %19, %22 : vector<1x256xi1>
    %24 = arith.andi %23, %17 : vector<1x256xi1>
    %25 = vector.broadcast %13 : i32 to vector<1x256xi32>
    %26 = arith.addi %15, %25 : vector<1x256xi32>
    %27 = arith.select %24, %26, %15 : vector<1x256xi1>, vector<1x256xi32>
    %c32_i32 = arith.constant 32 : i32
    %28 = vector.broadcast %c32_i32 : i32 to vector<1x256xi32>
    %29 = arith.cmpi slt, %27, %28 : vector<1x256xi32>
    %30 = vector.extract_strided_slice %10 {offsets = [0, 0, 0], sizes = [10, 1, 256], strides = [1, 1, 1]} : vector<10x8x256xf32> to vector<10x1x256xf32>
    %31 = vector.shape_cast %30 : vector<10x1x256xf32> to vector<10x256xf32>
    %32 = vector.extract_strided_slice %10 {offsets = [0, 7, 0], sizes = [10, 1, 256], strides = [1, 1, 1]} : vector<10x8x256xf32> to vector<10x1x256xf32>
    %33 = vector.shape_cast %32 : vector<10x1x256xf32> to vector<10x256xf32>
    %34 = vector.shape_cast %29 : vector<1x256xi1> to vector<1x256xi1>
    %35 = vector.broadcast %34 : vector<1x256xi1> to vector<10x256xi1>
    %36 = arith.select %35, %31, %33 : vector<10x256xi1>, vector<10x256xf32>
    %37 = vector.extract_strided_slice %10 {offsets = [0, 1, 0], sizes = [10, 1, 256], strides = [1, 1, 1]} : vector<10x8x256xf32> to vector<10x1x256xf32>
    %38 = vector.shape_cast %37 : vector<10x1x256xf32> to vector<10x256xf32>
    %39 = vector.extract_strided_slice %10 {offsets = [0, 6, 0], sizes = [10, 1, 256], strides = [1, 1, 1]} : vector<10x8x256xf32> to vector<10x1x256xf32>
    %40 = vector.shape_cast %39 : vector<10x1x256xf32> to vector<10x256xf32>
    %41 = vector.shape_cast %29 : vector<1x256xi1> to vector<1x256xi1>
    %42 = vector.broadcast %41 : vector<1x256xi1> to vector<10x256xi1>
    %43 = arith.select %42, %38, %40 : vector<10x256xi1>, vector<10x256xf32>
    %44 = vector.extract_strided_slice %10 {offsets = [0, 2, 0], sizes = [10, 1, 256], strides = [1, 1, 1]} : vector<10x8x256xf32> to vector<10x1x256xf32>
    %45 = vector.shape_cast %44 : vector<10x1x256xf32> to vector<10x256xf32>
    %46 = vector.extract_strided_slice %10 {offsets = [0, 5, 0], sizes = [10, 1, 256], strides = [1, 1, 1]} : vector<10x8x256xf32> to vector<10x1x256xf32>
    %47 = vector.shape_cast %46 : vector<10x1x256xf32> to vector<10x256xf32>
    %48 = vector.shape_cast %29 : vector<1x256xi1> to vector<1x256xi1>
    %49 = vector.broadcast %48 : vector<1x256xi1> to vector<10x256xi1>
    %50 = arith.select %49, %45, %47 : vector<10x256xi1>, vector<10x256xf32>
    %51 = vector.extract_strided_slice %10 {offsets = [0, 3, 0], sizes = [10, 1, 256], strides = [1, 1, 1]} : vector<10x8x256xf32> to vector<10x1x256xf32>
    %52 = vector.shape_cast %51 : vector<10x1x256xf32> to vector<10x256xf32>
    %53 = vector.extract_strided_slice %10 {offsets = [0, 4, 0], sizes = [10, 1, 256], strides = [1, 1, 1]} : vector<10x8x256xf32> to vector<10x1x256xf32>
    %54 = vector.shape_cast %53 : vector<10x1x256xf32> to vector<10x256xf32>
    %55 = vector.shape_cast %29 : vector<1x256xi1> to vector<1x256xi1>
    %56 = vector.broadcast %55 : vector<1x256xi1> to vector<10x256xi1>
    %57 = arith.select %56, %52, %54 : vector<10x256xi1>, vector<10x256xf32>
    %58 = vector.extract_strided_slice %10 {offsets = [0, 4, 0], sizes = [10, 1, 256], strides = [1, 1, 1]} : vector<10x8x256xf32> to vector<10x1x256xf32>
    %59 = vector.shape_cast %58 : vector<10x1x256xf32> to vector<10x256xf32>
    %60 = vector.extract_strided_slice %10 {offsets = [0, 3, 0], sizes = [10, 1, 256], strides = [1, 1, 1]} : vector<10x8x256xf32> to vector<10x1x256xf32>
    %61 = vector.shape_cast %60 : vector<10x1x256xf32> to vector<10x256xf32>
    %62 = vector.shape_cast %29 : vector<1x256xi1> to vector<1x256xi1>
    %63 = vector.broadcast %62 : vector<1x256xi1> to vector<10x256xi1>
    %64 = arith.select %63, %59, %61 : vector<10x256xi1>, vector<10x256xf32>
    %65 = vector.extract_strided_slice %10 {offsets = [0, 5, 0], sizes = [10, 1, 256], strides = [1, 1, 1]} : vector<10x8x256xf32> to vector<10x1x256xf32>
    %66 = vector.shape_cast %65 : vector<10x1x256xf32> to vector<10x256xf32>
    %67 = vector.extract_strided_slice %10 {offsets = [0, 2, 0], sizes = [10, 1, 256], strides = [1, 1, 1]} : vector<10x8x256xf32> to vector<10x1x256xf32>
    %68 = vector.shape_cast %67 : vector<10x1x256xf32> to vector<10x256xf32>
    %69 = vector.shape_cast %29 : vector<1x256xi1> to vector<1x256xi1>
    %70 = vector.broadcast %69 : vector<1x256xi1> to vector<10x256xi1>
    %71 = arith.select %70, %66, %68 : vector<10x256xi1>, vector<10x256xf32>
    %72 = vector.extract_strided_slice %10 {offsets = [0, 6, 0], sizes = [10, 1, 256], strides = [1, 1, 1]} : vector<10x8x256xf32> to vector<10x1x256xf32>
    %73 = vector.shape_cast %72 : vector<10x1x256xf32> to vector<10x256xf32>
    %74 = vector.extract_strided_slice %10 {offsets = [0, 1, 0], sizes = [10, 1, 256], strides = [1, 1, 1]} : vector<10x8x256xf32> to vector<10x1x256xf32>
    %75 = vector.shape_cast %74 : vector<10x1x256xf32> to vector<10x256xf32>
    %76 = vector.shape_cast %29 : vector<1x256xi1> to vector<1x256xi1>
    %77 = vector.broadcast %76 : vector<1x256xi1> to vector<10x256xi1>
    %78 = arith.select %77, %73, %75 : vector<10x256xi1>, vector<10x256xf32>
    %79 = vector.extract_strided_slice %10 {offsets = [0, 7, 0], sizes = [10, 1, 256], strides = [1, 1, 1]} : vector<10x8x256xf32> to vector<10x1x256xf32>
    %80 = vector.shape_cast %79 : vector<10x1x256xf32> to vector<10x256xf32>
    %81 = vector.extract_strided_slice %10 {offsets = [0, 0, 0], sizes = [10, 1, 256], strides = [1, 1, 1]} : vector<10x8x256xf32> to vector<10x1x256xf32>
    %82 = vector.shape_cast %81 : vector<10x1x256xf32> to vector<10x256xf32>
    %83 = vector.shape_cast %29 : vector<1x256xi1> to vector<1x256xi1>
    %84 = vector.broadcast %83 : vector<1x256xi1> to vector<10x256xi1>
    %85 = arith.select %84, %80, %82 : vector<10x256xi1>, vector<10x256xf32>
    %cst_19 = arith.constant 0.000000e+00 : f32
    %86 = vector.broadcast %cst_19 : f32 to vector<10x64xf32>
    %cst_20 = arith.constant 0.000000e+00 : f32
    %87 = vector.broadcast %cst_20 : f32 to vector<10x64xf32>
    %cst_21 = arith.constant 0xFF800000 : f32
    %88 = vector.broadcast %cst_21 : f32 to vector<10x64xf32>
    %89 = arith.truncf %86 : vector<10x64xf32> to vector<10x64xbf16>
    %cst_22 = arith.constant dense<0.000000e+00> : vector<10x256xf32>
    %90 = tpu.matmul %89, %5, %cst_22 {dimension_numbers = #tpu.dot_dimension_numbers<[1], [0], [0], [1], [0, 0, 1, 1], [], []>} : vector<10x64xbf16>, vector<64x256xbf16>, vector<10x256xf32> -> vector<10x256xf32>
    %91 = arith.addf %36, %90 : vector<10x256xf32>
    %92 = vector.extract_strided_slice %91 {offsets = [0, 0], sizes = [10, 64], strides = [1, 1]} : vector<10x256xf32> to vector<10x64xf32>
    %93 = arith.negf %92 : vector<10x64xf32>
    %94 = math.exp %93 : vector<10x64xf32>
    %cst_23 = arith.constant 1.000000e+00 : f32
    %95 = vector.broadcast %cst_23 : f32 to vector<10x64xf32>
    %96 = arith.addf %95, %94 : vector<10x64xf32>
    %97 = arith.divf %95, %96 : vector<10x64xf32>
    %98 = vector.extract_strided_slice %91 {offsets = [0, 64], sizes = [10, 64], strides = [1, 1]} : vector<10x256xf32> to vector<10x64xf32>
    %99 = arith.negf %98 : vector<10x64xf32>
    %100 = math.exp %99 : vector<10x64xf32>
    %cst_24 = arith.constant 1.000000e+00 : f32
    %101 = vector.broadcast %cst_24 : f32 to vector<10x64xf32>
    %102 = arith.addf %101, %100 : vector<10x64xf32>
    %103 = arith.divf %101, %102 : vector<10x64xf32>
    %104 = vector.extract_strided_slice %91 {offsets = [0, 128], sizes = [10, 64], strides = [1, 1]} : vector<10x256xf32> to vector<10x64xf32>
    %105 = math.tanh %104 : vector<10x64xf32>
    %106 = vector.extract_strided_slice %91 {offsets = [0, 192], sizes = [10, 64], strides = [1, 1]} : vector<10x256xf32> to vector<10x64xf32>
    %107 = arith.negf %106 : vector<10x64xf32>
    %108 = math.exp %107 : vector<10x64xf32>
    %cst_25 = arith.constant 1.000000e+00 : f32
    %109 = vector.broadcast %cst_25 : f32 to vector<10x64xf32>
    %110 = arith.addf %109, %108 : vector<10x64xf32>
    %111 = arith.divf %109, %110 : vector<10x64xf32>
    %112 = arith.mulf %103, %87 : vector<10x64xf32>
    %113 = arith.mulf %97, %105 : vector<10x64xf32>
    %114 = arith.addf %112, %113 : vector<10x64xf32>
    %115 = math.tanh %114 : vector<10x64xf32>
    %116 = arith.mulf %111, %115 : vector<10x64xf32>
    %117 = arith.maximumf %88, %116 : vector<10x64xf32>
    %118 = arith.truncf %116 : vector<10x64xf32> to vector<10x64xbf16>
    %cst_26 = arith.constant dense<0.000000e+00> : vector<10x256xf32>
    %119 = tpu.matmul %118, %5, %cst_26 {dimension_numbers = #tpu.dot_dimension_numbers<[1], [0], [0], [1], [0, 0, 1, 1], [], []>} : vector<10x64xbf16>, vector<64x256xbf16>, vector<10x256xf32> -> vector<10x256xf32>
    %120 = arith.addf %43, %119 : vector<10x256xf32>
    %121 = vector.extract_strided_slice %120 {offsets = [0, 0], sizes = [10, 64], strides = [1, 1]} : vector<10x256xf32> to vector<10x64xf32>
    %122 = arith.negf %121 : vector<10x64xf32>
    %123 = math.exp %122 : vector<10x64xf32>
    %cst_27 = arith.constant 1.000000e+00 : f32
    %124 = vector.broadcast %cst_27 : f32 to vector<10x64xf32>
    %125 = arith.addf %124, %123 : vector<10x64xf32>
    %126 = arith.divf %124, %125 : vector<10x64xf32>
    %127 = vector.extract_strided_slice %120 {offsets = [0, 64], sizes = [10, 64], strides = [1, 1]} : vector<10x256xf32> to vector<10x64xf32>
    %128 = arith.negf %127 : vector<10x64xf32>
    %129 = math.exp %128 : vector<10x64xf32>
    %cst_28 = arith.constant 1.000000e+00 : f32
    %130 = vector.broadcast %cst_28 : f32 to vector<10x64xf32>
    %131 = arith.addf %130, %129 : vector<10x64xf32>
    %132 = arith.divf %130, %131 : vector<10x64xf32>
    %133 = vector.extract_strided_slice %120 {offsets = [0, 128], sizes = [10, 64], strides = [1, 1]} : vector<10x256xf32> to vector<10x64xf32>
    %134 = math.tanh %133 : vector<10x64xf32>
    %135 = vector.extract_strided_slice %120 {offsets = [0, 192], sizes = [10, 64], strides = [1, 1]} : vector<10x256xf32> to vector<10x64xf32>
    %136 = arith.negf %135 : vector<10x64xf32>
    %137 = math.exp %136 : vector<10x64xf32>
    %cst_29 = arith.constant 1.000000e+00 : f32
    %138 = vector.broadcast %cst_29 : f32 to vector<10x64xf32>
    %139 = arith.addf %138, %137 : vector<10x64xf32>
    %140 = arith.divf %138, %139 : vector<10x64xf32>
    %141 = arith.mulf %132, %114 : vector<10x64xf32>
    %142 = arith.mulf %126, %134 : vector<10x64xf32>
    %143 = arith.addf %141, %142 : vector<10x64xf32>
    %144 = math.tanh %143 : vector<10x64xf32>
    %145 = arith.mulf %140, %144 : vector<10x64xf32>
    %146 = arith.maximumf %117, %145 : vector<10x64xf32>
    %147 = arith.truncf %145 : vector<10x64xf32> to vector<10x64xbf16>
    %cst_30 = arith.constant dense<0.000000e+00> : vector<10x256xf32>
    %148 = tpu.matmul %147, %5, %cst_30 {dimension_numbers = #tpu.dot_dimension_numbers<[1], [0], [0], [1], [0, 0, 1, 1], [], []>} : vector<10x64xbf16>, vector<64x256xbf16>, vector<10x256xf32> -> vector<10x256xf32>
    %149 = arith.addf %50, %148 : vector<10x256xf32>
    %150 = vector.extract_strided_slice %149 {offsets = [0, 0], sizes = [10, 64], strides = [1, 1]} : vector<10x256xf32> to vector<10x64xf32>
    %151 = arith.negf %150 : vector<10x64xf32>
    %152 = math.exp %151 : vector<10x64xf32>
    %cst_31 = arith.constant 1.000000e+00 : f32
    %153 = vector.broadcast %cst_31 : f32 to vector<10x64xf32>
    %154 = arith.addf %153, %152 : vector<10x64xf32>
    %155 = arith.divf %153, %154 : vector<10x64xf32>
    %156 = vector.extract_strided_slice %149 {offsets = [0, 64], sizes = [10, 64], strides = [1, 1]} : vector<10x256xf32> to vector<10x64xf32>
    %157 = arith.negf %156 : vector<10x64xf32>
    %158 = math.exp %157 : vector<10x64xf32>
    %cst_32 = arith.constant 1.000000e+00 : f32
    %159 = vector.broadcast %cst_32 : f32 to vector<10x64xf32>
    %160 = arith.addf %159, %158 : vector<10x64xf32>
    %161 = arith.divf %159, %160 : vector<10x64xf32>
    %162 = vector.extract_strided_slice %149 {offsets = [0, 128], sizes = [10, 64], strides = [1, 1]} : vector<10x256xf32> to vector<10x64xf32>
    %163 = math.tanh %162 : vector<10x64xf32>
    %164 = vector.extract_strided_slice %149 {offsets = [0, 192], sizes = [10, 64], strides = [1, 1]} : vector<10x256xf32> to vector<10x64xf32>
    %165 = arith.negf %164 : vector<10x64xf32>
    %166 = math.exp %165 : vector<10x64xf32>
    %cst_33 = arith.constant 1.000000e+00 : f32
    %167 = vector.broadcast %cst_33 : f32 to vector<10x64xf32>
    %168 = arith.addf %167, %166 : vector<10x64xf32>
    %169 = arith.divf %167, %168 : vector<10x64xf32>
    %170 = arith.mulf %161, %143 : vector<10x64xf32>
    %171 = arith.mulf %155, %163 : vector<10x64xf32>
    %172 = arith.addf %170, %171 : vector<10x64xf32>
    %173 = math.tanh %172 : vector<10x64xf32>
    %174 = arith.mulf %169, %173 : vector<10x64xf32>
    %175 = arith.maximumf %146, %174 : vector<10x64xf32>
    %176 = arith.truncf %174 : vector<10x64xf32> to vector<10x64xbf16>
    %cst_34 = arith.constant dense<0.000000e+00> : vector<10x256xf32>
    %177 = tpu.matmul %176, %5, %cst_34 {dimension_numbers = #tpu.dot_dimension_numbers<[1], [0], [0], [1], [0, 0, 1, 1], [], []>} : vector<10x64xbf16>, vector<64x256xbf16>, vector<10x256xf32> -> vector<10x256xf32>
    %178 = arith.addf %57, %177 : vector<10x256xf32>
    %179 = vector.extract_strided_slice %178 {offsets = [0, 0], sizes = [10, 64], strides = [1, 1]} : vector<10x256xf32> to vector<10x64xf32>
    %180 = arith.negf %179 : vector<10x64xf32>
    %181 = math.exp %180 : vector<10x64xf32>
    %cst_35 = arith.constant 1.000000e+00 : f32
    %182 = vector.broadcast %cst_35 : f32 to vector<10x64xf32>
    %183 = arith.addf %182, %181 : vector<10x64xf32>
    %184 = arith.divf %182, %183 : vector<10x64xf32>
    %185 = vector.extract_strided_slice %178 {offsets = [0, 64], sizes = [10, 64], strides = [1, 1]} : vector<10x256xf32> to vector<10x64xf32>
    %186 = arith.negf %185 : vector<10x64xf32>
    %187 = math.exp %186 : vector<10x64xf32>
    %cst_36 = arith.constant 1.000000e+00 : f32
    %188 = vector.broadcast %cst_36 : f32 to vector<10x64xf32>
    %189 = arith.addf %188, %187 : vector<10x64xf32>
    %190 = arith.divf %188, %189 : vector<10x64xf32>
    %191 = vector.extract_strided_slice %178 {offsets = [0, 128], sizes = [10, 64], strides = [1, 1]} : vector<10x256xf32> to vector<10x64xf32>
    %192 = math.tanh %191 : vector<10x64xf32>
    %193 = vector.extract_strided_slice %178 {offsets = [0, 192], sizes = [10, 64], strides = [1, 1]} : vector<10x256xf32> to vector<10x64xf32>
    %194 = arith.negf %193 : vector<10x64xf32>
    %195 = math.exp %194 : vector<10x64xf32>
    %cst_37 = arith.constant 1.000000e+00 : f32
    %196 = vector.broadcast %cst_37 : f32 to vector<10x64xf32>
    %197 = arith.addf %196, %195 : vector<10x64xf32>
    %198 = arith.divf %196, %197 : vector<10x64xf32>
    %199 = arith.mulf %190, %172 : vector<10x64xf32>
    %200 = arith.mulf %184, %192 : vector<10x64xf32>
    %201 = arith.addf %199, %200 : vector<10x64xf32>
    %202 = math.tanh %201 : vector<10x64xf32>
    %203 = arith.mulf %198, %202 : vector<10x64xf32>
    %204 = arith.maximumf %175, %203 : vector<10x64xf32>
    %205 = arith.truncf %203 : vector<10x64xf32> to vector<10x64xbf16>
    %cst_38 = arith.constant dense<0.000000e+00> : vector<10x256xf32>
    %206 = tpu.matmul %205, %5, %cst_38 {dimension_numbers = #tpu.dot_dimension_numbers<[1], [0], [0], [1], [0, 0, 1, 1], [], []>} : vector<10x64xbf16>, vector<64x256xbf16>, vector<10x256xf32> -> vector<10x256xf32>
    %207 = arith.addf %64, %206 : vector<10x256xf32>
    %208 = vector.extract_strided_slice %207 {offsets = [0, 0], sizes = [10, 64], strides = [1, 1]} : vector<10x256xf32> to vector<10x64xf32>
    %209 = arith.negf %208 : vector<10x64xf32>
    %210 = math.exp %209 : vector<10x64xf32>
    %cst_39 = arith.constant 1.000000e+00 : f32
    %211 = vector.broadcast %cst_39 : f32 to vector<10x64xf32>
    %212 = arith.addf %211, %210 : vector<10x64xf32>
    %213 = arith.divf %211, %212 : vector<10x64xf32>
    %214 = vector.extract_strided_slice %207 {offsets = [0, 64], sizes = [10, 64], strides = [1, 1]} : vector<10x256xf32> to vector<10x64xf32>
    %215 = arith.negf %214 : vector<10x64xf32>
    %216 = math.exp %215 : vector<10x64xf32>
    %cst_40 = arith.constant 1.000000e+00 : f32
    %217 = vector.broadcast %cst_40 : f32 to vector<10x64xf32>
    %218 = arith.addf %217, %216 : vector<10x64xf32>
    %219 = arith.divf %217, %218 : vector<10x64xf32>
    %220 = vector.extract_strided_slice %207 {offsets = [0, 128], sizes = [10, 64], strides = [1, 1]} : vector<10x256xf32> to vector<10x64xf32>
    %221 = math.tanh %220 : vector<10x64xf32>
    %222 = vector.extract_strided_slice %207 {offsets = [0, 192], sizes = [10, 64], strides = [1, 1]} : vector<10x256xf32> to vector<10x64xf32>
    %223 = arith.negf %222 : vector<10x64xf32>
    %224 = math.exp %223 : vector<10x64xf32>
    %cst_41 = arith.constant 1.000000e+00 : f32
    %225 = vector.broadcast %cst_41 : f32 to vector<10x64xf32>
    %226 = arith.addf %225, %224 : vector<10x64xf32>
    %227 = arith.divf %225, %226 : vector<10x64xf32>
    %228 = arith.mulf %219, %201 : vector<10x64xf32>
    %229 = arith.mulf %213, %221 : vector<10x64xf32>
    %230 = arith.addf %228, %229 : vector<10x64xf32>
    %231 = math.tanh %230 : vector<10x64xf32>
    %232 = arith.mulf %227, %231 : vector<10x64xf32>
    %233 = arith.maximumf %204, %232 : vector<10x64xf32>
    %234 = arith.truncf %232 : vector<10x64xf32> to vector<10x64xbf16>
    %cst_42 = arith.constant dense<0.000000e+00> : vector<10x256xf32>
    %235 = tpu.matmul %234, %5, %cst_42 {dimension_numbers = #tpu.dot_dimension_numbers<[1], [0], [0], [1], [0, 0, 1, 1], [], []>} : vector<10x64xbf16>, vector<64x256xbf16>, vector<10x256xf32> -> vector<10x256xf32>
    %236 = arith.addf %71, %235 : vector<10x256xf32>
    %237 = vector.extract_strided_slice %236 {offsets = [0, 0], sizes = [10, 64], strides = [1, 1]} : vector<10x256xf32> to vector<10x64xf32>
    %238 = arith.negf %237 : vector<10x64xf32>
    %239 = math.exp %238 : vector<10x64xf32>
    %cst_43 = arith.constant 1.000000e+00 : f32
    %240 = vector.broadcast %cst_43 : f32 to vector<10x64xf32>
    %241 = arith.addf %240, %239 : vector<10x64xf32>
    %242 = arith.divf %240, %241 : vector<10x64xf32>
    %243 = vector.extract_strided_slice %236 {offsets = [0, 64], sizes = [10, 64], strides = [1, 1]} : vector<10x256xf32> to vector<10x64xf32>
    %244 = arith.negf %243 : vector<10x64xf32>
    %245 = math.exp %244 : vector<10x64xf32>
    %cst_44 = arith.constant 1.000000e+00 : f32
    %246 = vector.broadcast %cst_44 : f32 to vector<10x64xf32>
    %247 = arith.addf %246, %245 : vector<10x64xf32>
    %248 = arith.divf %246, %247 : vector<10x64xf32>
    %249 = vector.extract_strided_slice %236 {offsets = [0, 128], sizes = [10, 64], strides = [1, 1]} : vector<10x256xf32> to vector<10x64xf32>
    %250 = math.tanh %249 : vector<10x64xf32>
    %251 = vector.extract_strided_slice %236 {offsets = [0, 192], sizes = [10, 64], strides = [1, 1]} : vector<10x256xf32> to vector<10x64xf32>
    %252 = arith.negf %251 : vector<10x64xf32>
    %253 = math.exp %252 : vector<10x64xf32>
    %cst_45 = arith.constant 1.000000e+00 : f32
    %254 = vector.broadcast %cst_45 : f32 to vector<10x64xf32>
    %255 = arith.addf %254, %253 : vector<10x64xf32>
    %256 = arith.divf %254, %255 : vector<10x64xf32>
    %257 = arith.mulf %248, %230 : vector<10x64xf32>
    %258 = arith.mulf %242, %250 : vector<10x64xf32>
    %259 = arith.addf %257, %258 : vector<10x64xf32>
    %260 = math.tanh %259 : vector<10x64xf32>
    %261 = arith.mulf %256, %260 : vector<10x64xf32>
    %262 = arith.maximumf %233, %261 : vector<10x64xf32>
    %263 = arith.truncf %261 : vector<10x64xf32> to vector<10x64xbf16>
    %cst_46 = arith.constant dense<0.000000e+00> : vector<10x256xf32>
    %264 = tpu.matmul %263, %5, %cst_46 {dimension_numbers = #tpu.dot_dimension_numbers<[1], [0], [0], [1], [0, 0, 1, 1], [], []>} : vector<10x64xbf16>, vector<64x256xbf16>, vector<10x256xf32> -> vector<10x256xf32>
    %265 = arith.addf %78, %264 : vector<10x256xf32>
    %266 = vector.extract_strided_slice %265 {offsets = [0, 0], sizes = [10, 64], strides = [1, 1]} : vector<10x256xf32> to vector<10x64xf32>
    %267 = arith.negf %266 : vector<10x64xf32>
    %268 = math.exp %267 : vector<10x64xf32>
    %cst_47 = arith.constant 1.000000e+00 : f32
    %269 = vector.broadcast %cst_47 : f32 to vector<10x64xf32>
    %270 = arith.addf %269, %268 : vector<10x64xf32>
    %271 = arith.divf %269, %270 : vector<10x64xf32>
    %272 = vector.extract_strided_slice %265 {offsets = [0, 64], sizes = [10, 64], strides = [1, 1]} : vector<10x256xf32> to vector<10x64xf32>
    %273 = arith.negf %272 : vector<10x64xf32>
    %274 = math.exp %273 : vector<10x64xf32>
    %cst_48 = arith.constant 1.000000e+00 : f32
    %275 = vector.broadcast %cst_48 : f32 to vector<10x64xf32>
    %276 = arith.addf %275, %274 : vector<10x64xf32>
    %277 = arith.divf %275, %276 : vector<10x64xf32>
    %278 = vector.extract_strided_slice %265 {offsets = [0, 128], sizes = [10, 64], strides = [1, 1]} : vector<10x256xf32> to vector<10x64xf32>
    %279 = math.tanh %278 : vector<10x64xf32>
    %280 = vector.extract_strided_slice %265 {offsets = [0, 192], sizes = [10, 64], strides = [1, 1]} : vector<10x256xf32> to vector<10x64xf32>
    %281 = arith.negf %280 : vector<10x64xf32>
    %282 = math.exp %281 : vector<10x64xf32>
    %cst_49 = arith.constant 1.000000e+00 : f32
    %283 = vector.broadcast %cst_49 : f32 to vector<10x64xf32>
    %284 = arith.addf %283, %282 : vector<10x64xf32>
    %285 = arith.divf %283, %284 : vector<10x64xf32>
    %286 = arith.mulf %277, %259 : vector<10x64xf32>
    %287 = arith.mulf %271, %279 : vector<10x64xf32>
    %288 = arith.addf %286, %287 : vector<10x64xf32>
    %289 = math.tanh %288 : vector<10x64xf32>
    %290 = arith.mulf %285, %289 : vector<10x64xf32>
    %291 = arith.maximumf %262, %290 : vector<10x64xf32>
    %292 = arith.truncf %290 : vector<10x64xf32> to vector<10x64xbf16>
    %cst_50 = arith.constant dense<0.000000e+00> : vector<10x256xf32>
    %293 = tpu.matmul %292, %5, %cst_50 {dimension_numbers = #tpu.dot_dimension_numbers<[1], [0], [0], [1], [0, 0, 1, 1], [], []>} : vector<10x64xbf16>, vector<64x256xbf16>, vector<10x256xf32> -> vector<10x256xf32>
    %294 = arith.addf %85, %293 : vector<10x256xf32>
    %295 = vector.extract_strided_slice %294 {offsets = [0, 0], sizes = [10, 64], strides = [1, 1]} : vector<10x256xf32> to vector<10x64xf32>
    %296 = arith.negf %295 : vector<10x64xf32>
    %297 = math.exp %296 : vector<10x64xf32>
    %cst_51 = arith.constant 1.000000e+00 : f32
    %298 = vector.broadcast %cst_51 : f32 to vector<10x64xf32>
    %299 = arith.addf %298, %297 : vector<10x64xf32>
    %300 = arith.divf %298, %299 : vector<10x64xf32>
    %301 = vector.extract_strided_slice %294 {offsets = [0, 64], sizes = [10, 64], strides = [1, 1]} : vector<10x256xf32> to vector<10x64xf32>
    %302 = arith.negf %301 : vector<10x64xf32>
    %303 = math.exp %302 : vector<10x64xf32>
    %cst_52 = arith.constant 1.000000e+00 : f32
    %304 = vector.broadcast %cst_52 : f32 to vector<10x64xf32>
    %305 = arith.addf %304, %303 : vector<10x64xf32>
    %306 = arith.divf %304, %305 : vector<10x64xf32>
    %307 = vector.extract_strided_slice %294 {offsets = [0, 128], sizes = [10, 64], strides = [1, 1]} : vector<10x256xf32> to vector<10x64xf32>
    %308 = math.tanh %307 : vector<10x64xf32>
    %309 = vector.extract_strided_slice %294 {offsets = [0, 192], sizes = [10, 64], strides = [1, 1]} : vector<10x256xf32> to vector<10x64xf32>
    %310 = arith.negf %309 : vector<10x64xf32>
    %311 = math.exp %310 : vector<10x64xf32>
    %cst_53 = arith.constant 1.000000e+00 : f32
    %312 = vector.broadcast %cst_53 : f32 to vector<10x64xf32>
    %313 = arith.addf %312, %311 : vector<10x64xf32>
    %314 = arith.divf %312, %313 : vector<10x64xf32>
    %315 = arith.mulf %306, %288 : vector<10x64xf32>
    %316 = arith.mulf %300, %308 : vector<10x64xf32>
    %317 = arith.addf %315, %316 : vector<10x64xf32>
    %318 = math.tanh %317 : vector<10x64xf32>
    %319 = arith.mulf %314, %318 : vector<10x64xf32>
    %320 = arith.maximumf %291, %319 : vector<10x64xf32>
    %c0_54 = arith.constant 0 : index
    %c0_55 = arith.constant 0 : index
    %321 = vector.load %arg8[%c0_54, %c0_55] : memref<16x256xbf16, #tpu.memory_space<vmem>>, vector<16x256xbf16>
    %c0_56 = arith.constant 0 : index
    %c0_57 = arith.constant 0 : index
    %322 = vector.load %arg9[%c0_56, %c0_57] : memref<64x256xbf16, #tpu.memory_space<vmem>>, vector<64x256xbf16>
    %c0_58 = arith.constant 0 : index
    %c0_59 = arith.constant 0 : index
    %323 = vector.load %arg10[%c0_58, %c0_59] : memref<1x256xf32, #tpu.memory_space<vmem>>, vector<1x256xf32>
    "tpu.trace_start"() <{level = 10 : i32, message = "nld,dg->nlg"}> : () -> ()
    %cst_60 = arith.constant dense<0.000000e+00> : vector<2x8x256xf32>
    %324 = tpu.matmul %1, %321, %cst_60 {dimension_numbers = #tpu.dot_dimension_numbers<[2], [0], [0, 1], [1], [0, 0, 0, 1, 1, 1], [], []>} : vector<2x8x16xbf16>, vector<16x256xbf16>, vector<2x8x256xf32> -> vector<2x8x256xf32>
    "tpu.trace_stop"() : () -> ()
    %325 = vector.shape_cast %323 : vector<1x256xf32> to vector<1x1x256xf32>
    %326 = vector.broadcast %325 : vector<1x1x256xf32> to vector<2x8x256xf32>
    %327 = arith.addf %324, %326 : vector<2x8x256xf32>
    %328 = tpu.iota {dimensions = array<i32: 1>} : vector<1x256xi32>
    %c64_i32_61 = arith.constant 64 : i32
    %c0_i32_62 = arith.constant 0 : i32
    %329 = arith.cmpi eq, %c64_i32_61, %c0_i32_62 : i32
    %c1_i32_63 = arith.constant 1 : i32
    %330 = arith.select %329, %c1_i32_63, %c64_i32_61 : i32
    %331 = vector.broadcast %330 : i32 to vector<1x256xi32>
    %332 = arith.remsi %328, %331 : vector<1x256xi32>
    %c0_i32_64 = arith.constant 0 : i32
    %333 = vector.broadcast %c0_i32_64 : i32 to vector<1x256xi32>
    %334 = arith.cmpi ne, %332, %333 : vector<1x256xi32>
    %c0_i32_65 = arith.constant 0 : i32
    %335 = vector.broadcast %c0_i32_65 : i32 to vector<1x256xi32>
    %336 = arith.cmpi slt, %332, %335 : vector<1x256xi32>
    %c0_i32_66 = arith.constant 0 : i32
    %337 = arith.cmpi slt, %330, %c0_i32_66 : i32
    %338 = vector.broadcast %337 : i1 to vector<1x256xi1>
    %339 = vector.broadcast %338 : vector<1x256xi1> to vector<1x256xi1>
    %340 = arith.xori %336, %339 : vector<1x256xi1>
    %341 = arith.andi %340, %334 : vector<1x256xi1>
    %342 = vector.broadcast %330 : i32 to vector<1x256xi32>
    %343 = arith.addi %332, %342 : vector<1x256xi32>
    %344 = arith.select %341, %343, %332 : vector<1x256xi1>, vector<1x256xi32>
    %c32_i32_67 = arith.constant 32 : i32
    %345 = vector.broadcast %c32_i32_67 : i32 to vector<1x256xi32>
    %346 = arith.cmpi slt, %344, %345 : vector<1x256xi32>
    %347 = vector.extract_strided_slice %327 {offsets = [0, 0, 0], sizes = [2, 1, 256], strides = [1, 1, 1]} : vector<2x8x256xf32> to vector<2x1x256xf32>
    %348 = vector.shape_cast %347 : vector<2x1x256xf32> to vector<2x256xf32>
    %349 = vector.extract_strided_slice %327 {offsets = [0, 7, 0], sizes = [2, 1, 256], strides = [1, 1, 1]} : vector<2x8x256xf32> to vector<2x1x256xf32>
    %350 = vector.shape_cast %349 : vector<2x1x256xf32> to vector<2x256xf32>
    %351 = vector.shape_cast %346 : vector<1x256xi1> to vector<1x256xi1>
    %352 = vector.broadcast %351 : vector<1x256xi1> to vector<2x256xi1>
    %353 = arith.select %352, %348, %350 : vector<2x256xi1>, vector<2x256xf32>
    %354 = vector.extract_strided_slice %327 {offsets = [0, 1, 0], sizes = [2, 1, 256], strides = [1, 1, 1]} : vector<2x8x256xf32> to vector<2x1x256xf32>
    %355 = vector.shape_cast %354 : vector<2x1x256xf32> to vector<2x256xf32>
    %356 = vector.extract_strided_slice %327 {offsets = [0, 6, 0], sizes = [2, 1, 256], strides = [1, 1, 1]} : vector<2x8x256xf32> to vector<2x1x256xf32>
    %357 = vector.shape_cast %356 : vector<2x1x256xf32> to vector<2x256xf32>
    %358 = vector.shape_cast %346 : vector<1x256xi1> to vector<1x256xi1>
    %359 = vector.broadcast %358 : vector<1x256xi1> to vector<2x256xi1>
    %360 = arith.select %359, %355, %357 : vector<2x256xi1>, vector<2x256xf32>
    %361 = vector.extract_strided_slice %327 {offsets = [0, 2, 0], sizes = [2, 1, 256], strides = [1, 1, 1]} : vector<2x8x256xf32> to vector<2x1x256xf32>
    %362 = vector.shape_cast %361 : vector<2x1x256xf32> to vector<2x256xf32>
    %363 = vector.extract_strided_slice %327 {offsets = [0, 5, 0], sizes = [2, 1, 256], strides = [1, 1, 1]} : vector<2x8x256xf32> to vector<2x1x256xf32>
    %364 = vector.shape_cast %363 : vector<2x1x256xf32> to vector<2x256xf32>
    %365 = vector.shape_cast %346 : vector<1x256xi1> to vector<1x256xi1>
    %366 = vector.broadcast %365 : vector<1x256xi1> to vector<2x256xi1>
    %367 = arith.select %366, %362, %364 : vector<2x256xi1>, vector<2x256xf32>
    %368 = vector.extract_strided_slice %327 {offsets = [0, 3, 0], sizes = [2, 1, 256], strides = [1, 1, 1]} : vector<2x8x256xf32> to vector<2x1x256xf32>
    %369 = vector.shape_cast %368 : vector<2x1x256xf32> to vector<2x256xf32>
    %370 = vector.extract_strided_slice %327 {offsets = [0, 4, 0], sizes = [2, 1, 256], strides = [1, 1, 1]} : vector<2x8x256xf32> to vector<2x1x256xf32>
    %371 = vector.shape_cast %370 : vector<2x1x256xf32> to vector<2x256xf32>
    %372 = vector.shape_cast %346 : vector<1x256xi1> to vector<1x256xi1>
    %373 = vector.broadcast %372 : vector<1x256xi1> to vector<2x256xi1>
    %374 = arith.select %373, %369, %371 : vector<2x256xi1>, vector<2x256xf32>
    %375 = vector.extract_strided_slice %327 {offsets = [0, 4, 0], sizes = [2, 1, 256], strides = [1, 1, 1]} : vector<2x8x256xf32> to vector<2x1x256xf32>
    %376 = vector.shape_cast %375 : vector<2x1x256xf32> to vector<2x256xf32>
    %377 = vector.extract_strided_slice %327 {offsets = [0, 3, 0], sizes = [2, 1, 256], strides = [1, 1, 1]} : vector<2x8x256xf32> to vector<2x1x256xf32>
    %378 = vector.shape_cast %377 : vector<2x1x256xf32> to vector<2x256xf32>
    %379 = vector.shape_cast %346 : vector<1x256xi1> to vector<1x256xi1>
    %380 = vector.broadcast %379 : vector<1x256xi1> to vector<2x256xi1>
    %381 = arith.select %380, %376, %378 : vector<2x256xi1>, vector<2x256xf32>
    %382 = vector.extract_strided_slice %327 {offsets = [0, 5, 0], sizes = [2, 1, 256], strides = [1, 1, 1]} : vector<2x8x256xf32> to vector<2x1x256xf32>
    %383 = vector.shape_cast %382 : vector<2x1x256xf32> to vector<2x256xf32>
    %384 = vector.extract_strided_slice %327 {offsets = [0, 2, 0], sizes = [2, 1, 256], strides = [1, 1, 1]} : vector<2x8x256xf32> to vector<2x1x256xf32>
    %385 = vector.shape_cast %384 : vector<2x1x256xf32> to vector<2x256xf32>
    %386 = vector.shape_cast %346 : vector<1x256xi1> to vector<1x256xi1>
    %387 = vector.broadcast %386 : vector<1x256xi1> to vector<2x256xi1>
    %388 = arith.select %387, %383, %385 : vector<2x256xi1>, vector<2x256xf32>
    %389 = vector.extract_strided_slice %327 {offsets = [0, 6, 0], sizes = [2, 1, 256], strides = [1, 1, 1]} : vector<2x8x256xf32> to vector<2x1x256xf32>
    %390 = vector.shape_cast %389 : vector<2x1x256xf32> to vector<2x256xf32>
    %391 = vector.extract_strided_slice %327 {offsets = [0, 1, 0], sizes = [2, 1, 256], strides = [1, 1, 1]} : vector<2x8x256xf32> to vector<2x1x256xf32>
    %392 = vector.shape_cast %391 : vector<2x1x256xf32> to vector<2x256xf32>
    %393 = vector.shape_cast %346 : vector<1x256xi1> to vector<1x256xi1>
    %394 = vector.broadcast %393 : vector<1x256xi1> to vector<2x256xi1>
    %395 = arith.select %394, %390, %392 : vector<2x256xi1>, vector<2x256xf32>
    %396 = vector.extract_strided_slice %327 {offsets = [0, 7, 0], sizes = [2, 1, 256], strides = [1, 1, 1]} : vector<2x8x256xf32> to vector<2x1x256xf32>
    %397 = vector.shape_cast %396 : vector<2x1x256xf32> to vector<2x256xf32>
    %398 = vector.extract_strided_slice %327 {offsets = [0, 0, 0], sizes = [2, 1, 256], strides = [1, 1, 1]} : vector<2x8x256xf32> to vector<2x1x256xf32>
    %399 = vector.shape_cast %398 : vector<2x1x256xf32> to vector<2x256xf32>
    %400 = vector.shape_cast %346 : vector<1x256xi1> to vector<1x256xi1>
    %401 = vector.broadcast %400 : vector<1x256xi1> to vector<2x256xi1>
    %402 = arith.select %401, %397, %399 : vector<2x256xi1>, vector<2x256xf32>
    %cst_68 = arith.constant 0.000000e+00 : f32
    %403 = vector.broadcast %cst_68 : f32 to vector<2x64xf32>
    %cst_69 = arith.constant 0.000000e+00 : f32
    %404 = vector.broadcast %cst_69 : f32 to vector<2x64xf32>
    %cst_70 = arith.constant 0xFF800000 : f32
    %405 = vector.broadcast %cst_70 : f32 to vector<2x64xf32>
    %406 = arith.truncf %403 : vector<2x64xf32> to vector<2x64xbf16>
    %cst_71 = arith.constant dense<0.000000e+00> : vector<2x256xf32>
    %407 = tpu.matmul %406, %322, %cst_71 {dimension_numbers = #tpu.dot_dimension_numbers<[1], [0], [0], [1], [0, 0, 1, 1], [], []>} : vector<2x64xbf16>, vector<64x256xbf16>, vector<2x256xf32> -> vector<2x256xf32>
    %408 = arith.addf %353, %407 : vector<2x256xf32>
    %409 = vector.extract_strided_slice %408 {offsets = [0, 0], sizes = [2, 64], strides = [1, 1]} : vector<2x256xf32> to vector<2x64xf32>
    %410 = arith.negf %409 : vector<2x64xf32>
    %411 = math.exp %410 : vector<2x64xf32>
    %cst_72 = arith.constant 1.000000e+00 : f32
    %412 = vector.broadcast %cst_72 : f32 to vector<2x64xf32>
    %413 = arith.addf %412, %411 : vector<2x64xf32>
    %414 = arith.divf %412, %413 : vector<2x64xf32>
    %415 = vector.extract_strided_slice %408 {offsets = [0, 64], sizes = [2, 64], strides = [1, 1]} : vector<2x256xf32> to vector<2x64xf32>
    %416 = arith.negf %415 : vector<2x64xf32>
    %417 = math.exp %416 : vector<2x64xf32>
    %cst_73 = arith.constant 1.000000e+00 : f32
    %418 = vector.broadcast %cst_73 : f32 to vector<2x64xf32>
    %419 = arith.addf %418, %417 : vector<2x64xf32>
    %420 = arith.divf %418, %419 : vector<2x64xf32>
    %421 = vector.extract_strided_slice %408 {offsets = [0, 128], sizes = [2, 64], strides = [1, 1]} : vector<2x256xf32> to vector<2x64xf32>
    %422 = math.tanh %421 : vector<2x64xf32>
    %423 = vector.extract_strided_slice %408 {offsets = [0, 192], sizes = [2, 64], strides = [1, 1]} : vector<2x256xf32> to vector<2x64xf32>
    %424 = arith.negf %423 : vector<2x64xf32>
    %425 = math.exp %424 : vector<2x64xf32>
    %cst_74 = arith.constant 1.000000e+00 : f32
    %426 = vector.broadcast %cst_74 : f32 to vector<2x64xf32>
    %427 = arith.addf %426, %425 : vector<2x64xf32>
    %428 = arith.divf %426, %427 : vector<2x64xf32>
    %429 = arith.mulf %420, %404 : vector<2x64xf32>
    %430 = arith.mulf %414, %422 : vector<2x64xf32>
    %431 = arith.addf %429, %430 : vector<2x64xf32>
    %432 = math.tanh %431 : vector<2x64xf32>
    %433 = arith.mulf %428, %432 : vector<2x64xf32>
    %434 = arith.maximumf %405, %433 : vector<2x64xf32>
    %435 = arith.truncf %433 : vector<2x64xf32> to vector<2x64xbf16>
    %cst_75 = arith.constant dense<0.000000e+00> : vector<2x256xf32>
    %436 = tpu.matmul %435, %322, %cst_75 {dimension_numbers = #tpu.dot_dimension_numbers<[1], [0], [0], [1], [0, 0, 1, 1], [], []>} : vector<2x64xbf16>, vector<64x256xbf16>, vector<2x256xf32> -> vector<2x256xf32>
    %437 = arith.addf %360, %436 : vector<2x256xf32>
    %438 = vector.extract_strided_slice %437 {offsets = [0, 0], sizes = [2, 64], strides = [1, 1]} : vector<2x256xf32> to vector<2x64xf32>
    %439 = arith.negf %438 : vector<2x64xf32>
    %440 = math.exp %439 : vector<2x64xf32>
    %cst_76 = arith.constant 1.000000e+00 : f32
    %441 = vector.broadcast %cst_76 : f32 to vector<2x64xf32>
    %442 = arith.addf %441, %440 : vector<2x64xf32>
    %443 = arith.divf %441, %442 : vector<2x64xf32>
    %444 = vector.extract_strided_slice %437 {offsets = [0, 64], sizes = [2, 64], strides = [1, 1]} : vector<2x256xf32> to vector<2x64xf32>
    %445 = arith.negf %444 : vector<2x64xf32>
    %446 = math.exp %445 : vector<2x64xf32>
    %cst_77 = arith.constant 1.000000e+00 : f32
    %447 = vector.broadcast %cst_77 : f32 to vector<2x64xf32>
    %448 = arith.addf %447, %446 : vector<2x64xf32>
    %449 = arith.divf %447, %448 : vector<2x64xf32>
    %450 = vector.extract_strided_slice %437 {offsets = [0, 128], sizes = [2, 64], strides = [1, 1]} : vector<2x256xf32> to vector<2x64xf32>
    %451 = math.tanh %450 : vector<2x64xf32>
    %452 = vector.extract_strided_slice %437 {offsets = [0, 192], sizes = [2, 64], strides = [1, 1]} : vector<2x256xf32> to vector<2x64xf32>
    %453 = arith.negf %452 : vector<2x64xf32>
    %454 = math.exp %453 : vector<2x64xf32>
    %cst_78 = arith.constant 1.000000e+00 : f32
    %455 = vector.broadcast %cst_78 : f32 to vector<2x64xf32>
    %456 = arith.addf %455, %454 : vector<2x64xf32>
    %457 = arith.divf %455, %456 : vector<2x64xf32>
    %458 = arith.mulf %449, %431 : vector<2x64xf32>
    %459 = arith.mulf %443, %451 : vector<2x64xf32>
    %460 = arith.addf %458, %459 : vector<2x64xf32>
    %461 = math.tanh %460 : vector<2x64xf32>
    %462 = arith.mulf %457, %461 : vector<2x64xf32>
    %463 = arith.maximumf %434, %462 : vector<2x64xf32>
    %464 = arith.truncf %462 : vector<2x64xf32> to vector<2x64xbf16>
    %cst_79 = arith.constant dense<0.000000e+00> : vector<2x256xf32>
    %465 = tpu.matmul %464, %322, %cst_79 {dimension_numbers = #tpu.dot_dimension_numbers<[1], [0], [0], [1], [0, 0, 1, 1], [], []>} : vector<2x64xbf16>, vector<64x256xbf16>, vector<2x256xf32> -> vector<2x256xf32>
    %466 = arith.addf %367, %465 : vector<2x256xf32>
    %467 = vector.extract_strided_slice %466 {offsets = [0, 0], sizes = [2, 64], strides = [1, 1]} : vector<2x256xf32> to vector<2x64xf32>
    %468 = arith.negf %467 : vector<2x64xf32>
    %469 = math.exp %468 : vector<2x64xf32>
    %cst_80 = arith.constant 1.000000e+00 : f32
    %470 = vector.broadcast %cst_80 : f32 to vector<2x64xf32>
    %471 = arith.addf %470, %469 : vector<2x64xf32>
    %472 = arith.divf %470, %471 : vector<2x64xf32>
    %473 = vector.extract_strided_slice %466 {offsets = [0, 64], sizes = [2, 64], strides = [1, 1]} : vector<2x256xf32> to vector<2x64xf32>
    %474 = arith.negf %473 : vector<2x64xf32>
    %475 = math.exp %474 : vector<2x64xf32>
    %cst_81 = arith.constant 1.000000e+00 : f32
    %476 = vector.broadcast %cst_81 : f32 to vector<2x64xf32>
    %477 = arith.addf %476, %475 : vector<2x64xf32>
    %478 = arith.divf %476, %477 : vector<2x64xf32>
    %479 = vector.extract_strided_slice %466 {offsets = [0, 128], sizes = [2, 64], strides = [1, 1]} : vector<2x256xf32> to vector<2x64xf32>
    %480 = math.tanh %479 : vector<2x64xf32>
    %481 = vector.extract_strided_slice %466 {offsets = [0, 192], sizes = [2, 64], strides = [1, 1]} : vector<2x256xf32> to vector<2x64xf32>
    %482 = arith.negf %481 : vector<2x64xf32>
    %483 = math.exp %482 : vector<2x64xf32>
    %cst_82 = arith.constant 1.000000e+00 : f32
    %484 = vector.broadcast %cst_82 : f32 to vector<2x64xf32>
    %485 = arith.addf %484, %483 : vector<2x64xf32>
    %486 = arith.divf %484, %485 : vector<2x64xf32>
    %487 = arith.mulf %478, %460 : vector<2x64xf32>
    %488 = arith.mulf %472, %480 : vector<2x64xf32>
    %489 = arith.addf %487, %488 : vector<2x64xf32>
    %490 = math.tanh %489 : vector<2x64xf32>
    %491 = arith.mulf %486, %490 : vector<2x64xf32>
    %492 = arith.maximumf %463, %491 : vector<2x64xf32>
    %493 = arith.truncf %491 : vector<2x64xf32> to vector<2x64xbf16>
    %cst_83 = arith.constant dense<0.000000e+00> : vector<2x256xf32>
    %494 = tpu.matmul %493, %322, %cst_83 {dimension_numbers = #tpu.dot_dimension_numbers<[1], [0], [0], [1], [0, 0, 1, 1], [], []>} : vector<2x64xbf16>, vector<64x256xbf16>, vector<2x256xf32> -> vector<2x256xf32>
    %495 = arith.addf %374, %494 : vector<2x256xf32>
    %496 = vector.extract_strided_slice %495 {offsets = [0, 0], sizes = [2, 64], strides = [1, 1]} : vector<2x256xf32> to vector<2x64xf32>
    %497 = arith.negf %496 : vector<2x64xf32>
    %498 = math.exp %497 : vector<2x64xf32>
    %cst_84 = arith.constant 1.000000e+00 : f32
    %499 = vector.broadcast %cst_84 : f32 to vector<2x64xf32>
    %500 = arith.addf %499, %498 : vector<2x64xf32>
    %501 = arith.divf %499, %500 : vector<2x64xf32>
    %502 = vector.extract_strided_slice %495 {offsets = [0, 64], sizes = [2, 64], strides = [1, 1]} : vector<2x256xf32> to vector<2x64xf32>
    %503 = arith.negf %502 : vector<2x64xf32>
    %504 = math.exp %503 : vector<2x64xf32>
    %cst_85 = arith.constant 1.000000e+00 : f32
    %505 = vector.broadcast %cst_85 : f32 to vector<2x64xf32>
    %506 = arith.addf %505, %504 : vector<2x64xf32>
    %507 = arith.divf %505, %506 : vector<2x64xf32>
    %508 = vector.extract_strided_slice %495 {offsets = [0, 128], sizes = [2, 64], strides = [1, 1]} : vector<2x256xf32> to vector<2x64xf32>
    %509 = math.tanh %508 : vector<2x64xf32>
    %510 = vector.extract_strided_slice %495 {offsets = [0, 192], sizes = [2, 64], strides = [1, 1]} : vector<2x256xf32> to vector<2x64xf32>
    %511 = arith.negf %510 : vector<2x64xf32>
    %512 = math.exp %511 : vector<2x64xf32>
    %cst_86 = arith.constant 1.000000e+00 : f32
    %513 = vector.broadcast %cst_86 : f32 to vector<2x64xf32>
    %514 = arith.addf %513, %512 : vector<2x64xf32>
    %515 = arith.divf %513, %514 : vector<2x64xf32>
    %516 = arith.mulf %507, %489 : vector<2x64xf32>
    %517 = arith.mulf %501, %509 : vector<2x64xf32>
    %518 = arith.addf %516, %517 : vector<2x64xf32>
    %519 = math.tanh %518 : vector<2x64xf32>
    %520 = arith.mulf %515, %519 : vector<2x64xf32>
    %521 = arith.maximumf %492, %520 : vector<2x64xf32>
    %522 = arith.truncf %520 : vector<2x64xf32> to vector<2x64xbf16>
    %cst_87 = arith.constant dense<0.000000e+00> : vector<2x256xf32>
    %523 = tpu.matmul %522, %322, %cst_87 {dimension_numbers = #tpu.dot_dimension_numbers<[1], [0], [0], [1], [0, 0, 1, 1], [], []>} : vector<2x64xbf16>, vector<64x256xbf16>, vector<2x256xf32> -> vector<2x256xf32>
    %524 = arith.addf %381, %523 : vector<2x256xf32>
    %525 = vector.extract_strided_slice %524 {offsets = [0, 0], sizes = [2, 64], strides = [1, 1]} : vector<2x256xf32> to vector<2x64xf32>
    %526 = arith.negf %525 : vector<2x64xf32>
    %527 = math.exp %526 : vector<2x64xf32>
    %cst_88 = arith.constant 1.000000e+00 : f32
    %528 = vector.broadcast %cst_88 : f32 to vector<2x64xf32>
    %529 = arith.addf %528, %527 : vector<2x64xf32>
    %530 = arith.divf %528, %529 : vector<2x64xf32>
    %531 = vector.extract_strided_slice %524 {offsets = [0, 64], sizes = [2, 64], strides = [1, 1]} : vector<2x256xf32> to vector<2x64xf32>
    %532 = arith.negf %531 : vector<2x64xf32>
    %533 = math.exp %532 : vector<2x64xf32>
    %cst_89 = arith.constant 1.000000e+00 : f32
    %534 = vector.broadcast %cst_89 : f32 to vector<2x64xf32>
    %535 = arith.addf %534, %533 : vector<2x64xf32>
    %536 = arith.divf %534, %535 : vector<2x64xf32>
    %537 = vector.extract_strided_slice %524 {offsets = [0, 128], sizes = [2, 64], strides = [1, 1]} : vector<2x256xf32> to vector<2x64xf32>
    %538 = math.tanh %537 : vector<2x64xf32>
    %539 = vector.extract_strided_slice %524 {offsets = [0, 192], sizes = [2, 64], strides = [1, 1]} : vector<2x256xf32> to vector<2x64xf32>
    %540 = arith.negf %539 : vector<2x64xf32>
    %541 = math.exp %540 : vector<2x64xf32>
    %cst_90 = arith.constant 1.000000e+00 : f32
    %542 = vector.broadcast %cst_90 : f32 to vector<2x64xf32>
    %543 = arith.addf %542, %541 : vector<2x64xf32>
    %544 = arith.divf %542, %543 : vector<2x64xf32>
    %545 = arith.mulf %536, %518 : vector<2x64xf32>
    %546 = arith.mulf %530, %538 : vector<2x64xf32>
    %547 = arith.addf %545, %546 : vector<2x64xf32>
    %548 = math.tanh %547 : vector<2x64xf32>
    %549 = arith.mulf %544, %548 : vector<2x64xf32>
    %550 = arith.maximumf %521, %549 : vector<2x64xf32>
    %551 = arith.truncf %549 : vector<2x64xf32> to vector<2x64xbf16>
    %cst_91 = arith.constant dense<0.000000e+00> : vector<2x256xf32>
    %552 = tpu.matmul %551, %322, %cst_91 {dimension_numbers = #tpu.dot_dimension_numbers<[1], [0], [0], [1], [0, 0, 1, 1], [], []>} : vector<2x64xbf16>, vector<64x256xbf16>, vector<2x256xf32> -> vector<2x256xf32>
    %553 = arith.addf %388, %552 : vector<2x256xf32>
    %554 = vector.extract_strided_slice %553 {offsets = [0, 0], sizes = [2, 64], strides = [1, 1]} : vector<2x256xf32> to vector<2x64xf32>
    %555 = arith.negf %554 : vector<2x64xf32>
    %556 = math.exp %555 : vector<2x64xf32>
    %cst_92 = arith.constant 1.000000e+00 : f32
    %557 = vector.broadcast %cst_92 : f32 to vector<2x64xf32>
    %558 = arith.addf %557, %556 : vector<2x64xf32>
    %559 = arith.divf %557, %558 : vector<2x64xf32>
    %560 = vector.extract_strided_slice %553 {offsets = [0, 64], sizes = [2, 64], strides = [1, 1]} : vector<2x256xf32> to vector<2x64xf32>
    %561 = arith.negf %560 : vector<2x64xf32>
    %562 = math.exp %561 : vector<2x64xf32>
    %cst_93 = arith.constant 1.000000e+00 : f32
    %563 = vector.broadcast %cst_93 : f32 to vector<2x64xf32>
    %564 = arith.addf %563, %562 : vector<2x64xf32>
    %565 = arith.divf %563, %564 : vector<2x64xf32>
    %566 = vector.extract_strided_slice %553 {offsets = [0, 128], sizes = [2, 64], strides = [1, 1]} : vector<2x256xf32> to vector<2x64xf32>
    %567 = math.tanh %566 : vector<2x64xf32>
    %568 = vector.extract_strided_slice %553 {offsets = [0, 192], sizes = [2, 64], strides = [1, 1]} : vector<2x256xf32> to vector<2x64xf32>
    %569 = arith.negf %568 : vector<2x64xf32>
    %570 = math.exp %569 : vector<2x64xf32>
    %cst_94 = arith.constant 1.000000e+00 : f32
    %571 = vector.broadcast %cst_94 : f32 to vector<2x64xf32>
    %572 = arith.addf %571, %570 : vector<2x64xf32>
    %573 = arith.divf %571, %572 : vector<2x64xf32>
    %574 = arith.mulf %565, %547 : vector<2x64xf32>
    %575 = arith.mulf %559, %567 : vector<2x64xf32>
    %576 = arith.addf %574, %575 : vector<2x64xf32>
    %577 = math.tanh %576 : vector<2x64xf32>
    %578 = arith.mulf %573, %577 : vector<2x64xf32>
    %579 = arith.maximumf %550, %578 : vector<2x64xf32>
    %580 = arith.truncf %578 : vector<2x64xf32> to vector<2x64xbf16>
    %cst_95 = arith.constant dense<0.000000e+00> : vector<2x256xf32>
    %581 = tpu.matmul %580, %322, %cst_95 {dimension_numbers = #tpu.dot_dimension_numbers<[1], [0], [0], [1], [0, 0, 1, 1], [], []>} : vector<2x64xbf16>, vector<64x256xbf16>, vector<2x256xf32> -> vector<2x256xf32>
    %582 = arith.addf %395, %581 : vector<2x256xf32>
    %583 = vector.extract_strided_slice %582 {offsets = [0, 0], sizes = [2, 64], strides = [1, 1]} : vector<2x256xf32> to vector<2x64xf32>
    %584 = arith.negf %583 : vector<2x64xf32>
    %585 = math.exp %584 : vector<2x64xf32>
    %cst_96 = arith.constant 1.000000e+00 : f32
    %586 = vector.broadcast %cst_96 : f32 to vector<2x64xf32>
    %587 = arith.addf %586, %585 : vector<2x64xf32>
    %588 = arith.divf %586, %587 : vector<2x64xf32>
    %589 = vector.extract_strided_slice %582 {offsets = [0, 64], sizes = [2, 64], strides = [1, 1]} : vector<2x256xf32> to vector<2x64xf32>
    %590 = arith.negf %589 : vector<2x64xf32>
    %591 = math.exp %590 : vector<2x64xf32>
    %cst_97 = arith.constant 1.000000e+00 : f32
    %592 = vector.broadcast %cst_97 : f32 to vector<2x64xf32>
    %593 = arith.addf %592, %591 : vector<2x64xf32>
    %594 = arith.divf %592, %593 : vector<2x64xf32>
    %595 = vector.extract_strided_slice %582 {offsets = [0, 128], sizes = [2, 64], strides = [1, 1]} : vector<2x256xf32> to vector<2x64xf32>
    %596 = math.tanh %595 : vector<2x64xf32>
    %597 = vector.extract_strided_slice %582 {offsets = [0, 192], sizes = [2, 64], strides = [1, 1]} : vector<2x256xf32> to vector<2x64xf32>
    %598 = arith.negf %597 : vector<2x64xf32>
    %599 = math.exp %598 : vector<2x64xf32>
    %cst_98 = arith.constant 1.000000e+00 : f32
    %600 = vector.broadcast %cst_98 : f32 to vector<2x64xf32>
    %601 = arith.addf %600, %599 : vector<2x64xf32>
    %602 = arith.divf %600, %601 : vector<2x64xf32>
    %603 = arith.mulf %594, %576 : vector<2x64xf32>
    %604 = arith.mulf %588, %596 : vector<2x64xf32>
    %605 = arith.addf %603, %604 : vector<2x64xf32>
    %606 = math.tanh %605 : vector<2x64xf32>
    %607 = arith.mulf %602, %606 : vector<2x64xf32>
    %608 = arith.maximumf %579, %607 : vector<2x64xf32>
    %609 = arith.truncf %607 : vector<2x64xf32> to vector<2x64xbf16>
    %cst_99 = arith.constant dense<0.000000e+00> : vector<2x256xf32>
    %610 = tpu.matmul %609, %322, %cst_99 {dimension_numbers = #tpu.dot_dimension_numbers<[1], [0], [0], [1], [0, 0, 1, 1], [], []>} : vector<2x64xbf16>, vector<64x256xbf16>, vector<2x256xf32> -> vector<2x256xf32>
    %611 = arith.addf %402, %610 : vector<2x256xf32>
    %612 = vector.extract_strided_slice %611 {offsets = [0, 0], sizes = [2, 64], strides = [1, 1]} : vector<2x256xf32> to vector<2x64xf32>
    %613 = arith.negf %612 : vector<2x64xf32>
    %614 = math.exp %613 : vector<2x64xf32>
    %cst_100 = arith.constant 1.000000e+00 : f32
    %615 = vector.broadcast %cst_100 : f32 to vector<2x64xf32>
    %616 = arith.addf %615, %614 : vector<2x64xf32>
    %617 = arith.divf %615, %616 : vector<2x64xf32>
    %618 = vector.extract_strided_slice %611 {offsets = [0, 64], sizes = [2, 64], strides = [1, 1]} : vector<2x256xf32> to vector<2x64xf32>
    %619 = arith.negf %618 : vector<2x64xf32>
    %620 = math.exp %619 : vector<2x64xf32>
    %cst_101 = arith.constant 1.000000e+00 : f32
    %621 = vector.broadcast %cst_101 : f32 to vector<2x64xf32>
    %622 = arith.addf %621, %620 : vector<2x64xf32>
    %623 = arith.divf %621, %622 : vector<2x64xf32>
    %624 = vector.extract_strided_slice %611 {offsets = [0, 128], sizes = [2, 64], strides = [1, 1]} : vector<2x256xf32> to vector<2x64xf32>
    %625 = math.tanh %624 : vector<2x64xf32>
    %626 = vector.extract_strided_slice %611 {offsets = [0, 192], sizes = [2, 64], strides = [1, 1]} : vector<2x256xf32> to vector<2x64xf32>
    %627 = arith.negf %626 : vector<2x64xf32>
    %628 = math.exp %627 : vector<2x64xf32>
    %cst_102 = arith.constant 1.000000e+00 : f32
    %629 = vector.broadcast %cst_102 : f32 to vector<2x64xf32>
    %630 = arith.addf %629, %628 : vector<2x64xf32>
    %631 = arith.divf %629, %630 : vector<2x64xf32>
    %632 = arith.mulf %623, %605 : vector<2x64xf32>
    %633 = arith.mulf %617, %625 : vector<2x64xf32>
    %634 = arith.addf %632, %633 : vector<2x64xf32>
    %635 = math.tanh %634 : vector<2x64xf32>
    %636 = arith.mulf %631, %635 : vector<2x64xf32>
    %637 = arith.maximumf %608, %636 : vector<2x64xf32>
    %638 = tpu.concatenate %320, %637 in 0 : vector<10x64xf32>, vector<2x64xf32> -> vector<12x64xf32>
    %639 = arith.truncf %638 : vector<12x64xf32> to vector<12x64xbf16>
    %c0_103 = arith.constant 0 : index
    %c0_104 = arith.constant 0 : index
    %640 = vector.load %arg11[%c0_103, %c0_104] : memref<64x32xbf16, #tpu.memory_space<vmem>>, vector<64x32xbf16>
    %cst_105 = arith.constant dense<0.000000e+00> : vector<12x32xf32>
    %641 = tpu.matmul %639, %640, %cst_105 {dimension_numbers = #tpu.dot_dimension_numbers<[1], [0], [0], [1], [0, 0, 1, 1], [], []>} : vector<12x64xbf16>, vector<64x32xbf16>, vector<12x32xf32> -> vector<12x32xf32>
    %c0_106 = arith.constant 0 : index
    %c0_107 = arith.constant 0 : index
    %642 = vector.load %arg12[%c0_106, %c0_107] : memref<1x32xf32, #tpu.memory_space<vmem>>, vector<1x32xf32>
    %643 = vector.broadcast %642 : vector<1x32xf32> to vector<12x32xf32>
    %644 = arith.addf %641, %643 : vector<12x32xf32>
    %645 = vector.extract_strided_slice %644 {offsets = [10, 0], sizes = [2, 32], strides = [1, 1]} : vector<12x32xf32> to vector<2x32xf32>
    %646 = vector.extract_strided_slice %644 {offsets = [0, 0], sizes = [10, 32], strides = [1, 1]} : vector<12x32xf32> to vector<10x32xf32>
    %647 = arith.truncf %646 : vector<10x32xf32> to vector<10x32xbf16>
    %c0_108 = arith.constant 0 : index
    %c0_109 = arith.constant 0 : index
    %648 = vector.load %arg13[%c0_108, %c0_109] : memref<32x64xbf16, #tpu.memory_space<vmem>>, vector<32x64xbf16>
    %cst_110 = arith.constant dense<0.000000e+00> : vector<10x64xf32>
    %649 = tpu.matmul %647, %648, %cst_110 {dimension_numbers = #tpu.dot_dimension_numbers<[1], [0], [0], [1], [0, 0, 1, 1], [], []>} : vector<10x32xbf16>, vector<32x64xbf16>, vector<10x64xf32> -> vector<10x64xf32>
    %c0_111 = arith.constant 0 : index
    %c0_112 = arith.constant 0 : index
    %650 = vector.load %arg14[%c0_111, %c0_112] : memref<1x64xf32, #tpu.memory_space<vmem>>, vector<1x64xf32>
    %651 = vector.broadcast %650 : vector<1x64xf32> to vector<10x64xf32>
    %652 = arith.addf %649, %651 : vector<10x64xf32>
    %cst_113 = arith.constant 0.000000e+00 : f32
    %653 = vector.broadcast %cst_113 : f32 to vector<10x64xf32>
    %654 = arith.maximumf %652, %653 : vector<10x64xf32>
    %cst_114 = arith.constant 0.000000e+00 : f32
    %655 = vector.broadcast %cst_114 : f32 to vector<2x32xf32>
    %656 = vector.extract_strided_slice %644 {offsets = [0, 0], sizes = [2, 32], strides = [1, 1]} : vector<12x32xf32> to vector<2x32xf32>
    %657 = arith.addf %655, %656 : vector<2x32xf32>
    %658 = vector.extract_strided_slice %654 {offsets = [0, 0], sizes = [2, 32], strides = [1, 1]} : vector<10x64xf32> to vector<2x32xf32>
    %659 = vector.extract_strided_slice %654 {offsets = [0, 32], sizes = [2, 32], strides = [1, 1]} : vector<10x64xf32> to vector<2x32xf32>
    %660 = vector.extract_strided_slice %2 {offsets = [0, 0, 0], sizes = [2, 1, 5], strides = [1, 1, 1]} : vector<2x5x5xf32> to vector<2x1x5xf32>
    %661 = vector.shape_cast %660 : vector<2x1x5xf32> to vector<2x5xf32>
    %662 = vector.shape_cast %661 : vector<2x5xf32> to vector<2x5x1xf32>
    %663 = vector.shape_cast %658 : vector<2x32xf32> to vector<2x1x32xf32>
    %664 = vector.broadcast %663 : vector<2x1x32xf32> to vector<2x5x32xf32>
    %665 = vector.broadcast %662 : vector<2x5x1xf32> to vector<2x5x32xf32>
    %666 = arith.mulf %664, %665 : vector<2x5x32xf32>
    %667 = vector.shape_cast %659 : vector<2x32xf32> to vector<2x1x32xf32>
    %cst_115 = arith.constant 1.000000e+00 : f32
    %668 = vector.broadcast %cst_115 : f32 to vector<2x5x1xf32>
    %669 = arith.subf %668, %662 : vector<2x5x1xf32>
    %670 = vector.broadcast %667 : vector<2x1x32xf32> to vector<2x5x32xf32>
    %671 = vector.broadcast %669 : vector<2x5x1xf32> to vector<2x5x32xf32>
    %672 = arith.mulf %670, %671 : vector<2x5x32xf32>
    %673 = arith.addf %666, %672 : vector<2x5x32xf32>
    %cst_116 = arith.constant 0.899999976 : f32
    %674 = vector.broadcast %cst_116 : f32 to vector<2x5x32xf32>
    %675 = arith.mulf %674, %673 : vector<2x5x32xf32>
    %676 = vector.extract_strided_slice %644 {offsets = [2, 0], sizes = [2, 32], strides = [1, 1]} : vector<12x32xf32> to vector<2x32xf32>
    %677 = arith.addf %657, %676 : vector<2x32xf32>
    %678 = vector.extract_strided_slice %654 {offsets = [2, 0], sizes = [2, 32], strides = [1, 1]} : vector<10x64xf32> to vector<2x32xf32>
    %679 = vector.extract_strided_slice %654 {offsets = [2, 32], sizes = [2, 32], strides = [1, 1]} : vector<10x64xf32> to vector<2x32xf32>
    %680 = vector.extract_strided_slice %2 {offsets = [0, 1, 0], sizes = [2, 1, 5], strides = [1, 1, 1]} : vector<2x5x5xf32> to vector<2x1x5xf32>
    %681 = vector.shape_cast %680 : vector<2x1x5xf32> to vector<2x5xf32>
    %682 = vector.shape_cast %681 : vector<2x5xf32> to vector<2x5x1xf32>
    %683 = vector.shape_cast %678 : vector<2x32xf32> to vector<2x1x32xf32>
    %684 = vector.broadcast %683 : vector<2x1x32xf32> to vector<2x5x32xf32>
    %685 = vector.broadcast %682 : vector<2x5x1xf32> to vector<2x5x32xf32>
    %686 = arith.mulf %684, %685 : vector<2x5x32xf32>
    %687 = vector.shape_cast %679 : vector<2x32xf32> to vector<2x1x32xf32>
    %cst_117 = arith.constant 1.000000e+00 : f32
    %688 = vector.broadcast %cst_117 : f32 to vector<2x5x1xf32>
    %689 = arith.subf %688, %682 : vector<2x5x1xf32>
    %690 = vector.broadcast %687 : vector<2x1x32xf32> to vector<2x5x32xf32>
    %691 = vector.broadcast %689 : vector<2x5x1xf32> to vector<2x5x32xf32>
    %692 = arith.mulf %690, %691 : vector<2x5x32xf32>
    %693 = arith.addf %686, %692 : vector<2x5x32xf32>
    %cst_118 = arith.constant 0.899999976 : f32
    %694 = vector.broadcast %cst_118 : f32 to vector<2x5x32xf32>
    %695 = arith.mulf %694, %693 : vector<2x5x32xf32>
    %696 = vector.extract_strided_slice %644 {offsets = [4, 0], sizes = [2, 32], strides = [1, 1]} : vector<12x32xf32> to vector<2x32xf32>
    %697 = arith.addf %677, %696 : vector<2x32xf32>
    %698 = vector.extract_strided_slice %654 {offsets = [4, 0], sizes = [2, 32], strides = [1, 1]} : vector<10x64xf32> to vector<2x32xf32>
    %699 = vector.extract_strided_slice %654 {offsets = [4, 32], sizes = [2, 32], strides = [1, 1]} : vector<10x64xf32> to vector<2x32xf32>
    %700 = vector.extract_strided_slice %2 {offsets = [0, 2, 0], sizes = [2, 1, 5], strides = [1, 1, 1]} : vector<2x5x5xf32> to vector<2x1x5xf32>
    %701 = vector.shape_cast %700 : vector<2x1x5xf32> to vector<2x5xf32>
    %702 = vector.shape_cast %701 : vector<2x5xf32> to vector<2x5x1xf32>
    %703 = vector.shape_cast %698 : vector<2x32xf32> to vector<2x1x32xf32>
    %704 = vector.broadcast %703 : vector<2x1x32xf32> to vector<2x5x32xf32>
    %705 = vector.broadcast %702 : vector<2x5x1xf32> to vector<2x5x32xf32>
    %706 = arith.mulf %704, %705 : vector<2x5x32xf32>
    %707 = vector.shape_cast %699 : vector<2x32xf32> to vector<2x1x32xf32>
    %cst_119 = arith.constant 1.000000e+00 : f32
    %708 = vector.broadcast %cst_119 : f32 to vector<2x5x1xf32>
    %709 = arith.subf %708, %702 : vector<2x5x1xf32>
    %710 = vector.broadcast %707 : vector<2x1x32xf32> to vector<2x5x32xf32>
    %711 = vector.broadcast %709 : vector<2x5x1xf32> to vector<2x5x32xf32>
    %712 = arith.mulf %710, %711 : vector<2x5x32xf32>
    %713 = arith.addf %706, %712 : vector<2x5x32xf32>
    %cst_120 = arith.constant 0.899999976 : f32
    %714 = vector.broadcast %cst_120 : f32 to vector<2x5x32xf32>
    %715 = arith.mulf %714, %713 : vector<2x5x32xf32>
    %716 = vector.extract_strided_slice %644 {offsets = [6, 0], sizes = [2, 32], strides = [1, 1]} : vector<12x32xf32> to vector<2x32xf32>
    %717 = arith.addf %697, %716 : vector<2x32xf32>
    %718 = vector.extract_strided_slice %654 {offsets = [6, 0], sizes = [2, 32], strides = [1, 1]} : vector<10x64xf32> to vector<2x32xf32>
    %719 = vector.extract_strided_slice %654 {offsets = [6, 32], sizes = [2, 32], strides = [1, 1]} : vector<10x64xf32> to vector<2x32xf32>
    %720 = vector.extract_strided_slice %2 {offsets = [0, 3, 0], sizes = [2, 1, 5], strides = [1, 1, 1]} : vector<2x5x5xf32> to vector<2x1x5xf32>
    %721 = vector.shape_cast %720 : vector<2x1x5xf32> to vector<2x5xf32>
    %722 = vector.shape_cast %721 : vector<2x5xf32> to vector<2x5x1xf32>
    %723 = vector.shape_cast %718 : vector<2x32xf32> to vector<2x1x32xf32>
    %724 = vector.broadcast %723 : vector<2x1x32xf32> to vector<2x5x32xf32>
    %725 = vector.broadcast %722 : vector<2x5x1xf32> to vector<2x5x32xf32>
    %726 = arith.mulf %724, %725 : vector<2x5x32xf32>
    %727 = vector.shape_cast %719 : vector<2x32xf32> to vector<2x1x32xf32>
    %cst_121 = arith.constant 1.000000e+00 : f32
    %728 = vector.broadcast %cst_121 : f32 to vector<2x5x1xf32>
    %729 = arith.subf %728, %722 : vector<2x5x1xf32>
    %730 = vector.broadcast %727 : vector<2x1x32xf32> to vector<2x5x32xf32>
    %731 = vector.broadcast %729 : vector<2x5x1xf32> to vector<2x5x32xf32>
    %732 = arith.mulf %730, %731 : vector<2x5x32xf32>
    %733 = arith.addf %726, %732 : vector<2x5x32xf32>
    %cst_122 = arith.constant 0.899999976 : f32
    %734 = vector.broadcast %cst_122 : f32 to vector<2x5x32xf32>
    %735 = arith.mulf %734, %733 : vector<2x5x32xf32>
    %736 = vector.extract_strided_slice %644 {offsets = [8, 0], sizes = [2, 32], strides = [1, 1]} : vector<12x32xf32> to vector<2x32xf32>
    %737 = arith.addf %717, %736 : vector<2x32xf32>
    %738 = vector.extract_strided_slice %654 {offsets = [8, 0], sizes = [2, 32], strides = [1, 1]} : vector<10x64xf32> to vector<2x32xf32>
    %739 = vector.extract_strided_slice %654 {offsets = [8, 32], sizes = [2, 32], strides = [1, 1]} : vector<10x64xf32> to vector<2x32xf32>
    %740 = vector.extract_strided_slice %2 {offsets = [0, 4, 0], sizes = [2, 1, 5], strides = [1, 1, 1]} : vector<2x5x5xf32> to vector<2x1x5xf32>
    %741 = vector.shape_cast %740 : vector<2x1x5xf32> to vector<2x5xf32>
    %742 = vector.shape_cast %741 : vector<2x5xf32> to vector<2x5x1xf32>
    %743 = vector.shape_cast %738 : vector<2x32xf32> to vector<2x1x32xf32>
    %744 = vector.broadcast %743 : vector<2x1x32xf32> to vector<2x5x32xf32>
    %745 = vector.broadcast %742 : vector<2x5x1xf32> to vector<2x5x32xf32>
    %746 = arith.mulf %744, %745 : vector<2x5x32xf32>
    %747 = vector.shape_cast %739 : vector<2x32xf32> to vector<2x1x32xf32>
    %cst_123 = arith.constant 1.000000e+00 : f32
    %748 = vector.broadcast %cst_123 : f32 to vector<2x5x1xf32>
    %749 = arith.subf %748, %742 : vector<2x5x1xf32>
    %750 = vector.broadcast %747 : vector<2x1x32xf32> to vector<2x5x32xf32>
    %751 = vector.broadcast %749 : vector<2x5x1xf32> to vector<2x5x32xf32>
    %752 = arith.mulf %750, %751 : vector<2x5x32xf32>
    %753 = arith.addf %746, %752 : vector<2x5x32xf32>
    %cst_124 = arith.constant 0.899999976 : f32
    %754 = vector.broadcast %cst_124 : f32 to vector<2x5x32xf32>
    %755 = arith.mulf %754, %753 : vector<2x5x32xf32>
    %c0_125 = arith.constant 0 : index
    %c0_126 = arith.constant 0 : index
    %756 = vector.load %arg15[%c0_125, %c0_126] : memref<32x32xbf16, #tpu.memory_space<vmem>>, vector<32x32xbf16>
    %c0_127 = arith.constant 0 : index
    %c0_128 = arith.constant 0 : index
    %757 = vector.load %arg16[%c0_127, %c0_128] : memref<1x32xf32, #tpu.memory_space<vmem>>, vector<1x32xf32>
    %cst_129 = arith.constant 0.000000e+00 : f32
    %758 = vector.broadcast %cst_129 : f32 to vector<2x5x32xf32>
    %cst_130 = arith.constant 2.000000e+00 : f32
    %759 = vector.broadcast %cst_130 : f32 to vector<2x5x32xf32>
    %760 = arith.mulf %759, %758 : vector<2x5x32xf32>
    %761 = arith.addf %675, %760 : vector<2x5x32xf32>
    %762 = arith.truncf %761 : vector<2x5x32xf32> to vector<2x5x32xbf16>
    "tpu.trace_start"() <{level = 10 : i32, message = "bph,hk->bpk"}> : () -> ()
    %cst_131 = arith.constant dense<0.000000e+00> : vector<2x5x32xf32>
    %763 = tpu.matmul %762, %756, %cst_131 {dimension_numbers = #tpu.dot_dimension_numbers<[2], [0], [0, 1], [1], [0, 0, 0, 1, 1, 1], [], []>} : vector<2x5x32xbf16>, vector<32x32xbf16>, vector<2x5x32xf32> -> vector<2x5x32xf32>
    "tpu.trace_stop"() : () -> ()
    %764 = vector.shape_cast %757 : vector<1x32xf32> to vector<1x1x32xf32>
    %765 = vector.broadcast %764 : vector<1x1x32xf32> to vector<2x5x32xf32>
    %766 = arith.addf %763, %765 : vector<2x5x32xf32>
    %cst_132 = arith.constant 0.000000e+00 : f32
    %767 = vector.broadcast %cst_132 : f32 to vector<2x5x32xf32>
    %768 = arith.cmpf oge, %766, %767 : vector<2x5x32xf32>
    %cst_133 = arith.constant 0.00999999977 : f32
    %769 = vector.broadcast %cst_133 : f32 to vector<2x5x32xf32>
    %770 = arith.mulf %769, %766 : vector<2x5x32xf32>
    %771 = arith.select %768, %766, %770 : vector<2x5x32xi1>, vector<2x5x32xf32>
    %cst_134 = arith.constant 2.000000e+00 : f32
    %772 = vector.broadcast %cst_134 : f32 to vector<2x5x32xf32>
    %773 = arith.mulf %772, %771 : vector<2x5x32xf32>
    %774 = arith.addf %695, %773 : vector<2x5x32xf32>
    %775 = arith.truncf %774 : vector<2x5x32xf32> to vector<2x5x32xbf16>
    "tpu.trace_start"() <{level = 10 : i32, message = "bph,hk->bpk"}> : () -> ()
    %cst_135 = arith.constant dense<0.000000e+00> : vector<2x5x32xf32>
    %776 = tpu.matmul %775, %756, %cst_135 {dimension_numbers = #tpu.dot_dimension_numbers<[2], [0], [0, 1], [1], [0, 0, 0, 1, 1, 1], [], []>} : vector<2x5x32xbf16>, vector<32x32xbf16>, vector<2x5x32xf32> -> vector<2x5x32xf32>
    "tpu.trace_stop"() : () -> ()
    %777 = vector.shape_cast %757 : vector<1x32xf32> to vector<1x1x32xf32>
    %778 = vector.broadcast %777 : vector<1x1x32xf32> to vector<2x5x32xf32>
    %779 = arith.addf %776, %778 : vector<2x5x32xf32>
    %cst_136 = arith.constant 0.000000e+00 : f32
    %780 = vector.broadcast %cst_136 : f32 to vector<2x5x32xf32>
    %781 = arith.cmpf oge, %779, %780 : vector<2x5x32xf32>
    %cst_137 = arith.constant 0.00999999977 : f32
    %782 = vector.broadcast %cst_137 : f32 to vector<2x5x32xf32>
    %783 = arith.mulf %782, %779 : vector<2x5x32xf32>
    %784 = arith.select %781, %779, %783 : vector<2x5x32xi1>, vector<2x5x32xf32>
    %cst_138 = arith.constant 2.000000e+00 : f32
    %785 = vector.broadcast %cst_138 : f32 to vector<2x5x32xf32>
    %786 = arith.mulf %785, %784 : vector<2x5x32xf32>
    %787 = arith.addf %715, %786 : vector<2x5x32xf32>
    %788 = arith.truncf %787 : vector<2x5x32xf32> to vector<2x5x32xbf16>
    "tpu.trace_start"() <{level = 10 : i32, message = "bph,hk->bpk"}> : () -> ()
    %cst_139 = arith.constant dense<0.000000e+00> : vector<2x5x32xf32>
    %789 = tpu.matmul %788, %756, %cst_139 {dimension_numbers = #tpu.dot_dimension_numbers<[2], [0], [0, 1], [1], [0, 0, 0, 1, 1, 1], [], []>} : vector<2x5x32xbf16>, vector<32x32xbf16>, vector<2x5x32xf32> -> vector<2x5x32xf32>
    "tpu.trace_stop"() : () -> ()
    %790 = vector.shape_cast %757 : vector<1x32xf32> to vector<1x1x32xf32>
    %791 = vector.broadcast %790 : vector<1x1x32xf32> to vector<2x5x32xf32>
    %792 = arith.addf %789, %791 : vector<2x5x32xf32>
    %cst_140 = arith.constant 0.000000e+00 : f32
    %793 = vector.broadcast %cst_140 : f32 to vector<2x5x32xf32>
    %794 = arith.cmpf oge, %792, %793 : vector<2x5x32xf32>
    %cst_141 = arith.constant 0.00999999977 : f32
    %795 = vector.broadcast %cst_141 : f32 to vector<2x5x32xf32>
    %796 = arith.mulf %795, %792 : vector<2x5x32xf32>
    %797 = arith.select %794, %792, %796 : vector<2x5x32xi1>, vector<2x5x32xf32>
    %cst_142 = arith.constant 2.000000e+00 : f32
    %798 = vector.broadcast %cst_142 : f32 to vector<2x5x32xf32>
    %799 = arith.mulf %798, %797 : vector<2x5x32xf32>
    %800 = arith.addf %735, %799 : vector<2x5x32xf32>
    %801 = arith.truncf %800 : vector<2x5x32xf32> to vector<2x5x32xbf16>
    "tpu.trace_start"() <{level = 10 : i32, message = "bph,hk->bpk"}> : () -> ()
    %cst_143 = arith.constant dense<0.000000e+00> : vector<2x5x32xf32>
    %802 = tpu.matmul %801, %756, %cst_143 {dimension_numbers = #tpu.dot_dimension_numbers<[2], [0], [0, 1], [1], [0, 0, 0, 1, 1, 1], [], []>} : vector<2x5x32xbf16>, vector<32x32xbf16>, vector<2x5x32xf32> -> vector<2x5x32xf32>
    "tpu.trace_stop"() : () -> ()
    %803 = vector.shape_cast %757 : vector<1x32xf32> to vector<1x1x32xf32>
    %804 = vector.broadcast %803 : vector<1x1x32xf32> to vector<2x5x32xf32>
    %805 = arith.addf %802, %804 : vector<2x5x32xf32>
    %cst_144 = arith.constant 0.000000e+00 : f32
    %806 = vector.broadcast %cst_144 : f32 to vector<2x5x32xf32>
    %807 = arith.cmpf oge, %805, %806 : vector<2x5x32xf32>
    %cst_145 = arith.constant 0.00999999977 : f32
    %808 = vector.broadcast %cst_145 : f32 to vector<2x5x32xf32>
    %809 = arith.mulf %808, %805 : vector<2x5x32xf32>
    %810 = arith.select %807, %805, %809 : vector<2x5x32xi1>, vector<2x5x32xf32>
    %cst_146 = arith.constant 2.000000e+00 : f32
    %811 = vector.broadcast %cst_146 : f32 to vector<2x5x32xf32>
    %812 = arith.mulf %811, %810 : vector<2x5x32xf32>
    %813 = arith.addf %755, %812 : vector<2x5x32xf32>
    %814 = arith.truncf %813 : vector<2x5x32xf32> to vector<2x5x32xbf16>
    "tpu.trace_start"() <{level = 10 : i32, message = "bph,hk->bpk"}> : () -> ()
    %cst_147 = arith.constant dense<0.000000e+00> : vector<2x5x32xf32>
    %815 = tpu.matmul %814, %756, %cst_147 {dimension_numbers = #tpu.dot_dimension_numbers<[2], [0], [0, 1], [1], [0, 0, 0, 1, 1, 1], [], []>} : vector<2x5x32xbf16>, vector<32x32xbf16>, vector<2x5x32xf32> -> vector<2x5x32xf32>
    "tpu.trace_stop"() : () -> ()
    %816 = vector.shape_cast %757 : vector<1x32xf32> to vector<1x1x32xf32>
    %817 = vector.broadcast %816 : vector<1x1x32xf32> to vector<2x5x32xf32>
    %818 = arith.addf %815, %817 : vector<2x5x32xf32>
    %cst_148 = arith.constant 0.000000e+00 : f32
    %819 = vector.broadcast %cst_148 : f32 to vector<2x5x32xf32>
    %820 = arith.cmpf oge, %818, %819 : vector<2x5x32xf32>
    %cst_149 = arith.constant 0.00999999977 : f32
    %821 = vector.broadcast %cst_149 : f32 to vector<2x5x32xf32>
    %822 = arith.mulf %821, %818 : vector<2x5x32xf32>
    %823 = arith.select %820, %818, %822 : vector<2x5x32xi1>, vector<2x5x32xf32>
    %824 = arith.truncf %737 : vector<2x32xf32> to vector<2x32xbf16>
    %c0_150 = arith.constant 0 : index
    %c0_151 = arith.constant 0 : index
    %825 = vector.load %arg17[%c0_150, %c0_151] : memref<32x32xbf16, #tpu.memory_space<vmem>>, vector<32x32xbf16>
    %cst_152 = arith.constant dense<0.000000e+00> : vector<2x32xf32>
    %826 = tpu.matmul %824, %825, %cst_152 {dimension_numbers = #tpu.dot_dimension_numbers<[1], [0], [0], [1], [0, 0, 1, 1], [], []>} : vector<2x32xbf16>, vector<32x32xbf16>, vector<2x32xf32> -> vector<2x32xf32>
    %827 = vector.shape_cast %3 : vector<2x5xf32> to vector<2x5x1xf32>
    %828 = vector.broadcast %827 : vector<2x5x1xf32> to vector<2x5x32xf32>
    %829 = arith.mulf %828, %823 : vector<2x5x32xf32>
    %cst_153 = arith.constant dense<0.000000e+00> : vector<2x32xf32>
    %830 = vector.multi_reduction <add>, %829, %cst_153 [1] : vector<2x5x32xf32> to vector<2x32xf32>
    %c0_154 = arith.constant 0 : index
    %c0_155 = arith.constant 0 : index
    %831 = vector.load %arg18[%c0_154, %c0_155] : memref<96x48xbf16, #tpu.memory_space<vmem>>, vector<96x48xbf16>
    %832 = arith.truncf %645 : vector<2x32xf32> to vector<2x32xbf16>
    %833 = vector.extract_strided_slice %831 {offsets = [0, 0], sizes = [32, 48], strides = [1, 1]} : vector<96x48xbf16> to vector<32x48xbf16>
    %cst_156 = arith.constant dense<0.000000e+00> : vector<2x48xf32>
    %834 = tpu.matmul %832, %833, %cst_156 {dimension_numbers = #tpu.dot_dimension_numbers<[1], [0], [0], [1], [0, 0, 1, 1], [], []>} : vector<2x32xbf16>, vector<32x48xbf16>, vector<2x48xf32> -> vector<2x48xf32>
    %835 = arith.truncf %830 : vector<2x32xf32> to vector<2x32xbf16>
    %836 = vector.extract_strided_slice %831 {offsets = [32, 0], sizes = [32, 48], strides = [1, 1]} : vector<96x48xbf16> to vector<32x48xbf16>
    %cst_157 = arith.constant dense<0.000000e+00> : vector<2x48xf32>
    %837 = tpu.matmul %835, %836, %cst_157 {dimension_numbers = #tpu.dot_dimension_numbers<[1], [0], [0], [1], [0, 0, 1, 1], [], []>} : vector<2x32xbf16>, vector<32x48xbf16>, vector<2x48xf32> -> vector<2x48xf32>
    %838 = arith.addf %834, %837 : vector<2x48xf32>
    %839 = arith.truncf %826 : vector<2x32xf32> to vector<2x32xbf16>
    %840 = vector.extract_strided_slice %831 {offsets = [64, 0], sizes = [32, 48], strides = [1, 1]} : vector<96x48xbf16> to vector<32x48xbf16>
    %cst_158 = arith.constant dense<0.000000e+00> : vector<2x48xf32>
    %841 = tpu.matmul %839, %840, %cst_158 {dimension_numbers = #tpu.dot_dimension_numbers<[1], [0], [0], [1], [0, 0, 1, 1], [], []>} : vector<2x32xbf16>, vector<32x48xbf16>, vector<2x48xf32> -> vector<2x48xf32>
    %842 = arith.addf %838, %841 : vector<2x48xf32>
    %c0_159 = arith.constant 0 : index
    %c0_160 = arith.constant 0 : index
    %843 = vector.load %arg19[%c0_159, %c0_160] : memref<1x48xf32, #tpu.memory_space<vmem>>, vector<1x48xf32>
    %844 = vector.broadcast %843 : vector<1x48xf32> to vector<2x48xf32>
    %845 = arith.addf %842, %844 : vector<2x48xf32>
    %cst_161 = arith.constant 0.000000e+00 : f32
    %846 = vector.broadcast %cst_161 : f32 to vector<2x48xf32>
    %847 = arith.cmpf oge, %845, %846 : vector<2x48xf32>
    %cst_162 = arith.constant 0.00999999977 : f32
    %848 = vector.broadcast %cst_162 : f32 to vector<2x48xf32>
    %849 = arith.mulf %848, %845 : vector<2x48xf32>
    %850 = arith.select %847, %845, %849 : vector<2x48xi1>, vector<2x48xf32>
    %851 = arith.truncf %850 : vector<2x48xf32> to vector<2x48xbf16>
    %c0_163 = arith.constant 0 : index
    %c0_164 = arith.constant 0 : index
    %852 = vector.load %arg20[%c0_163, %c0_164] : memref<48x3xbf16, #tpu.memory_space<vmem>>, vector<48x3xbf16>
    %cst_165 = arith.constant dense<0.000000e+00> : vector<2x3xf32>
    %853 = tpu.matmul %851, %852, %cst_165 {dimension_numbers = #tpu.dot_dimension_numbers<[1], [0], [0], [1], [0, 0, 1, 1], [], []>} : vector<2x48xbf16>, vector<48x3xbf16>, vector<2x3xf32> -> vector<2x3xf32>
    %c0_166 = arith.constant 0 : index
    %c0_167 = arith.constant 0 : index
    %854 = vector.load %arg21[%c0_166, %c0_167] : memref<1x3xf32, #tpu.memory_space<vmem>>, vector<1x3xf32>
    %855 = vector.broadcast %854 : vector<1x3xf32> to vector<2x3xf32>
    %856 = arith.addf %853, %855 : vector<2x3xf32>
    %c0_168 = arith.constant 0 : index
    %c0_169 = arith.constant 0 : index
    %857 = vector.load %arg22[%c0_168, %c0_169] : memref<2x3xf32, #tpu.memory_space<vmem>>, vector<2x3xf32>
    tpu.vector_store %arg22[%c0_168, %c0_169], %856 {strides = array<i32>} : memref<2x3xf32, #tpu.memory_space<vmem>>, vector<2x3xf32>,
    return
  }
  func.func @transform_0(%arg0: i32) -> (i32, i32, i32) {
    %c0_i32 = arith.constant 0 : i32
    %c0_i32_0 = arith.constant 0 : i32
    %c0_i32_1 = arith.constant 0 : i32
    %c0_i32_2 = arith.constant 0 : i32
    return %c0_i32, %c0_i32_0, %c0_i32_1 : i32, i32, i32
  }
  func.func @transform_1(%arg0: i32) -> (i32, i32, i32) {
    %c0_i32 = arith.constant 0 : i32
    %c0_i32_0 = arith.constant 0 : i32
    %c0_i32_1 = arith.constant 0 : i32
    %c0_i32_2 = arith.constant 0 : i32
    return %c0_i32, %c0_i32_0, %c0_i32_1 : i32, i32, i32
  }
  func.func @transform_2(%arg0: i32) -> (i32, i32, i32) {
    %c0_i32 = arith.constant 0 : i32
    %c0_i32_0 = arith.constant 0 : i32
    %c0_i32_1 = arith.constant 0 : i32
    %c0_i32_2 = arith.constant 0 : i32
    return %c0_i32, %c0_i32_0, %c0_i32_1 : i32, i32, i32
  }
  func.func @transform_3(%arg0: i32) -> (i32, i32) {
    %c0_i32 = arith.constant 0 : i32
    %c0_i32_0 = arith.constant 0 : i32
    %c0_i32_1 = arith.constant 0 : i32
    return %c0_i32, %c0_i32_0 : i32, i32
  }
  func.func @transform_4(%arg0: i32) -> (i32, i32) {
    %c0_i32 = arith.constant 0 : i32
    %c0_i32_0 = arith.constant 0 : i32
    %c0_i32_1 = arith.constant 0 : i32
    return %c0_i32, %c0_i32_0 : i32, i32
  }
  func.func @transform_5(%arg0: i32) -> (i32, i32) {
    %c0_i32 = arith.constant 0 : i32
    %c0_i32_0 = arith.constant 0 : i32
    %c0_i32_1 = arith.constant 0 : i32
    return %c0_i32, %c0_i32_0 : i32, i32
  }
  func.func @transform_6(%arg0: i32) -> (i32, i32) {
    %c0_i32 = arith.constant 0 : i32
    %c0_i32_0 = arith.constant 0 : i32
    %c0_i32_1 = arith.constant 0 : i32
    return %c0_i32, %c0_i32_0 : i32, i32
  }
  func.func @transform_7(%arg0: i32) -> (i32, i32) {
    %c0_i32 = arith.constant 0 : i32
    %c0_i32_0 = arith.constant 0 : i32
    %c0_i32_1 = arith.constant 0 : i32
    return %c0_i32, %c0_i32_0 : i32, i32
  }
  func.func @transform_8(%arg0: i32) -> (i32, i32) {
    %c0_i32 = arith.constant 0 : i32
    %c0_i32_0 = arith.constant 0 : i32
    %c0_i32_1 = arith.constant 0 : i32
    return %c0_i32, %c0_i32_0 : i32, i32
  }
  func.func @transform_9(%arg0: i32) -> (i32, i32) {
    %c0_i32 = arith.constant 0 : i32
    %c0_i32_0 = arith.constant 0 : i32
    %c0_i32_1 = arith.constant 0 : i32
    return %c0_i32, %c0_i32_0 : i32, i32
  }
  func.func @transform_10(%arg0: i32) -> (i32, i32) {
    %c0_i32 = arith.constant 0 : i32
    %c0_i32_0 = arith.constant 0 : i32
    %c0_i32_1 = arith.constant 0 : i32
    return %c0_i32, %c0_i32_0 : i32, i32
  }
  func.func @transform_11(%arg0: i32) -> (i32, i32) {
    %c0_i32 = arith.constant 0 : i32
    %c0_i32_0 = arith.constant 0 : i32
    %c0_i32_1 = arith.constant 0 : i32
    return %c0_i32, %c0_i32_0 : i32, i32
  }
  func.func @transform_12(%arg0: i32) -> (i32, i32) {
    %c0_i32 = arith.constant 0 : i32
    %c0_i32_0 = arith.constant 0 : i32
    %c0_i32_1 = arith.constant 0 : i32
    return %c0_i32, %c0_i32_0 : i32, i32
  }
  func.func @transform_13(%arg0: i32) -> (i32, i32) {
    %c0_i32 = arith.constant 0 : i32
    %c0_i32_0 = arith.constant 0 : i32
    %c0_i32_1 = arith.constant 0 : i32
    return %c0_i32, %c0_i32_0 : i32, i32
  }
  func.func @transform_14(%arg0: i32) -> (i32, i32) {
    %c0_i32 = arith.constant 0 : i32
    %c0_i32_0 = arith.constant 0 : i32
    %c0_i32_1 = arith.constant 0 : i32
    return %c0_i32, %c0_i32_0 : i32, i32
  }
  func.func @transform_15(%arg0: i32) -> (i32, i32) {
    %c0_i32 = arith.constant 0 : i32
    %c0_i32_0 = arith.constant 0 : i32
    %c0_i32_1 = arith.constant 0 : i32
    return %c0_i32, %c0_i32_0 : i32, i32
  }
  func.func @transform_16(%arg0: i32) -> (i32, i32) {
    %c0_i32 = arith.constant 0 : i32
    %c0_i32_0 = arith.constant 0 : i32
    %c0_i32_1 = arith.constant 0 : i32
    return %c0_i32, %c0_i32_0 : i32, i32
  }
  func.func @transform_17(%arg0: i32) -> (i32, i32) {
    %c0_i32 = arith.constant 0 : i32
    %c0_i32_0 = arith.constant 0 : i32
    %c0_i32_1 = arith.constant 0 : i32
    return %c0_i32, %c0_i32_0 : i32, i32
  }
  func.func @transform_18(%arg0: i32) -> (i32, i32) {
    %c0_i32 = arith.constant 0 : i32
    %c0_i32_0 = arith.constant 0 : i32
    %c0_i32_1 = arith.constant 0 : i32
    return %c0_i32, %c0_i32_0 : i32, i32
  }
  func.func @transform_19(%arg0: i32) -> (i32, i32) {
    %c0_i32 = arith.constant 0 : i32
    %c0_i32_0 = arith.constant 0 : i32
    %c0_i32_1 = arith.constant 0 : i32
    return %c0_i32, %c0_i32_0 : i32, i32
  }
  func.func @transform_20(%arg0: i32) -> (i32, i32) {
    %c0_i32 = arith.constant 0 : i32
    %c0_i32_0 = arith.constant 0 : i32
    %c0_i32_1 = arith.constant 0 : i32
    return %c0_i32, %c0_i32_0 : i32, i32
  }
  func.func @transform_21(%arg0: i32) -> (i32, i32) {
    %c0_i32 = arith.constant 0 : i32
    %c0_i32_0 = arith.constant 0 : i32
    %c0_i32_1 = arith.constant 0 : i32
    return %c0_i32, %c0_i32_0 : i32, i32
  }
}

</mosaic_0001>

<llo_original>
// kernel: hierarchical_forward.1
$region0: #{hierarchical_forward.1}
  #allocation0 [shape = 'u32[]', space=smem, size = 0x4, offset = 0x4, fixed_abs, tag = 'smem constant byte address 0x4 - core index']
  #allocation1 [shape = 'u32[144,128]{1,0:T(1,128)}', space=vmem, size = 0x12000, scoped, tag = 'internal scratch']
  %s0 = inlined_call_operand.vmem [shape: bf16[10,8,16], index: 0, kind: input, shape index: {}]
  %s1 = inlined_call_operand.vmem [shape: bf16[2,8,16], index: 1, kind: input, shape index: {}]
  %s2 = inlined_call_operand.vmem [shape: f32[2,5,5], index: 2, kind: input, shape index: {}]
  %s3 = inlined_call_operand.vmem [shape: f32[2,5], index: 3, kind: input, shape index: {}]
  %s4 = inlined_call_operand.vmem [shape: bf16[16,256], index: 4, kind: input, shape index: {}]
  %s5 = inlined_call_operand.vmem [shape: bf16[64,256], index: 5, kind: input, shape index: {}]
  %s6 = inlined_call_operand.vmem [shape: f32[1,256], index: 6, kind: input, shape index: {}]
  %s7 = inlined_call_operand.vmem [shape: bf16[16,256], index: 7, kind: input, shape index: {}]
  %s8 = inlined_call_operand.vmem [shape: bf16[64,256], index: 8, kind: input, shape index: {}]
  %s9 = inlined_call_operand.vmem [shape: f32[1,256], index: 9, kind: input, shape index: {}]
  %s10 = inlined_call_operand.vmem [shape: bf16[64,32], index: 10, kind: input, shape index: {}]
  %s11 = inlined_call_operand.vmem [shape: f32[1,32], index: 11, kind: input, shape index: {}]
  %s12 = inlined_call_operand.vmem [shape: bf16[32,64], index: 12, kind: input, shape index: {}]
  %s13 = inlined_call_operand.vmem [shape: f32[1,64], index: 13, kind: input, shape index: {}]
  %s14 = inlined_call_operand.vmem [shape: bf16[32,32], index: 14, kind: input, shape index: {}]
  %s15 = inlined_call_operand.vmem [shape: f32[1,32], index: 15, kind: input, shape index: {}]
  %s16 = inlined_call_operand.vmem [shape: bf16[32,32], index: 16, kind: input, shape index: {}]
  %s17 = inlined_call_operand.vmem [shape: bf16[96,48], index: 17, kind: input, shape index: {}]
  %s18 = inlined_call_operand.vmem [shape: f32[1,48], index: 18, kind: input, shape index: {}]
  %s19 = inlined_call_operand.vmem [shape: bf16[48,3], index: 19, kind: input, shape index: {}]
  %s20 = inlined_call_operand.vmem [shape: f32[1,3], index: 20, kind: input, shape index: {}]
  %s21 = inlined_call_operand.hbm [shape: f32[2,3], index: 21, kind: output, shape index: {}]
  %s22 = sld [smem:[#allocation0]]
  $region94: #{hierarchical_forward.1} parent=0
    _
  %s24 = ssub.s32 1, %s22
  %s25 = scalar_select 0, %s24, %s22
  $region1: #{hierarchical_forward.1} parent=0
    #allocation2 [shape = 'u8[1024]{0}', space=vmem, size = 0x400, scoped, tag = 'output window, operand 0, single buffered']
    #allocation3 [shape = 's32[1]{0}', space=sflag, size = 0x4, scoped, tag = 'scoped memory for hierarchical_forward.1']
    %26 = vsyncpa [#allocation3], 0
    // Predicated region
    $region2: #{hierarchical_forward.1} parent=1 // pred_check
      _
    $region3: #{hierarchical_forward.1} parent=1 // pred_check_branch
      %28 = sbr.rel (0) target = $region5
    $region4: #{hierarchical_forward.1} parent=1 // pred_region
      _
    $region5: #{hierarchical_forward.1} parent=1 // pred_fallthru
      _
    // Predicated region
    $region6: #{hierarchical_forward.1} parent=1 // pred_check
      _
    $region7: #{hierarchical_forward.1} parent=1 // pred_check_branch
      %30 = sbr.rel (0) target = $region9
    $region8: #{hierarchical_forward.1} parent=1 // pred_region
      _
    $region9: #{hierarchical_forward.1} parent=1 // pred_fallthru
      _
    // Predicated region
    $region10: #{hierarchical_forward.1} parent=1 // pred_check
      _
    $region11: #{hierarchical_forward.1} parent=1 // pred_check_branch
      %32 = sbr.rel (0) target = $region13
    $region12: #{hierarchical_forward.1} parent=1 // pred_region
      _
    $region13: #{hierarchical_forward.1} parent=1 // pred_fallthru
      _
    // Predicated region
    $region14: #{hierarchical_forward.1} parent=1 // pred_check
      _
    $region15: #{hierarchical_forward.1} parent=1 // pred_check_branch
      %34 = sbr.rel (0) target = $region17
    $region16: #{hierarchical_forward.1} parent=1 // pred_region
      _
    $region17: #{hierarchical_forward.1} parent=1 // pred_fallthru
      _
    // Predicated region
    $region18: #{hierarchical_forward.1} parent=1 // pred_check
      _
    $region19: #{hierarchical_forward.1} parent=1 // pred_check_branch
      %36 = sbr.rel (0) target = $region21
    $region20: #{hierarchical_forward.1} parent=1 // pred_region
      _
    $region21: #{hierarchical_forward.1} parent=1 // pred_fallthru
      _
    // Predicated region
    $region22: #{hierarchical_forward.1} parent=1 // pred_check
      _
    $region23: #{hierarchical_forward.1} parent=1 // pred_check_branch
      %38 = sbr.rel (0) target = $region25
    $region24: #{hierarchical_forward.1} parent=1 // pred_region
      _
    $region25: #{hierarchical_forward.1} parent=1 // pred_fallthru
      _
    // Predicated region
    $region26: #{hierarchical_forward.1} parent=1 // pred_check
      _
    $region27: #{hierarchical_forward.1} parent=1 // pred_check_branch
      %40 = sbr.rel (0) target = $region29
    $region28: #{hierarchical_forward.1} parent=1 // pred_region
      _
    $region29: #{hierarchical_forward.1} parent=1 // pred_fallthru
      _
    // Predicated region
    $region30: #{hierarchical_forward.1} parent=1 // pred_check
      _
    $region31: #{hierarchical_forward.1} parent=1 // pred_check_branch
      %42 = sbr.rel (0) target = $region33
    $region32: #{hierarchical_forward.1} parent=1 // pred_region
      _
    $region33: #{hierarchical_forward.1} parent=1 // pred_fallthru
      _
    // Predicated region
    $region34: #{hierarchical_forward.1} parent=1 // pred_check
      _
    $region35: #{hierarchical_forward.1} parent=1 // pred_check_branch
      %44 = sbr.rel (0) target = $region37
    $region36: #{hierarchical_forward.1} parent=1 // pred_region
      _
    $region37: #{hierarchical_forward.1} parent=1 // pred_fallthru
      _
    // Predicated region
    $region38: #{hierarchical_forward.1} parent=1 // pred_check
      _
    $region39: #{hierarchical_forward.1} parent=1 // pred_check_branch
      %46 = sbr.rel (0) target = $region41
    $region40: #{hierarchical_forward.1} parent=1 // pred_region
      _
    $region41: #{hierarchical_forward.1} parent=1 // pred_fallthru
      _
    // Predicated region
    $region42: #{hierarchical_forward.1} parent=1 // pred_check
      _
    $region43: #{hierarchical_forward.1} parent=1 // pred_check_branch
      %48 = sbr.rel (0) target = $region45
    $region44: #{hierarchical_forward.1} parent=1 // pred_region
      _
    $region45: #{hierarchical_forward.1} parent=1 // pred_fallthru
      _
    // Predicated region
    $region46: #{hierarchical_forward.1} parent=1 // pred_check
      _
    $region47: #{hierarchical_forward.1} parent=1 // pred_check_branch
      %50 = sbr.rel (0) target = $region49
    $region48: #{hierarchical_forward.1} parent=1 // pred_region
      _
    $region49: #{hierarchical_forward.1} parent=1 // pred_fallthru
      _
    // Predicated region
    $region50: #{hierarchical_forward.1} parent=1 // pred_check
      _
    $region51: #{hierarchical_forward.1} parent=1 // pred_check_branch
      %52 = sbr.rel (0) target = $region53
    $region52: #{hierarchical_forward.1} parent=1 // pred_region
      _
    $region53: #{hierarchical_forward.1} parent=1 // pred_fallthru
      _
    // Predicated region
    $region54: #{hierarchical_forward.1} parent=1 // pred_check
      _
    $region55: #{hierarchical_forward.1} parent=1 // pred_check_branch
      %54 = sbr.rel (0) target = $region57
    $region56: #{hierarchical_forward.1} parent=1 // pred_region
      _
    $region57: #{hierarchical_forward.1} parent=1 // pred_fallthru
      _
    // Predicated region
    $region58: #{hierarchical_forward.1} parent=1 // pred_check
      _
    $region59: #{hierarchical_forward.1} parent=1 // pred_check_branch
      %56 = sbr.rel (0) target = $region61
    $region60: #{hierarchical_forward.1} parent=1 // pred_region
      _
    $region61: #{hierarchical_forward.1} parent=1 // pred_fallthru
      _
    // Predicated region
    $region62: #{hierarchical_forward.1} parent=1 // pred_check
      _
    $region63: #{hierarchical_forward.1} parent=1 // pred_check_branch
      %58 = sbr.rel (0) target = $region65
    $region64: #{hierarchical_forward.1} parent=1 // pred_region
      _
    $region65: #{hierarchical_forward.1} parent=1 // pred_fallthru
      _
    // Predicated region
    $region66: #{hierarchical_forward.1} parent=1 // pred_check
      _
    $region67: #{hierarchical_forward.1} parent=1 // pred_check_branch
      %60 = sbr.rel (0) target = $region69
    $region68: #{hierarchical_forward.1} parent=1 // pred_region
      _
    $region69: #{hierarchical_forward.1} parent=1 // pred_fallthru
      _
    // Predicated region
    $region70: #{hierarchical_forward.1} parent=1 // pred_check
      _
    $region71: #{hierarchical_forward.1} parent=1 // pred_check_branch
      %62 = sbr.rel (0) target = $region73
    $region72: #{hierarchical_forward.1} parent=1 // pred_region
      _
    $region73: #{hierarchical_forward.1} parent=1 // pred_fallthru
      _
    // Predicated region
    $region74: #{hierarchical_forward.1} parent=1 // pred_check
      _
    $region75: #{hierarchical_forward.1} parent=1 // pred_check_branch
      %64 = sbr.rel (0) target = $region77
    $region76: #{hierarchical_forward.1} parent=1 // pred_region
      _
    $region77: #{hierarchical_forward.1} parent=1 // pred_fallthru
      _
    // Predicated region
    $region78: #{hierarchical_forward.1} parent=1 // pred_check
      _
    $region79: #{hierarchical_forward.1} parent=1 // pred_check_branch
      %66 = sbr.rel (0) target = $region81
    $region80: #{hierarchical_forward.1} parent=1 // pred_region
      _
    $region81: #{hierarchical_forward.1} parent=1 // pred_fallthru
      _
    // Predicated region
    $region82: #{hierarchical_forward.1} parent=1 // pred_check
      _
    $region83: #{hierarchical_forward.1} parent=1 // pred_check_branch
      %68 = sbr.rel (0) target = $region85
    $region84: #{hierarchical_forward.1} parent=1 // pred_region
      _
    $region85: #{hierarchical_forward.1} parent=1 // pred_fallthru
      _
    %v70 = vld [vmem:[%s0] sm:$0xf]
    %v71 = vld [vmem:[%s0 + $0x4] sm:$0xf]
    %v72 = vld [vmem:[%s0 + $0x8] sm:$0xf]
    %v73 = vld [vmem:[%s0 + $0xc] sm:$0xf]
    %v74 = vld [vmem:[%s0 + $0x10] sm:$0xf]
    %v75 = vld [vmem:[%s0 + $0x14] sm:$0xf]
    %v76 = vld [vmem:[%s0 + $0x18] sm:$0xf]
    %v77 = vld [vmem:[%s0 + $0x1c] sm:$0xf]
    %v78 = vld [vmem:[%s0 + $0x20] sm:$0xf]
    %v79 = vld [vmem:[%s0 + $0x24] sm:$0xf]
    %v80 = vld [vmem:[%s1] sm:$0xf]
    %v81 = vld [vmem:[%s1 + $0x4] sm:$0xf]
    %v82 = vld [vmem:[%s2] sm:$0x1f]
    %v83 = vld [vmem:[%s2 + $0x8] sm:$0x1f]
    %v84 = vld [vmem:[%s3] sm:$0x3]
    %v85 = vld [vmem:[%s4] sm:$0xff]
    %v86 = vld [vmem:[%s4 + $0x8] sm:$0xff]
    %v87 = vld [vmem:[%s5] sm:$0xff]
    %v88 = vld [vmem:[%s5 + $0x8] sm:$0xff]
    %v89 = vld [vmem:[%s5 + $0x10] sm:$0xff]
    %v90 = vld [vmem:[%s5 + $0x18] sm:$0xff]
    %v91 = vld [vmem:[%s5 + $0x20] sm:$0xff]
    %v92 = vld [vmem:[%s5 + $0x28] sm:$0xff]
    %v93 = vld [vmem:[%s5 + $0x30] sm:$0xff]
    %v94 = vld [vmem:[%s5 + $0x38] sm:$0xff]
    %v95 = vld [vmem:[%s6] sm:$0x3]
    %v97 = vlaneseq
    %v98 = vshrl.u32 %v97, 7
    %v99 = vsub.s32 0, %v98
    %v100 = vrot.slane %v95, %v99
    %v101 = vlaneseq
    %v102 = vshrl.u32 %v101, 7
    %v103 = vsub.s32 1, %v102
    %v104 = vrot.slane %v95, %v103
    %v117 = vunpack.c.l.b16 %v70
    %v118 = vunpack.c.l.b16 %v71
    %v119 = vunpack.c.l.b16 %v72
    %v120 = vunpack.c.l.b16 %v73
    %v121 = vunpack.c.l.b16 %v74
    %v122 = vunpack.c.l.b16 %v75
    %v123 = vunpack.c.l.b16 %v76
    %v124 = vunpack.c.l.b16 %v77
    %v125 = vunpack.c.l.b16 %v78
    %v126 = vunpack.c.l.b16 %v79
    %v127 = vpack.c.b16 %v118, %v117
    %v128 = vpack.c.b16 %v120, %v119
    %v129 = vpack.c.b16 %v122, %v121
    %v130 = vpack.c.b16 %v124, %v123
    %v131 = vpack.c.b16 %v126, %v125
    %v134 = vunpack.c.l.b16 %v85
    %v135 = vunpack.c.h.b16 %v85
    %v136 = vunpack.c.l.b16 %v86
    %v137 = vunpack.c.h.b16 %v86
    %v138 = vpack.c.b16 %v136, %v134
    %v139 = vpack.c.b16 %v137, %v135
    %vm142 = vcmask 130048
    %v144 = vsel %vm142, %v127, 0
    %v147 = vsel %vm142, %v128, 0
    %v150 = vsel %vm142, %v129, 0
    %v153 = vsel %vm142, %v130, 0
    %v156 = vsel %vm142, %v131, 0
    %158 = vmatprep.subr.bf16.mxu0 %v139
    %159 = vmatpush1.bf16.msra.mxu0 %v138
    %160 = vmatprep.subr.bf16.mxu0 0
    %161 = vmatpush1.bf16.msra.mxu0 0
    %162 = vmatprep.subr.bf16.mxu0 0
    %163 = vmatpush1.bf16.msra.mxu0 0
    %164 = vmatprep.subr.bf16.mxu0 0
    %165 = vmatpush1.bf16.msra.mxu0 0
    %166 = vmatprep.subr.bf16.mxu0 0
    %167 = vmatpush1.bf16.msra.mxu0 0
    %168 = vmatprep.subr.bf16.mxu0 0
    %169 = vmatpush1.bf16.msra.mxu0 0
    %170 = vmatprep.subr.bf16.mxu0 0
    %171 = vmatpush1.bf16.msra.mxu0 0
    %172 = vmatprep.subr.bf16.mxu0 0
    %173 = vmatpush1.bf16.msra.mxu0 0
    %174 = vmatprep.subr.bf16.mxu0 0
    %175 = vmatpush1.bf16.msra.mxu0 0
    %176 = vmatprep.subr.bf16.mxu0 0
    %177 = vmatpush1.bf16.msra.mxu0 0
    %178 = vmatprep.subr.bf16.mxu0 0
    %179 = vmatpush1.bf16.msra.mxu0 0
    %180 = vmatprep.subr.bf16.mxu0 0
    %181 = vmatpush1.bf16.msra.mxu0 0
    %182 = vmatprep.subr.bf16.mxu0 0
    %183 = vmatpush1.bf16.msra.mxu0 0
    %184 = vmatprep.subr.bf16.mxu0 0
    %185 = vmatpush1.bf16.msra.mxu0 0
    %186 = vmatprep.subr.bf16.mxu0 0
    %187 = vmatpush1.bf16.msra.mxu0 0
    %188 = vmatprep.subr.bf16.mxu0 0
    %189 = vmatpush1.bf16.msra.mxu0 0
    %190 = vmatprep.mubr.bf16.mxu0 0
    %191 = vmatmul.mubr.bf16.gmra.mrb[0].mxu0 %v144
    %v192 = vpop.f32.mrb[0].mxu0
    %v193 = vadd.f32 %v100, %v192
    %v194 = vpop.f32.mrb[0].mxu0
    %v195 = vadd.f32 %v104, %v194
    %v196 = vpop.f32.mrb[0].mxu0
    %v197 = vadd.f32 %v100, %v196
    %v198 = vpop.f32.mrb[0].mxu0
    %v199 = vadd.f32 %v104, %v198
    %200 = vmatprep.mubr.bf16.mxu0 0
    %201 = vmatmul.mubr.bf16.gmra.mrb[0].mxu0 %v147
    %v202 = vpop.f32.mrb[0].mxu0
    %v203 = vadd.f32 %v100, %v202
    %v204 = vpop.f32.mrb[0].mxu0
    %v205 = vadd.f32 %v104, %v204
    %v206 = vpop.f32.mrb[0].mxu0
    %v207 = vadd.f32 %v100, %v206
    %v208 = vpop.f32.mrb[0].mxu0
    %v209 = vadd.f32 %v104, %v208
    %210 = vmatprep.mubr.bf16.mxu0 0
    %211 = vmatmul.mubr.bf16.gmra.mrb[0].mxu0 %v150
    %v212 = vpop.f32.mrb[0].mxu0
    %v213 = vadd.f32 %v100, %v212
    %v214 = vpop.f32.mrb[0].mxu0
    %v215 = vadd.f32 %v104, %v214
    %v216 = vpop.f32.mrb[0].mxu0
    %v217 = vadd.f32 %v100, %v216
    %v218 = vpop.f32.mrb[0].mxu0
    %v219 = vadd.f32 %v104, %v218
    %220 = vmatprep.mubr.bf16.mxu0 0
    %221 = vmatmul.mubr.bf16.gmra.mrb[0].mxu0 %v153
    %v222 = vpop.f32.mrb[0].mxu0
    %v223 = vadd.f32 %v100, %v222
    %v224 = vpop.f32.mrb[0].mxu0
    %v225 = vadd.f32 %v104, %v224
    %v226 = vpop.f32.mrb[0].mxu0
    %v227 = vadd.f32 %v100, %v226
    %v228 = vpop.f32.mrb[0].mxu0
    %v229 = vadd.f32 %v104, %v228
    %230 = vmatprep.mubr.bf16.mxu0 0
    %231 = vmatmul.mubr.bf16.gmra.mrb[0].mxu0 %v156
    %v232 = vpop.f32.mrb[0].mxu0
    %v233 = vadd.f32 %v100, %v232
    %v234 = vpop.f32.mrb[0].mxu0
    %v235 = vadd.f32 %v104, %v234
    %v236 = vpop.f32.mrb[0].mxu0
    %v237 = vadd.f32 %v100, %v236
    %v238 = vpop.f32.mrb[0].mxu0
    %v239 = vadd.f32 %v104, %v238
    %240 = vdwg.mxu0
    %v241 = vlaneseq
    %v242 = vand.u32 %v241, 127
    %v243 = vadd.s32 %v242, 128
    %vm244 = vcmp.lt.s32.totalorder %v242, 0
    %v245 = vsub.s32 0, %v242
    %v246 = vsel %vm244, %v245, %v242
    %v247 = vshrl.u32 %v246, 6
    %v248 = vand.u32 %v246, 63
    %v249 = vsub.s32 0, %v248
    %v250 = vsel %vm244, %v249, %v248
    %vm251 = vcmp.lt.s32.totalorder %v243, 0
    %v252 = vsub.s32 0, %v243
    %v253 = vsel %vm251, %v252, %v243
    %v254 = vshrl.u32 %v253, 6
    %v255 = vand.u32 %v253, 63
    %v256 = vsub.s32 0, %v255
    %v257 = vsel %vm251, %v256, %v255
    %vm258 = vcmp.ne.s32.totalorder %v250, 0
    %vm259 = vcmp.ne.s32.totalorder %v257, 0
    %vm260 = vcmp.lt.s32.totalorder %v250, 0
    %vm261 = vcmp.lt.s32.totalorder %v257, 0
    %vm262 = vmand %vm260, %vm258
    %vm263 = vmand %vm261, %vm259
    %v264 = vadd.s32 %v250, 64
    %v265 = vadd.s32 %v257, 64
    %v266 = vsel %vm262, %v264, %v250
    %v267 = vsel %vm263, %v265, %v257
    %vm268 = vcmp.lt.s32.totalorder %v266, 32
    %vm269 = vcmp.lt.s32.totalorder %v267, 32
    %v270 = vsel %vm268, 1, 0
    %v271 = vsel %vm269, 1, 0
    %vm272 = vcmp.eq.s32.totalorder %v270, 1
    %vm273 = vcmp.eq.s32.totalorder %v271, 1
    %v294 = vrot.slane %v197, 7
    %vm295 = vcmask 1041409
    %v296 = vsel %vm295, %v294, %v193
    %v297 = vrot.slane %v203, 6
    %vm298 = vcmask 1042434
    %v299 = vsel %vm298, %v297, %v296
    %v300 = vrot.slane %v207, 5
    %vm301 = vcmask 1043459
    %v302 = vsel %vm301, %v300, %v299
    %v303 = vrot.slane %v213, 4
    %vm304 = vcmask 1044484
    %v305 = vsel %vm304, %v303, %v302
    %v306 = vrot.slane %v217, 3
    %vm307 = vcmask 1045509
    %v308 = vsel %vm307, %v306, %v305
    %v309 = vrot.slane %v223, 2
    %vm310 = vcmask 1046534
    %v311 = vsel %vm310, %v309, %v308
    %v312 = vrot.slane %v227, 1
    %vm313 = vcmask 1047559
    %v314 = vsel %vm313, %v312, %v311
    %v315 = vrot.slane %v199, 7
    %v316 = vsel %vm295, %v315, %v195
    %v317 = vrot.slane %v205, 6
    %v318 = vsel %vm298, %v317, %v316
    %v319 = vrot.slane %v209, 5
    %v320 = vsel %vm301, %v319, %v318
    %v321 = vrot.slane %v215, 4
    %v322 = vsel %vm304, %v321, %v320
    %v323 = vrot.slane %v219, 3
    %v324 = vsel %vm307, %v323, %v322
    %v325 = vrot.slane %v225, 2
    %v326 = vsel %vm310, %v325, %v324
    %v327 = vrot.slane %v229, 1
    %v328 = vsel %vm313, %v327, %v326
    %v329 = vrot.slane %v237, 7
    %v330 = vsel %vm295, %v329, %v233
    %v331 = vrot.slane %v239, 7
    %v332 = vsel %vm295, %v331, %v235
    %v337 = vrot.slane %v193, 7
    %v338 = vrot.slane %v197, 6
    %v339 = vsel %vm295, %v338, %v337
    %v340 = vrot.slane %v203, 5
    %v341 = vsel %vm298, %v340, %v339
    %v342 = vrot.slane %v207, 4
    %v343 = vsel %vm301, %v342, %v341
    %v344 = vrot.slane %v213, 3
    %v345 = vsel %vm304, %v344, %v343
    %v346 = vrot.slane %v217, 2
    %v347 = vsel %vm307, %v346, %v345
    %v348 = vrot.slane %v223, 1
    %v349 = vsel %vm310, %v348, %v347
    %v350 = vsel %vm313, %v227, %v349
    %v351 = vrot.slane %v195, 7
    %v352 = vrot.slane %v199, 6
    %v353 = vsel %vm295, %v352, %v351
    %v354 = vrot.slane %v205, 5
    %v355 = vsel %vm298, %v354, %v353
    %v356 = vrot.slane %v209, 4
    %v357 = vsel %vm301, %v356, %v355
    %v358 = vrot.slane %v215, 3
    %v359 = vsel %vm304, %v358, %v357
    %v360 = vrot.slane %v219, 2
    %v361 = vsel %vm307, %v360, %v359
    %v362 = vrot.slane %v225, 1
    %v363 = vsel %vm310, %v362, %v361
    %v364 = vsel %vm313, %v229, %v363
    %v365 = vrot.slane %v233, 7
    %v366 = vrot.slane %v237, 6
    %v367 = vsel %vm295, %v366, %v365
    %v368 = vrot.slane %v235, 7
    %v369 = vrot.slane %v239, 6
    %v370 = vsel %vm295, %v369, %v368
    %v375 = vsel %vm272, %v314, %v350
    %v376 = vsel %vm273, %v328, %v364
    %v377 = vsel %vm272, %v330, %v367
    %v378 = vsel %vm273, %v332, %v370
    %v379 = vrot.slane %v193, 1
    %v380 = vsel %vm295, %v197, %v379
    %v381 = vrot.slane %v203, 7
    %v382 = vsel %vm298, %v381, %v380
    %v383 = vrot.slane %v207, 6
    %v384 = vsel %vm301, %v383, %v382
    %v385 = vrot.slane %v213, 5
    %v386 = vsel %vm304, %v385, %v384
    %v387 = vrot.slane %v217, 4
    %v388 = vsel %vm307, %v387, %v386
    %v389 = vrot.slane %v223, 3
    %v390 = vsel %vm310, %v389, %v388
    %v391 = vrot.slane %v227, 2
    %v392 = vsel %vm313, %v391, %v390
    %v393 = vrot.slane %v195, 1
    %v394 = vsel %vm295, %v199, %v393
    %v395 = vrot.slane %v205, 7
    %v396 = vsel %vm298, %v395, %v394
    %v397 = vrot.slane %v209, 6
    %v398 = vsel %vm301, %v397, %v396
    %v399 = vrot.slane %v215, 5
    %v400 = vsel %vm304, %v399, %v398
    %v401 = vrot.slane %v219, 4
    %v402 = vsel %vm307, %v401, %v400
    %v403 = vrot.slane %v225, 3
    %v404 = vsel %vm310, %v403, %v402
    %v405 = vrot.slane %v229, 2
    %v406 = vsel %vm313, %v405, %v404
    %v407 = vrot.slane %v233, 1
    %v408 = vsel %vm295, %v237, %v407
    %v409 = vrot.slane %v235, 1
    %v410 = vsel %vm295, %v239, %v409
    %v415 = vrot.slane %v193, 6
    %v416 = vrot.slane %v197, 5
    %v417 = vsel %vm295, %v416, %v415
    %v418 = vrot.slane %v203, 4
    %v419 = vsel %vm298, %v418, %v417
    %v420 = vrot.slane %v207, 3
    %v421 = vsel %vm301, %v420, %v419
    %v422 = vrot.slane %v213, 2
    %v423 = vsel %vm304, %v422, %v421
    %v424 = vrot.slane %v217, 1
    %v425 = vsel %vm307, %v424, %v423
    %v426 = vsel %vm310, %v223, %v425
    %v427 = vrot.slane %v227, 7
    %v428 = vsel %vm313, %v427, %v426
    %v429 = vrot.slane %v195, 6
    %v430 = vrot.slane %v199, 5
    %v431 = vsel %vm295, %v430, %v429
    %v432 = vrot.slane %v205, 4
    %v433 = vsel %vm298, %v432, %v431
    %v434 = vrot.slane %v209, 3
    %v435 = vsel %vm301, %v434, %v433
    %v436 = vrot.slane %v215, 2
    %v437 = vsel %vm304, %v436, %v435
    %v438 = vrot.slane %v219, 1
    %v439 = vsel %vm307, %v438, %v437
    %v440 = vsel %vm310, %v225, %v439
    %v441 = vrot.slane %v229, 7
    %v442 = vsel %vm313, %v441, %v440
    %v443 = vrot.slane %v233, 6
    %v444 = vrot.slane %v237, 5
    %v445 = vsel %vm295, %v444, %v443
    %v446 = vrot.slane %v235, 6
    %v447 = vrot.slane %v239, 5
    %v448 = vsel %vm295, %v447, %v446
    %v453 = vsel %vm272, %v392, %v428
    %v454 = vsel %vm273, %v406, %v442
    %v455 = vsel %vm272, %v408, %v445
    %v456 = vsel %vm273, %v410, %v448
    %v457 = vrot.slane %v193, 2
    %v458 = vrot.slane %v197, 1
    %v459 = vsel %vm295, %v458, %v457
    %v460 = vsel %vm298, %v203, %v459
    %v461 = vrot.slane %v207, 7
    %v462 = vsel %vm301, %v461, %v460
    %v463 = vrot.slane %v213, 6
    %v464 = vsel %vm304, %v463, %v462
    %v465 = vrot.slane %v217, 5
    %v466 = vsel %vm307, %v465, %v464
    %v467 = vrot.slane %v223, 4
    %v468 = vsel %vm310, %v467, %v466
    %v469 = vrot.slane %v227, 3
    %v470 = vsel %vm313, %v469, %v468
    %v471 = vrot.slane %v195, 2
    %v472 = vrot.slane %v199, 1
    %v473 = vsel %vm295, %v472, %v471
    %v474 = vsel %vm298, %v205, %v473
    %v475 = vrot.slane %v209, 7
    %v476 = vsel %vm301, %v475, %v474
    %v477 = vrot.slane %v215, 6
    %v478 = vsel %vm304, %v477, %v476
    %v479 = vrot.slane %v219, 5
    %v480 = vsel %vm307, %v479, %v478
    %v481 = vrot.slane %v225, 4
    %v482 = vsel %vm310, %v481, %v480
    %v483 = vrot.slane %v229, 3
    %v484 = vsel %vm313, %v483, %v482
    %v485 = vrot.slane %v233, 2
    %v486 = vrot.slane %v237, 1
    %v487 = vsel %vm295, %v486, %v485
    %v488 = vrot.slane %v235, 2
    %v489 = vrot.slane %v239, 1
    %v490 = vsel %vm295, %v489, %v488
    %v495 = vrot.slane %v193, 5
    %v496 = vrot.slane %v197, 4
    %v497 = vsel %vm295, %v496, %v495
    %v498 = vrot.slane %v203, 3
    %v499 = vsel %vm298, %v498, %v497
    %v500 = vrot.slane %v207, 2
    %v501 = vsel %vm301, %v500, %v499
    %v502 = vrot.slane %v213, 1
    %v503 = vsel %vm304, %v502, %v501
    %v504 = vsel %vm307, %v217, %v503
    %v505 = vrot.slane %v223, 7
    %v506 = vsel %vm310, %v505, %v504
    %v507 = vrot.slane %v227, 6
    %v508 = vsel %vm313, %v507, %v506
    %v509 = vrot.slane %v195, 5
    %v510 = vrot.slane %v199, 4
    %v511 = vsel %vm295, %v510, %v509
    %v512 = vrot.slane %v205, 3
    %v513 = vsel %vm298, %v512, %v511
    %v514 = vrot.slane %v209, 2
    %v515 = vsel %vm301, %v514, %v513
    %v516 = vrot.slane %v215, 1
    %v517 = vsel %vm304, %v516, %v515
    %v518 = vsel %vm307, %v219, %v517
    %v519 = vrot.slane %v225, 7
    %v520 = vsel %vm310, %v519, %v518
    %v521 = vrot.slane %v229, 6
    %v522 = vsel %vm313, %v521, %v520
    %v523 = vrot.slane %v233, 5
    %v524 = vrot.slane %v237, 4
    %v525 = vsel %vm295, %v524, %v523
    %v526 = vrot.slane %v235, 5
    %v527 = vrot.slane %v239, 4
    %v528 = vsel %vm295, %v527, %v526
    %v533 = vsel %vm272, %v470, %v508
    %v534 = vsel %vm273, %v484, %v522
    %v535 = vsel %vm272, %v487, %v525
    %v536 = vsel %vm273, %v490, %v528
    %v537 = vrot.slane %v193, 3
    %v538 = vrot.slane %v197, 2
    %v539 = vsel %vm295, %v538, %v537
    %v540 = vrot.slane %v203, 1
    %v541 = vsel %vm298, %v540, %v539
    %v542 = vsel %vm301, %v207, %v541
    %v543 = vrot.slane %v213, 7
    %v544 = vsel %vm304, %v543, %v542
    %v545 = vrot.slane %v217, 6
    %v546 = vsel %vm307, %v545, %v544
    %v547 = vrot.slane %v223, 5
    %v548 = vsel %vm310, %v547, %v546
    %v549 = vrot.slane %v227, 4
    %v550 = vsel %vm313, %v549, %v548
    %v551 = vrot.slane %v195, 3
    %v552 = vrot.slane %v199, 2
    %v553 = vsel %vm295, %v552, %v551
    %v554 = vrot.slane %v205, 1
    %v555 = vsel %vm298, %v554, %v553
    %v556 = vsel %vm301, %v209, %v555
    %v557 = vrot.slane %v215, 7
    %v558 = vsel %vm304, %v557, %v556
    %v559 = vrot.slane %v219, 6
    %v560 = vsel %vm307, %v559, %v558
    %v561 = vrot.slane %v225, 5
    %v562 = vsel %vm310, %v561, %v560
    %v563 = vrot.slane %v229, 4
    %v564 = vsel %vm313, %v563, %v562
    %v565 = vrot.slane %v233, 3
    %v566 = vrot.slane %v237, 2
    %v567 = vsel %vm295, %v566, %v565
    %v568 = vrot.slane %v235, 3
    %v569 = vrot.slane %v239, 2
    %v570 = vsel %vm295, %v569, %v568
    %v575 = vrot.slane %v193, 4
    %v576 = vrot.slane %v197, 3
    %v577 = vsel %vm295, %v576, %v575
    %v578 = vrot.slane %v203, 2
    %v579 = vsel %vm298, %v578, %v577
    %v580 = vrot.slane %v207, 1
    %v581 = vsel %vm301, %v580, %v579
    %v582 = vsel %vm304, %v213, %v581
    %v583 = vrot.slane %v217, 7
    %v584 = vsel %vm307, %v583, %v582
    %v585 = vrot.slane %v223, 6
    %v586 = vsel %vm310, %v585, %v584
    %v587 = vrot.slane %v227, 5
    %v588 = vsel %vm313, %v587, %v586
    %v589 = vrot.slane %v195, 4
    %v590 = vrot.slane %v199, 3
    %v591 = vsel %vm295, %v590, %v589
    %v592 = vrot.slane %v205, 2
    %v593 = vsel %vm298, %v592, %v591
    %v594 = vrot.slane %v209, 1
    %v595 = vsel %vm301, %v594, %v593
    %v596 = vsel %vm304, %v215, %v595
    %v597 = vrot.slane %v219, 7
    %v598 = vsel %vm307, %v597, %v596
    %v599 = vrot.slane %v225, 6
    %v600 = vsel %vm310, %v599, %v598
    %v601 = vrot.slane %v229, 5
    %v602 = vsel %vm313, %v601, %v600
    %v603 = vrot.slane %v233, 4
    %v604 = vrot.slane %v237, 3
    %v605 = vsel %vm295, %v604, %v603
    %v606 = vrot.slane %v235, 4
    %v607 = vrot.slane %v239, 3
    %v608 = vsel %vm295, %v607, %v606
    %v613 = vsel %vm272, %v550, %v588
    %v614 = vsel %vm273, %v564, %v602
    %v615 = vsel %vm272, %v567, %v605
    %v616 = vsel %vm273, %v570, %v608
    %v617 = vsel %vm272, %v588, %v550
    %v618 = vsel %vm273, %v602, %v564
    %v619 = vsel %vm272, %v605, %v567
    %v620 = vsel %vm273, %v608, %v570
    %v621 = vsel %vm272, %v508, %v470
    %v622 = vsel %vm273, %v522, %v484
    %v623 = vsel %vm272, %v525, %v487
    %v624 = vsel %vm273, %v528, %v490
    %v625 = vsel %vm272, %v428, %v392
    %v626 = vsel %vm273, %v442, %v406
    %v627 = vsel %vm272, %v445, %v408
    %v628 = vsel %vm273, %v448, %v410
    %v629 = vsel %vm272, %v350, %v314
    %v630 = vsel %vm273, %v364, %v328
    %v631 = vsel %vm272, %v367, %v330
    %v632 = vsel %vm273, %v370, %v332
    %v641 = vunpack.c.l.b16 %v87
    %v642 = vunpack.c.h.b16 %v87
    %v643 = vunpack.c.l.b16 %v88
    %v644 = vunpack.c.h.b16 %v88
    %v645 = vunpack.c.l.b16 %v89
    %v646 = vunpack.c.h.b16 %v89
    %v647 = vunpack.c.l.b16 %v90
    %v648 = vunpack.c.h.b16 %v90
    %v649 = vunpack.c.l.b16 %v91
    %v650 = vunpack.c.h.b16 %v91
    %v651 = vunpack.c.l.b16 %v92
    %v652 = vunpack.c.h.b16 %v92
    %v653 = vunpack.c.l.b16 %v93
    %v654 = vunpack.c.h.b16 %v93
    %v655 = vunpack.c.l.b16 %v94
    %v656 = vunpack.c.h.b16 %v94
    %v657 = vpack.c.b16 %v643, %v641
    %v658 = vpack.c.b16 %v644, %v642
    %v659 = vpack.c.b16 %v647, %v645
    %v660 = vpack.c.b16 %v648, %v646
    %v661 = vpack.c.b16 %v651, %v649
    %v662 = vpack.c.b16 %v652, %v650
    %v663 = vpack.c.b16 %v655, %v653
    %v664 = vpack.c.b16 %v656, %v654
    %vm673 = vcmask 523264
    %v675 = vsel %vm673, 0, 0
    %677 = vmatprep.subr.bf16.mxu0 %v658
    %678 = vmatpush1.bf16.msra.mxu0 %v657
    %679 = vmatprep.subr.bf16.mxu0 %v660
    %680 = vmatpush1.bf16.msra.mxu0 %v659
    %681 = vmatprep.subr.bf16.mxu0 %v662
    %682 = vmatpush1.bf16.msra.mxu0 %v661
    %683 = vmatprep.subr.bf16.mxu0 %v664
    %684 = vmatpush1.bf16.msra.mxu0 %v663
    %685 = vmatprep.subr.bf16.mxu0 0
    %686 = vmatpush1.bf16.msra.mxu0 0
    %687 = vmatprep.subr.bf16.mxu0 0
    %688 = vmatpush1.bf16.msra.mxu0 0
    %689 = vmatprep.subr.bf16.mxu0 0
    %690 = vmatpush1.bf16.msra.mxu0 0
    %691 = vmatprep.subr.bf16.mxu0 0
    %692 = vmatpush1.bf16.msra.mxu0 0
    %693 = vmatprep.subr.bf16.mxu0 0
    %694 = vmatpush1.bf16.msra.mxu0 0
    %695 = vmatprep.subr.bf16.mxu0 0
    %696 = vmatpush1.bf16.msra.mxu0 0
    %697 = vmatprep.subr.bf16.mxu0 0
    %698 = vmatpush1.bf16.msra.mxu0 0
    %699 = vmatprep.subr.bf16.mxu0 0
    %700 = vmatpush1.bf16.msra.mxu0 0
    %701 = vmatprep.subr.bf16.mxu0 0
    %702 = vmatpush1.bf16.msra.mxu0 0
    %703 = vmatprep.subr.bf16.mxu0 0
    %704 = vmatpush1.bf16.msra.mxu0 0
    %705 = vmatprep.subr.bf16.mxu0 0
    %706 = vmatpush1.bf16.msra.mxu0 0
    %707 = vmatprep.subr.bf16.mxu0 0
    %708 = vmatpush1.bf16.msra.mxu0 0
    %709 = vmatprep.mubr.bf16.mxu0 0
    %710 = vmatmul.mubr.bf16.gmra.mrb[0].mxu0 %v675
    %v711 = vpop.f32.mrb[0].mxu0
    %v712 = vadd.f32 0.0, %v711
    %v713 = vpop.f32.mrb[0].mxu0
    %v714 = vadd.f32 0.0, %v713
    %v715 = vpop.f32.mrb[0].mxu0
    %v716 = vadd.f32 0.0, %v715
    %v717 = vpop.f32.mrb[0].mxu0
    %v718 = vadd.f32 0.0, %v717
    %719 = vdwg.mxu0
    %v720 = vadd.f32 %v375, %v712
    %v721 = vadd.f32 %v376, %v714
    %v722 = vadd.f32 %v377, %v716
    %v723 = vadd.f32 %v378, %v718
    %v724 = vxor.u32 %v720, 2147483648
    %v725 = vxor.u32 %v722, 2147483648
    %v726 = vmul.f32 %v724, 1.442695
    %v727 = vpow.pop %v726
    %v728 = vmul.f32 %v725, 1.442695
    %v729 = vpow.pop %v728
    %v730 = vadd.f32 %v727, 1.0
    %v731 = vadd.f32 %v729, 1.0
    %v732 = vrcp.pop %v730
    %v733 = vmul.f32 1.0, %v732
    %v734 = vrcp.pop %v731
    %v735 = vmul.f32 1.0, %v734
    %v736 = vtanh.pop %v721
    %v737 = vtanh.pop %v723
    %v738 = vxor.u32 %v721, 2147483648
    %v739 = vxor.u32 %v723, 2147483648
    %v740 = vmul.f32 %v738, 1.442695
    %v741 = vpow.pop %v740
    %v742 = vmul.f32 %v739, 1.442695
    %v743 = vpow.pop %v742
    %v744 = vadd.f32 %v741, 1.0
    %v745 = vadd.f32 %v743, 1.0
    %v746 = vrcp.pop %v744
    %v747 = vmul.f32 1.0, %v746
    %v748 = vrcp.pop %v745
    %v749 = vmul.f32 1.0, %v748
    %v750 = vmul.f32 %v733, 0.0
    %v751 = vmul.f32 %v735, 0.0
    %v752 = vmul.f32 %v733, %v736
    %v753 = vmul.f32 %v735, %v737
    %756 = vrot.lane.b32.xlu0 %v752, 64
    %v757 = vpop.permute.xlu0 %756
    %758 = vrot.lane.b32.xlu0 %v753, 64
    %v759 = vpop.permute.xlu0 %758
    %v762 = vadd.f32 %v750, %v757
    %v763 = vadd.f32 %v751, %v759
    %v764 = vtanh.pop %v762
    %v765 = vtanh.pop %v763
    %v766 = vmul.f32 %v747, %v764
    %v767 = vmul.f32 %v749, %v765
    %v768 = vpack.c.bf16 %v767, %v766
    %770 = vrot.lane.b32.xlu0 %v768, 64
    %v771 = vpop.permute.xlu0 %770
    %v773 = vsel %vm673, %v771, 0
    %775 = vmatprep.subr.bf16.mxu0 %v658
    %776 = vmatpush1.bf16.msra.mxu0 %v657
    %777 = vmatprep.subr.bf16.mxu0 %v660
    %778 = vmatpush1.bf16.msra.mxu0 %v659
    %779 = vmatprep.subr.bf16.mxu0 %v662
    %780 = vmatpush1.bf16.msra.mxu0 %v661
    %781 = vmatprep.subr.bf16.mxu0 %v664
    %782 = vmatpush1.bf16.msra.mxu0 %v663
    %783 = vmatprep.subr.bf16.mxu0 0
    %784 = vmatpush1.bf16.msra.mxu0 0
    %785 = vmatprep.subr.bf16.mxu0 0
    %786 = vmatpush1.bf16.msra.mxu0 0
    %787 = vmatprep.subr.bf16.mxu0 0
    %788 = vmatpush1.bf16.msra.mxu0 0
    %789 = vmatprep.subr.bf16.mxu0 0
    %790 = vmatpush1.bf16.msra.mxu0 0
    %791 = vmatprep.subr.bf16.mxu0 0
    %792 = vmatpush1.bf16.msra.mxu0 0
    %793 = vmatprep.subr.bf16.mxu0 0
    %794 = vmatpush1.bf16.msra.mxu0 0
    %795 = vmatprep.subr.bf16.mxu0 0
    %796 = vmatpush1.bf16.msra.mxu0 0
    %797 = vmatprep.subr.bf16.mxu0 0
    %798 = vmatpush1.bf16.msra.mxu0 0
    %799 = vmatprep.subr.bf16.mxu0 0
    %800 = vmatpush1.bf16.msra.mxu0 0
    %801 = vmatprep.subr.bf16.mxu0 0
    %802 = vmatpush1.bf16.msra.mxu0 0
    %803 = vmatprep.subr.bf16.mxu0 0
    %804 = vmatpush1.bf16.msra.mxu0 0
    %805 = vmatprep.subr.bf16.mxu0 0
    %806 = vmatpush1.bf16.msra.mxu0 0
    %807 = vmatprep.mubr.bf16.mxu0 0
    %808 = vmatmul.mubr.bf16.gmra.mrb[0].mxu0 %v773
    %v809 = vpop.f32.mrb[0].mxu0
    %v810 = vadd.f32 0.0, %v809
    %v811 = vpop.f32.mrb[0].mxu0
    %v812 = vadd.f32 0.0, %v811
    %v813 = vpop.f32.mrb[0].mxu0
    %v814 = vadd.f32 0.0, %v813
    %v815 = vpop.f32.mrb[0].mxu0
    %v816 = vadd.f32 0.0, %v815
    %817 = vdwg.mxu0
    %v818 = vadd.f32 %v453, %v810
    %v819 = vadd.f32 %v454, %v812
    %v820 = vadd.f32 %v455, %v814
    %v821 = vadd.f32 %v456, %v816
    %v822 = vxor.u32 %v818, 2147483648
    %v823 = vxor.u32 %v820, 2147483648
    %v824 = vmul.f32 %v822, 1.442695
    %v825 = vpow.pop %v824
    %v826 = vmul.f32 %v823, 1.442695
    %v827 = vpow.pop %v826
    %v828 = vadd.f32 %v825, 1.0
    %v829 = vadd.f32 %v827, 1.0
    %v830 = vrcp.pop %v828
    %v831 = vmul.f32 1.0, %v830
    %v832 = vrcp.pop %v829
    %v833 = vmul.f32 1.0, %v832
    %v834 = vtanh.pop %v819
    %v835 = vtanh.pop %v821
    %v836 = vxor.u32 %v819, 2147483648
    %v837 = vxor.u32 %v821, 2147483648
    %v838 = vmul.f32 %v836, 1.442695
    %v839 = vpow.pop %v838
    %v840 = vmul.f32 %v837, 1.442695
    %v841 = vpow.pop %v840
    %v842 = vadd.f32 %v839, 1.0
    %v843 = vadd.f32 %v841, 1.0
    %v844 = vrcp.pop %v842
    %v845 = vmul.f32 1.0, %v844
    %v846 = vrcp.pop %v843
    %v847 = vmul.f32 1.0, %v846
    %v848 = vmul.f32 %v831, %v762
    %v849 = vmul.f32 %v833, %v763
    %v850 = vmul.f32 %v831, %v834
    %v851 = vmul.f32 %v833, %v835
    %854 = vrot.lane.b32.xlu0 %v850, 64
    %v855 = vpop.permute.xlu0 %854
    %856 = vrot.lane.b32.xlu0 %v851, 64
    %v857 = vpop.permute.xlu0 %856
    %v860 = vadd.f32 %v848, %v855
    %v861 = vadd.f32 %v849, %v857
    %v862 = vtanh.pop %v860
    %v863 = vtanh.pop %v861
    %v864 = vmul.f32 %v845, %v862
    %v865 = vmul.f32 %v847, %v863
    %v866 = vmax.f32 %v766, %v864
    %v867 = vmax.f32 %v767, %v865
    %v868 = vpack.c.bf16 %v865, %v864
    %870 = vrot.lane.b32.xlu0 %v868, 64
    %v871 = vpop.permute.xlu0 %870
    %v873 = vsel %vm673, %v871, 0
    %875 = vmatprep.subr.bf16.mxu0 %v658
    %876 = vmatpush1.bf16.msra.mxu0 %v657
    %877 = vmatprep.subr.bf16.mxu0 %v660
    %878 = vmatpush1.bf16.msra.mxu0 %v659
    %879 = vmatprep.subr.bf16.mxu0 %v662
    %880 = vmatpush1.bf16.msra.mxu0 %v661
    %881 = vmatprep.subr.bf16.mxu0 %v664
    %882 = vmatpush1.bf16.msra.mxu0 %v663
    %883 = vmatprep.subr.bf16.mxu0 0
    %884 = vmatpush1.bf16.msra.mxu0 0
    %885 = vmatprep.subr.bf16.mxu0 0
    %886 = vmatpush1.bf16.msra.mxu0 0
    %887 = vmatprep.subr.bf16.mxu0 0
    %888 = vmatpush1.bf16.msra.mxu0 0
    %889 = vmatprep.subr.bf16.mxu0 0
    %890 = vmatpush1.bf16.msra.mxu0 0
    %891 = vmatprep.subr.bf16.mxu0 0
    %892 = vmatpush1.bf16.msra.mxu0 0
    %893 = vmatprep.subr.bf16.mxu0 0
    %894 = vmatpush1.bf16.msra.mxu0 0
    %895 = vmatprep.subr.bf16.mxu0 0
    %896 = vmatpush1.bf16.msra.mxu0 0
    %897 = vmatprep.subr.bf16.mxu0 0
    %898 = vmatpush1.bf16.msra.mxu0 0
    %899 = vmatprep.subr.bf16.mxu0 0
    %900 = vmatpush1.bf16.msra.mxu0 0
    %901 = vmatprep.subr.bf16.mxu0 0
    %902 = vmatpush1.bf16.msra.mxu0 0
    %903 = vmatprep.subr.bf16.mxu0 0
    %904 = vmatpush1.bf16.msra.mxu0 0
    %905 = vmatprep.subr.bf16.mxu0 0
    %906 = vmatpush1.bf16.msra.mxu0 0
    %907 = vmatprep.mubr.bf16.mxu0 0
    %908 = vmatmul.mubr.bf16.gmra.mrb[0].mxu0 %v873
    %v909 = vpop.f32.mrb[0].mxu0
    %v910 = vadd.f32 0.0, %v909
    %v911 = vpop.f32.mrb[0].mxu0
    %v912 = vadd.f32 0.0, %v911
    %v913 = vpop.f32.mrb[0].mxu0
    %v914 = vadd.f32 0.0, %v913
    %v915 = vpop.f32.mrb[0].mxu0
    %v916 = vadd.f32 0.0, %v915
    %917 = vdwg.mxu0
    %v918 = vadd.f32 %v533, %v910
    %v919 = vadd.f32 %v534, %v912
    %v920 = vadd.f32 %v535, %v914
    %v921 = vadd.f32 %v536, %v916
    %v922 = vxor.u32 %v918, 2147483648
    %v923 = vxor.u32 %v920, 2147483648
    %v924 = vmul.f32 %v922, 1.442695
    %v925 = vpow.pop %v924
    %v926 = vmul.f32 %v923, 1.442695
    %v927 = vpow.pop %v926
    %v928 = vadd.f32 %v925, 1.0
    %v929 = vadd.f32 %v927, 1.0
    %v930 = vrcp.pop %v928
    %v931 = vmul.f32 1.0, %v930
    %v932 = vrcp.pop %v929
    %v933 = vmul.f32 1.0, %v932
    %v934 = vtanh.pop %v919
    %v935 = vtanh.pop %v921
    %v936 = vxor.u32 %v919, 2147483648
    %v937 = vxor.u32 %v921, 2147483648
    %v938 = vmul.f32 %v936, 1.442695
    %v939 = vpow.pop %v938
    %v940 = vmul.f32 %v937, 1.442695
    %v941 = vpow.pop %v940
    %v942 = vadd.f32 %v939, 1.0
    %v943 = vadd.f32 %v941, 1.0
    %v944 = vrcp.pop %v942
    %v945 = vmul.f32 1.0, %v944
    %v946 = vrcp.pop %v943
    %v947 = vmul.f32 1.0, %v946
    %v948 = vmul.f32 %v931, %v860
    %v949 = vmul.f32 %v933, %v861
    %v950 = vmul.f32 %v931, %v934
    %v951 = vmul.f32 %v933, %v935
    %954 = vrot.lane.b32.xlu0 %v950, 64
    %v955 = vpop.permute.xlu0 %954
    %956 = vrot.lane.b32.xlu0 %v951, 64
    %v957 = vpop.permute.xlu0 %956
    %v960 = vadd.f32 %v948, %v955
    %v961 = vadd.f32 %v949, %v957
    %v962 = vtanh.pop %v960
    %v963 = vtanh.pop %v961
    %v964 = vmul.f32 %v945, %v962
    %v965 = vmul.f32 %v947, %v963
    %v966 = vmax.f32 %v866, %v964
    %v967 = vmax.f32 %v867, %v965
    %v968 = vpack.c.bf16 %v965, %v964
    %970 = vrot.lane.b32.xlu0 %v968, 64
    %v971 = vpop.permute.xlu0 %970
    %v973 = vsel %vm673, %v971, 0
    %975 = vmatprep.subr.bf16.mxu0 %v658
    %976 = vmatpush1.bf16.msra.mxu0 %v657
    %977 = vmatprep.subr.bf16.mxu0 %v660
    %978 = vmatpush1.bf16.msra.mxu0 %v659
    %979 = vmatprep.subr.bf16.mxu0 %v662
    %980 = vmatpush1.bf16.msra.mxu0 %v661
    %981 = vmatprep.subr.bf16.mxu0 %v664
    %982 = vmatpush1.bf16.msra.mxu0 %v663
    %983 = vmatprep.subr.bf16.mxu0 0
    %984 = vmatpush1.bf16.msra.mxu0 0
    %985 = vmatprep.subr.bf16.mxu0 0
    %986 = vmatpush1.bf16.msra.mxu0 0
    %987 = vmatprep.subr.bf16.mxu0 0
    %988 = vmatpush1.bf16.msra.mxu0 0
    %989 = vmatprep.subr.bf16.mxu0 0
    %990 = vmatpush1.bf16.msra.mxu0 0
    %991 = vmatprep.subr.bf16.mxu0 0
    %992 = vmatpush1.bf16.msra.mxu0 0
    %993 = vmatprep.subr.bf16.mxu0 0
    %994 = vmatpush1.bf16.msra.mxu0 0
    %995 = vmatprep.subr.bf16.mxu0 0
    %996 = vmatpush1.bf16.msra.mxu0 0
    %997 = vmatprep.subr.bf16.mxu0 0
    %998 = vmatpush1.bf16.msra.mxu0 0
    %999 = vmatprep.subr.bf16.mxu0 0
    %1000 = vmatpush1.bf16.msra.mxu0 0
    %1001 = vmatprep.subr.bf16.mxu0 0
    %1002 = vmatpush1.bf16.msra.mxu0 0
    %1003 = vmatprep.subr.bf16.mxu0 0
    %1004 = vmatpush1.bf16.msra.mxu0 0
    %1005 = vmatprep.subr.bf16.mxu0 0
    %1006 = vmatpush1.bf16.msra.mxu0 0
    %1007 = vmatprep.mubr.bf16.mxu0 0
    %1008 = vmatmul.mubr.bf16.gmra.mrb[0].mxu0 %v973
    %v1009 = vpop.f32.mrb[0].mxu0
    %v1010 = vadd.f32 0.0, %v1009
    %v1011 = vpop.f32.mrb[0].mxu0
    %v1012 = vadd.f32 0.0, %v1011
    %v1013 = vpop.f32.mrb[0].mxu0
    %v1014 = vadd.f32 0.0, %v1013
    %v1015 = vpop.f32.mrb[0].mxu0
    %v1016 = vadd.f32 0.0, %v1015
    %1017 = vdwg.mxu0
    %v1018 = vadd.f32 %v613, %v1010
    %v1019 = vadd.f32 %v614, %v1012
    %v1020 = vadd.f32 %v615, %v1014
    %v1021 = vadd.f32 %v616, %v1016
    %v1022 = vxor.u32 %v1018, 2147483648
    %v1023 = vxor.u32 %v1020, 2147483648
    %v1024 = vmul.f32 %v1022, 1.442695
    %v1025 = vpow.pop %v1024
    %v1026 = vmul.f32 %v1023, 1.442695
    %v1027 = vpow.pop %v1026
    %v1028 = vadd.f32 %v1025, 1.0
    %v1029 = vadd.f32 %v1027, 1.0
    %v1030 = vrcp.pop %v1028
    %v1031 = vmul.f32 1.0, %v1030
    %v1032 = vrcp.pop %v1029
    %v1033 = vmul.f32 1.0, %v1032
    %v1034 = vtanh.pop %v1019
    %v1035 = vtanh.pop %v1021
    %v1036 = vxor.u32 %v1019, 2147483648
    %v1037 = vxor.u32 %v1021, 2147483648
    %v1038 = vmul.f32 %v1036, 1.442695
    %v1039 = vpow.pop %v1038
    %v1040 = vmul.f32 %v1037, 1.442695
    %v1041 = vpow.pop %v1040
    %v1042 = vadd.f32 %v1039, 1.0
    %v1043 = vadd.f32 %v1041, 1.0
    %v1044 = vrcp.pop %v1042
    %v1045 = vmul.f32 1.0, %v1044
    %v1046 = vrcp.pop %v1043
    %v1047 = vmul.f32 1.0, %v1046
    %v1048 = vmul.f32 %v1031, %v960
    %v1049 = vmul.f32 %v1033, %v961
    %v1050 = vmul.f32 %v1031, %v1034
    %v1051 = vmul.f32 %v1033, %v1035
    %1054 = vrot.lane.b32.xlu0 %v1050, 64
    %v1055 = vpop.permute.xlu0 %1054
    %1056 = vrot.lane.b32.xlu0 %v1051, 64
    %v1057 = vpop.permute.xlu0 %1056
    %v1060 = vadd.f32 %v1048, %v1055
    %v1061 = vadd.f32 %v1049, %v1057
    %v1062 = vtanh.pop %v1060
    %v1063 = vtanh.pop %v1061
    %v1064 = vmul.f32 %v1045, %v1062
    %v1065 = vmul.f32 %v1047, %v1063
    %v1066 = vmax.f32 %v966, %v1064
    %v1067 = vmax.f32 %v967, %v1065
    %v1068 = vpack.c.bf16 %v1065, %v1064
    %1070 = vrot.lane.b32.xlu0 %v1068, 64
    %v1071 = vpop.permute.xlu0 %1070
    %v1073 = vsel %vm673, %v1071, 0
    %1075 = vmatprep.subr.bf16.mxu0 %v658
    %1076 = vmatpush1.bf16.msra.mxu0 %v657
    %1077 = vmatprep.subr.bf16.mxu0 %v660
    %1078 = vmatpush1.bf16.msra.mxu0 %v659
    %1079 = vmatprep.subr.bf16.mxu0 %v662
    %1080 = vmatpush1.bf16.msra.mxu0 %v661
    %1081 = vmatprep.subr.bf16.mxu0 %v664
    %1082 = vmatpush1.bf16.msra.mxu0 %v663
    %1083 = vmatprep.subr.bf16.mxu0 0
    %1084 = vmatpush1.bf16.msra.mxu0 0
    %1085 = vmatprep.subr.bf16.mxu0 0
    %1086 = vmatpush1.bf16.msra.mxu0 0
    %1087 = vmatprep.subr.bf16.mxu0 0
    %1088 = vmatpush1.bf16.msra.mxu0 0
    %1089 = vmatprep.subr.bf16.mxu0 0
    %1090 = vmatpush1.bf16.msra.mxu0 0
    %1091 = vmatprep.subr.bf16.mxu0 0
    %1092 = vmatpush1.bf16.msra.mxu0 0
    %1093 = vmatprep.subr.bf16.mxu0 0
    %1094 = vmatpush1.bf16.msra.mxu0 0
    %1095 = vmatprep.subr.bf16.mxu0 0
    %1096 = vmatpush1.bf16.msra.mxu0 0
    %1097 = vmatprep.subr.bf16.mxu0 0
    %1098 = vmatpush1.bf16.msra.mxu0 0
    %1099 = vmatprep.subr.bf16.mxu0 0
    %1100 = vmatpush1.bf16.msra.mxu0 0
    %1101 = vmatprep.subr.bf16.mxu0 0
    %1102 = vmatpush1.bf16.msra.mxu0 0
    %1103 = vmatprep.subr.bf16.mxu0 0
    %1104 = vmatpush1.bf16.msra.mxu0 0
    %1105 = vmatprep.subr.bf16.mxu0 0
    %1106 = vmatpush1.bf16.msra.mxu0 0
    %1107 = vmatprep.mubr.bf16.mxu0 0
    %1108 = vmatmul.mubr.bf16.gmra.mrb[0].mxu0 %v1073
    %v1109 = vpop.f32.mrb[0].mxu0
    %v1110 = vadd.f32 0.0, %v1109
    %v1111 = vpop.f32.mrb[0].mxu0
    %v1112 = vadd.f32 0.0, %v1111
    %v1113 = vpop.f32.mrb[0].mxu0
    %v1114 = vadd.f32 0.0, %v1113
    %v1115 = vpop.f32.mrb[0].mxu0
    %v1116 = vadd.f32 0.0, %v1115
    %1117 = vdwg.mxu0
    %v1118 = vadd.f32 %v617, %v1110
    %v1119 = vadd.f32 %v618, %v1112
    %v1120 = vadd.f32 %v619, %v1114
    %v1121 = vadd.f32 %v620, %v1116
    %v1122 = vxor.u32 %v1118, 2147483648
    %v1123 = vxor.u32 %v1120, 2147483648
    %v1124 = vmul.f32 %v1122, 1.442695
    %v1125 = vpow.pop %v1124
    %v1126 = vmul.f32 %v1123, 1.442695
    %v1127 = vpow.pop %v1126
    %v1128 = vadd.f32 %v1125, 1.0
    %v1129 = vadd.f32 %v1127, 1.0
    %v1130 = vrcp.pop %v1128
    %v1131 = vmul.f32 1.0, %v1130
    %v1132 = vrcp.pop %v1129
    %v1133 = vmul.f32 1.0, %v1132
    %v1134 = vtanh.pop %v1119
    %v1135 = vtanh.pop %v1121
    %v1136 = vxor.u32 %v1119, 2147483648
    %v1137 = vxor.u32 %v1121, 2147483648
    %v1138 = vmul.f32 %v1136, 1.442695
    %v1139 = vpow.pop %v1138
    %v1140 = vmul.f32 %v1137, 1.442695
    %v1141 = vpow.pop %v1140
    %v1142 = vadd.f32 %v1139, 1.0
    %v1143 = vadd.f32 %v1141, 1.0
    %v1144 = vrcp.pop %v1142
    %v1145 = vmul.f32 1.0, %v1144
    %v1146 = vrcp.pop %v1143
    %v1147 = vmul.f32 1.0, %v1146
    %v1148 = vmul.f32 %v1131, %v1060
    %v1149 = vmul.f32 %v1133, %v1061
    %v1150 = vmul.f32 %v1131, %v1134
    %v1151 = vmul.f32 %v1133, %v1135
    %1154 = vrot.lane.b32.xlu0 %v1150, 64
    %v1155 = vpop.permute.xlu0 %1154
    %1156 = vrot.lane.b32.xlu0 %v1151, 64
    %v1157 = vpop.permute.xlu0 %1156
    %v1160 = vadd.f32 %v1148, %v1155
    %v1161 = vadd.f32 %v1149, %v1157
    %v1162 = vtanh.pop %v1160
    %v1163 = vtanh.pop %v1161
    %v1164 = vmul.f32 %v1145, %v1162
    %v1165 = vmul.f32 %v1147, %v1163
    %v1166 = vmax.f32 %v1066, %v1164
    %v1167 = vmax.f32 %v1067, %v1165
    %v1168 = vpack.c.bf16 %v1165, %v1164
    %1170 = vrot.lane.b32.xlu0 %v1168, 64
    %v1171 = vpop.permute.xlu0 %1170
    %v1173 = vsel %vm673, %v1171, 0
    %1175 = vmatprep.subr.bf16.mxu0 %v658
    %1176 = vmatpush1.bf16.msra.mxu0 %v657
    %1177 = vmatprep.subr.bf16.mxu0 %v660
    %1178 = vmatpush1.bf16.msra.mxu0 %v659
    %1179 = vmatprep.subr.bf16.mxu0 %v662
    %1180 = vmatpush1.bf16.msra.mxu0 %v661
    %1181 = vmatprep.subr.bf16.mxu0 %v664
    %1182 = vmatpush1.bf16.msra.mxu0 %v663
    %1183 = vmatprep.subr.bf16.mxu0 0
    %1184 = vmatpush1.bf16.msra.mxu0 0
    %1185 = vmatprep.subr.bf16.mxu0 0
    %1186 = vmatpush1.bf16.msra.mxu0 0
    %1187 = vmatprep.subr.bf16.mxu0 0
    %1188 = vmatpush1.bf16.msra.mxu0 0
    %1189 = vmatprep.subr.bf16.mxu0 0
    %1190 = vmatpush1.bf16.msra.mxu0 0
    %1191 = vmatprep.subr.bf16.mxu0 0
    %1192 = vmatpush1.bf16.msra.mxu0 0
    %1193 = vmatprep.subr.bf16.mxu0 0
    %1194 = vmatpush1.bf16.msra.mxu0 0
    %1195 = vmatprep.subr.bf16.mxu0 0
    %1196 = vmatpush1.bf16.msra.mxu0 0
    %1197 = vmatprep.subr.bf16.mxu0 0
    %1198 = vmatpush1.bf16.msra.mxu0 0
    %1199 = vmatprep.subr.bf16.mxu0 0
    %1200 = vmatpush1.bf16.msra.mxu0 0
    %1201 = vmatprep.subr.bf16.mxu0 0
    %1202 = vmatpush1.bf16.msra.mxu0 0
    %1203 = vmatprep.subr.bf16.mxu0 0
    %1204 = vmatpush1.bf16.msra.mxu0 0
    %1205 = vmatprep.subr.bf16.mxu0 0
    %1206 = vmatpush1.bf16.msra.mxu0 0
    %1207 = vmatprep.mubr.bf16.mxu0 0
    %1208 = vmatmul.mubr.bf16.gmra.mrb[0].mxu0 %v1173
    %v1209 = vpop.f32.mrb[0].mxu0
    %v1210 = vadd.f32 0.0, %v1209
    %v1211 = vpop.f32.mrb[0].mxu0
    %v1212 = vadd.f32 0.0, %v1211
    %v1213 = vpop.f32.mrb[0].mxu0
    %v1214 = vadd.f32 0.0, %v1213
    %v1215 = vpop.f32.mrb[0].mxu0
    %v1216 = vadd.f32 0.0, %v1215
    %1217 = vdwg.mxu0
    %v1218 = vadd.f32 %v621, %v1210
    %v1219 = vadd.f32 %v622, %v1212
    %v1220 = vadd.f32 %v623, %v1214
    %v1221 = vadd.f32 %v624, %v1216
    %v1222 = vxor.u32 %v1218, 2147483648
    %v1223 = vxor.u32 %v1220, 2147483648
    %v1224 = vmul.f32 %v1222, 1.442695
    %v1225 = vpow.pop %v1224
    %v1226 = vmul.f32 %v1223, 1.442695
    %v1227 = vpow.pop %v1226
    %v1228 = vadd.f32 %v1225, 1.0
    %v1229 = vadd.f32 %v1227, 1.0
    %v1230 = vrcp.pop %v1228
    %v1231 = vmul.f32 1.0, %v1230
    %v1232 = vrcp.pop %v1229
    %v1233 = vmul.f32 1.0, %v1232
    %v1234 = vtanh.pop %v1219
    %v1235 = vtanh.pop %v1221
    %v1236 = vxor.u32 %v1219, 2147483648
    %v1237 = vxor.u32 %v1221, 2147483648
    %v1238 = vmul.f32 %v1236, 1.442695
    %v1239 = vpow.pop %v1238
    %v1240 = vmul.f32 %v1237, 1.442695
    %v1241 = vpow.pop %v1240
    %v1242 = vadd.f32 %v1239, 1.0
    %v1243 = vadd.f32 %v1241, 1.0
    %v1244 = vrcp.pop %v1242
    %v1245 = vmul.f32 1.0, %v1244
    %v1246 = vrcp.pop %v1243
    %v1247 = vmul.f32 1.0, %v1246
    %v1248 = vmul.f32 %v1231, %v1160
    %v1249 = vmul.f32 %v1233, %v1161
    %v1250 = vmul.f32 %v1231, %v1234
    %v1251 = vmul.f32 %v1233, %v1235
    %1254 = vrot.lane.b32.xlu0 %v1250, 64
    %v1255 = vpop.permute.xlu0 %1254
    %1256 = vrot.lane.b32.xlu0 %v1251, 64
    %v1257 = vpop.permute.xlu0 %1256
    %v1260 = vadd.f32 %v1248, %v1255
    %v1261 = vadd.f32 %v1249, %v1257
    %v1262 = vtanh.pop %v1260
    %v1263 = vtanh.pop %v1261
    %v1264 = vmul.f32 %v1245, %v1262
    %v1265 = vmul.f32 %v1247, %v1263
    %v1266 = vmax.f32 %v1166, %v1264
    %v1267 = vmax.f32 %v1167, %v1265
    %v1268 = vpack.c.bf16 %v1265, %v1264
    %1270 = vrot.lane.b32.xlu0 %v1268, 64
    %v1271 = vpop.permute.xlu0 %1270
    %v1273 = vsel %vm673, %v1271, 0
    %1275 = vmatprep.subr.bf16.mxu0 %v658
    %1276 = vmatpush1.bf16.msra.mxu0 %v657
    %1277 = vmatprep.subr.bf16.mxu0 %v660
    %1278 = vmatpush1.bf16.msra.mxu0 %v659
    %1279 = vmatprep.subr.bf16.mxu0 %v662
    %1280 = vmatpush1.bf16.msra.mxu0 %v661
    %1281 = vmatprep.subr.bf16.mxu0 %v664
    %1282 = vmatpush1.bf16.msra.mxu0 %v663
    %1283 = vmatprep.subr.bf16.mxu0 0
    %1284 = vmatpush1.bf16.msra.mxu0 0
    %1285 = vmatprep.subr.bf16.mxu0 0
    %1286 = vmatpush1.bf16.msra.mxu0 0
    %1287 = vmatprep.subr.bf16.mxu0 0
    %1288 = vmatpush1.bf16.msra.mxu0 0
    %1289 = vmatprep.subr.bf16.mxu0 0
    %1290 = vmatpush1.bf16.msra.mxu0 0
    %1291 = vmatprep.subr.bf16.mxu0 0
    %1292 = vmatpush1.bf16.msra.mxu0 0
    %1293 = vmatprep.subr.bf16.mxu0 0
    %1294 = vmatpush1.bf16.msra.mxu0 0
    %1295 = vmatprep.subr.bf16.mxu0 0
    %1296 = vmatpush1.bf16.msra.mxu0 0
    %1297 = vmatprep.subr.bf16.mxu0 0
    %1298 = vmatpush1.bf16.msra.mxu0 0
    %1299 = vmatprep.subr.bf16.mxu0 0
    %1300 = vmatpush1.bf16.msra.mxu0 0
    %1301 = vmatprep.subr.bf16.mxu0 0
    %1302 = vmatpush1.bf16.msra.mxu0 0
    %1303 = vmatprep.subr.bf16.mxu0 0
    %1304 = vmatpush1.bf16.msra.mxu0 0
    %1305 = vmatprep.subr.bf16.mxu0 0
    %1306 = vmatpush1.bf16.msra.mxu0 0
    %1307 = vmatprep.mubr.bf16.mxu0 0
    %1308 = vmatmul.mubr.bf16.gmra.mrb[0].mxu0 %v1273
    %v1309 = vpop.f32.mrb[0].mxu0
    %v1310 = vadd.f32 0.0, %v1309
    %v1311 = vpop.f32.mrb[0].mxu0
    %v1312 = vadd.f32 0.0, %v1311
    %v1313 = vpop.f32.mrb[0].mxu0
    %v1314 = vadd.f32 0.0, %v1313
    %v1315 = vpop.f32.mrb[0].mxu0
    %v1316 = vadd.f32 0.0, %v1315
    %1317 = vdwg.mxu0
    %v1318 = vadd.f32 %v625, %v1310
    %v1319 = vadd.f32 %v626, %v1312
    %v1320 = vadd.f32 %v627, %v1314
    %v1321 = vadd.f32 %v628, %v1316
    %v1322 = vxor.u32 %v1318, 2147483648
    %v1323 = vxor.u32 %v1320, 2147483648
    %v1324 = vmul.f32 %v1322, 1.442695
    %v1325 = vpow.pop %v1324
    %v1326 = vmul.f32 %v1323, 1.442695
    %v1327 = vpow.pop %v1326
    %v1328 = vadd.f32 %v1325, 1.0
    %v1329 = vadd.f32 %v1327, 1.0
    %v1330 = vrcp.pop %v1328
    %v1331 = vmul.f32 1.0, %v1330
    %v1332 = vrcp.pop %v1329
    %v1333 = vmul.f32 1.0, %v1332
    %v1334 = vtanh.pop %v1319
    %v1335 = vtanh.pop %v1321
    %v1336 = vxor.u32 %v1319, 2147483648
    %v1337 = vxor.u32 %v1321, 2147483648
    %v1338 = vmul.f32 %v1336, 1.442695
    %v1339 = vpow.pop %v1338
    %v1340 = vmul.f32 %v1337, 1.442695
    %v1341 = vpow.pop %v1340
    %v1342 = vadd.f32 %v1339, 1.0
    %v1343 = vadd.f32 %v1341, 1.0
    %v1344 = vrcp.pop %v1342
    %v1345 = vmul.f32 1.0, %v1344
    %v1346 = vrcp.pop %v1343
    %v1347 = vmul.f32 1.0, %v1346
    %v1348 = vmul.f32 %v1331, %v1260
    %v1349 = vmul.f32 %v1333, %v1261
    %v1350 = vmul.f32 %v1331, %v1334
    %v1351 = vmul.f32 %v1333, %v1335
    %1354 = vrot.lane.b32.xlu0 %v1350, 64
    %v1355 = vpop.permute.xlu0 %1354
    %1356 = vrot.lane.b32.xlu0 %v1351, 64
    %v1357 = vpop.permute.xlu0 %1356
    %v1360 = vadd.f32 %v1348, %v1355
    %v1361 = vadd.f32 %v1349, %v1357
    %v1362 = vtanh.pop %v1360
    %v1363 = vtanh.pop %v1361
    %v1364 = vmul.f32 %v1345, %v1362
    %v1365 = vmul.f32 %v1347, %v1363
    %v1366 = vmax.f32 %v1266, %v1364
    %v1367 = vmax.f32 %v1267, %v1365
    %v1368 = vpack.c.bf16 %v1365, %v1364
    %1370 = vrot.lane.b32.xlu0 %v1368, 64
    %v1371 = vpop.permute.xlu0 %1370
    %v1373 = vsel %vm673, %v1371, 0
    %1375 = vmatprep.subr.bf16.mxu0 %v658
    %1376 = vmatpush1.bf16.msra.mxu0 %v657
    %1377 = vmatprep.subr.bf16.mxu0 %v660
    %1378 = vmatpush1.bf16.msra.mxu0 %v659
    %1379 = vmatprep.subr.bf16.mxu0 %v662
    %1380 = vmatpush1.bf16.msra.mxu0 %v661
    %1381 = vmatprep.subr.bf16.mxu0 %v664
    %1382 = vmatpush1.bf16.msra.mxu0 %v663
    %1383 = vmatprep.subr.bf16.mxu0 0
    %1384 = vmatpush1.bf16.msra.mxu0 0
    %1385 = vmatprep.subr.bf16.mxu0 0
    %1386 = vmatpush1.bf16.msra.mxu0 0
    %1387 = vmatprep.subr.bf16.mxu0 0
    %1388 = vmatpush1.bf16.msra.mxu0 0
    %1389 = vmatprep.subr.bf16.mxu0 0
    %1390 = vmatpush1.bf16.msra.mxu0 0
    %1391 = vmatprep.subr.bf16.mxu0 0
    %1392 = vmatpush1.bf16.msra.mxu0 0
    %1393 = vmatprep.subr.bf16.mxu0 0
    %1394 = vmatpush1.bf16.msra.mxu0 0
    %1395 = vmatprep.subr.bf16.mxu0 0
    %1396 = vmatpush1.bf16.msra.mxu0 0
    %1397 = vmatprep.subr.bf16.mxu0 0
    %1398 = vmatpush1.bf16.msra.mxu0 0
    %1399 = vmatprep.subr.bf16.mxu0 0
    %1400 = vmatpush1.bf16.msra.mxu0 0
    %1401 = vmatprep.subr.bf16.mxu0 0
    %1402 = vmatpush1.bf16.msra.mxu0 0
    %1403 = vmatprep.subr.bf16.mxu0 0
    %1404 = vmatpush1.bf16.msra.mxu0 0
    %1405 = vmatprep.subr.bf16.mxu0 0
    %1406 = vmatpush1.bf16.msra.mxu0 0
    %1407 = vmatprep.mubr.bf16.mxu0 0
    %1408 = vmatmul.mubr.bf16.gmra.mrb[0].mxu0 %v1373
    %v1409 = vpop.f32.mrb[0].mxu0
    %v1410 = vadd.f32 0.0, %v1409
    %v1411 = vpop.f32.mrb[0].mxu0
    %v1412 = vadd.f32 0.0, %v1411
    %v1413 = vpop.f32.mrb[0].mxu0
    %v1414 = vadd.f32 0.0, %v1413
    %v1415 = vpop.f32.mrb[0].mxu0
    %v1416 = vadd.f32 0.0, %v1415
    %1417 = vdwg.mxu0
    %v1418 = vadd.f32 %v629, %v1410
    %v1419 = vadd.f32 %v630, %v1412
    %v1420 = vadd.f32 %v631, %v1414
    %v1421 = vadd.f32 %v632, %v1416
    %v1422 = vxor.u32 %v1418, 2147483648
    %v1423 = vxor.u32 %v1420, 2147483648
    %v1424 = vmul.f32 %v1422, 1.442695
    %v1425 = vpow.pop %v1424
    %v1426 = vmul.f32 %v1423, 1.442695
    %v1427 = vpow.pop %v1426
    %v1428 = vadd.f32 %v1425, 1.0
    %v1429 = vadd.f32 %v1427, 1.0
    %v1430 = vrcp.pop %v1428
    %v1431 = vmul.f32 1.0, %v1430
    %v1432 = vrcp.pop %v1429
    %v1433 = vmul.f32 1.0, %v1432
    %v1434 = vtanh.pop %v1419
    %v1435 = vtanh.pop %v1421
    %v1436 = vxor.u32 %v1419, 2147483648
    %v1437 = vxor.u32 %v1421, 2147483648
    %v1438 = vmul.f32 %v1436, 1.442695
    %v1439 = vpow.pop %v1438
    %v1440 = vmul.f32 %v1437, 1.442695
    %v1441 = vpow.pop %v1440
    %v1442 = vadd.f32 %v1439, 1.0
    %v1443 = vadd.f32 %v1441, 1.0
    %v1444 = vrcp.pop %v1442
    %v1445 = vmul.f32 1.0, %v1444
    %v1446 = vrcp.pop %v1443
    %v1447 = vmul.f32 1.0, %v1446
    %v1448 = vmul.f32 %v1431, %v1360
    %v1449 = vmul.f32 %v1433, %v1361
    %v1450 = vmul.f32 %v1431, %v1434
    %v1451 = vmul.f32 %v1433, %v1435
    %1454 = vrot.lane.b32.xlu0 %v1450, 64
    %v1455 = vpop.permute.xlu0 %1454
    %1456 = vrot.lane.b32.xlu0 %v1451, 64
    %v1457 = vpop.permute.xlu0 %1456
    %v1460 = vadd.f32 %v1448, %v1455
    %v1461 = vadd.f32 %v1449, %v1457
    %v1462 = vtanh.pop %v1460
    %v1463 = vtanh.pop %v1461
    %v1464 = vmul.f32 %v1445, %v1462
    %v1465 = vmul.f32 %v1447, %v1463
    %v1466 = vmax.f32 %v1366, %v1464
    %v1467 = vmax.f32 %v1367, %v1465
    %v1468 = vld [vmem:[%s7] sm:$0xff]
    %v1469 = vld [vmem:[%s7 + $0x8] sm:$0xff]
    %v1470 = vld [vmem:[%s8] sm:$0xff]
    %v1471 = vld [vmem:[%s8 + $0x8] sm:$0xff]
    %v1472 = vld [vmem:[%s8 + $0x10] sm:$0xff]
    %v1473 = vld [vmem:[%s8 + $0x18] sm:$0xff]
    %v1474 = vld [vmem:[%s8 + $0x20] sm:$0xff]
    %v1475 = vld [vmem:[%s8 + $0x28] sm:$0xff]
    %v1476 = vld [vmem:[%s8 + $0x30] sm:$0xff]
    %v1477 = vld [vmem:[%s8 + $0x38] sm:$0xff]
    %v1478 = vld [vmem:[%s9] sm:$0x3]
    %v1480 = vlaneseq
    %v1481 = vshrl.u32 %v1480, 7
    %v1482 = vsub.s32 0, %v1481
    %v1483 = vrot.slane %v1478, %v1482
    %v1484 = vlaneseq
    %v1485 = vshrl.u32 %v1484, 7
    %v1486 = vsub.s32 1, %v1485
    %v1487 = vrot.slane %v1478, %v1486
    %v1492 = vunpack.c.l.b16 %v80
    %v1493 = vunpack.c.l.b16 %v81
    %v1494 = vpack.c.b16 %v1493, %v1492
    %v1497 = vunpack.c.l.b16 %v1468
    %v1498 = vunpack.c.h.b16 %v1468
    %v1499 = vunpack.c.l.b16 %v1469
    %v1500 = vunpack.c.h.b16 %v1469
    %v1501 = vpack.c.b16 %v1499, %v1497
    %v1502 = vpack.c.b16 %v1500, %v1498
    %v1506 = vsel %vm142, %v1494, 0
    %1508 = vmatprep.subr.bf16.mxu0 %v1502
    %1509 = vmatpush1.bf16.msra.mxu0 %v1501
    %1510 = vmatprep.subr.bf16.mxu0 0
    %1511 = vmatpush1.bf16.msra.mxu0 0
    %1512 = vmatprep.subr.bf16.mxu0 0
    %1513 = vmatpush1.bf16.msra.mxu0 0
    %1514 = vmatprep.subr.bf16.mxu0 0
    %1515 = vmatpush1.bf16.msra.mxu0 0
    %1516 = vmatprep.subr.bf16.mxu0 0
    %1517 = vmatpush1.bf16.msra.mxu0 0
    %1518 = vmatprep.subr.bf16.mxu0 0
    %1519 = vmatpush1.bf16.msra.mxu0 0
    %1520 = vmatprep.subr.bf16.mxu0 0
    %1521 = vmatpush1.bf16.msra.mxu0 0
    %1522 = vmatprep.subr.bf16.mxu0 0
    %1523 = vmatpush1.bf16.msra.mxu0 0
    %1524 = vmatprep.subr.bf16.mxu0 0
    %1525 = vmatpush1.bf16.msra.mxu0 0
    %1526 = vmatprep.subr.bf16.mxu0 0
    %1527 = vmatpush1.bf16.msra.mxu0 0
    %1528 = vmatprep.subr.bf16.mxu0 0
    %1529 = vmatpush1.bf16.msra.mxu0 0
    %1530 = vmatprep.subr.bf16.mxu0 0
    %1531 = vmatpush1.bf16.msra.mxu0 0
    %1532 = vmatprep.subr.bf16.mxu0 0
    %1533 = vmatpush1.bf16.msra.mxu0 0
    %1534 = vmatprep.subr.bf16.mxu0 0
    %1535 = vmatpush1.bf16.msra.mxu0 0
    %1536 = vmatprep.subr.bf16.mxu0 0
    %1537 = vmatpush1.bf16.msra.mxu0 0
    %1538 = vmatprep.subr.bf16.mxu0 0
    %1539 = vmatpush1.bf16.msra.mxu0 0
    %1540 = vmatprep.mubr.bf16.mxu0 0
    %1541 = vmatmul.mubr.bf16.gmra.mrb[0].mxu0 %v1506
    %v1542 = vpop.f32.mrb[0].mxu0
    %v1543 = vadd.f32 %v1483, %v1542
    %v1544 = vpop.f32.mrb[0].mxu0
    %v1545 = vadd.f32 %v1487, %v1544
    %v1546 = vpop.f32.mrb[0].mxu0
    %v1547 = vadd.f32 %v1483, %v1546
    %v1548 = vpop.f32.mrb[0].mxu0
    %v1549 = vadd.f32 %v1487, %v1548
    %1550 = vdwg.mxu0
    %v1555 = vrot.slane %v1547, 7
    %v1556 = vsel %vm295, %v1555, %v1543
    %v1557 = vrot.slane %v1549, 7
    %v1558 = vsel %vm295, %v1557, %v1545
    %v1561 = vrot.slane %v1543, 7
    %v1562 = vrot.slane %v1547, 6
    %v1563 = vsel %vm295, %v1562, %v1561
    %v1564 = vrot.slane %v1545, 7
    %v1565 = vrot.slane %v1549, 6
    %v1566 = vsel %vm295, %v1565, %v1564
    %v1569 = vsel %vm272, %v1556, %v1563
    %v1570 = vsel %vm273, %v1558, %v1566
    %v1571 = vrot.slane %v1543, 1
    %v1572 = vsel %vm295, %v1547, %v1571
    %v1573 = vrot.slane %v1545, 1
    %v1574 = vsel %vm295, %v1549, %v1573
    %v1577 = vrot.slane %v1543, 6
    %v1578 = vrot.slane %v1547, 5
    %v1579 = vsel %vm295, %v1578, %v1577
    %v1580 = vrot.slane %v1545, 6
    %v1581 = vrot.slane %v1549, 5
    %v1582 = vsel %vm295, %v1581, %v1580
    %v1585 = vsel %vm272, %v1572, %v1579
    %v1586 = vsel %vm273, %v1574, %v1582
    %v1587 = vrot.slane %v1543, 2
    %v1588 = vrot.slane %v1547, 1
    %v1589 = vsel %vm295, %v1588, %v1587
    %v1590 = vrot.slane %v1545, 2
    %v1591 = vrot.slane %v1549, 1
    %v1592 = vsel %vm295, %v1591, %v1590
    %v1595 = vrot.slane %v1543, 5
    %v1596 = vrot.slane %v1547, 4
    %v1597 = vsel %vm295, %v1596, %v1595
    %v1598 = vrot.slane %v1545, 5
    %v1599 = vrot.slane %v1549, 4
    %v1600 = vsel %vm295, %v1599, %v1598
    %v1603 = vsel %vm272, %v1589, %v1597
    %v1604 = vsel %vm273, %v1592, %v1600
    %v1605 = vrot.slane %v1543, 3
    %v1606 = vrot.slane %v1547, 2
    %v1607 = vsel %vm295, %v1606, %v1605
    %v1608 = vrot.slane %v1545, 3
    %v1609 = vrot.slane %v1549, 2
    %v1610 = vsel %vm295, %v1609, %v1608
    %v1613 = vrot.slane %v1543, 4
    %v1614 = vrot.slane %v1547, 3
    %v1615 = vsel %vm295, %v1614, %v1613
    %v1616 = vrot.slane %v1545, 4
    %v1617 = vrot.slane %v1549, 3
    %v1618 = vsel %vm295, %v1617, %v1616
    %v1621 = vsel %vm272, %v1607, %v1615
    %v1622 = vsel %vm273, %v1610, %v1618
    %v1623 = vsel %vm272, %v1615, %v1607
    %v1624 = vsel %vm273, %v1618, %v1610
    %v1625 = vsel %vm272, %v1597, %v1589
    %v1626 = vsel %vm273, %v1600, %v1592
    %v1627 = vsel %vm272, %v1579, %v1572
    %v1628 = vsel %vm273, %v1582, %v1574
    %v1629 = vsel %vm272, %v1563, %v1556
    %v1630 = vsel %vm273, %v1566, %v1558
    %v1639 = vunpack.c.l.b16 %v1470
    %v1640 = vunpack.c.h.b16 %v1470
    %v1641 = vunpack.c.l.b16 %v1471
    %v1642 = vunpack.c.h.b16 %v1471
    %v1643 = vunpack.c.l.b16 %v1472
    %v1644 = vunpack.c.h.b16 %v1472
    %v1645 = vunpack.c.l.b16 %v1473
    %v1646 = vunpack.c.h.b16 %v1473
    %v1647 = vunpack.c.l.b16 %v1474
    %v1648 = vunpack.c.h.b16 %v1474
    %v1649 = vunpack.c.l.b16 %v1475
    %v1650 = vunpack.c.h.b16 %v1475
    %v1651 = vunpack.c.l.b16 %v1476
    %v1652 = vunpack.c.h.b16 %v1476
    %v1653 = vunpack.c.l.b16 %v1477
    %v1654 = vunpack.c.h.b16 %v1477
    %v1655 = vpack.c.b16 %v1641, %v1639
    %v1656 = vpack.c.b16 %v1642, %v1640
    %v1657 = vpack.c.b16 %v1645, %v1643
    %v1658 = vpack.c.b16 %v1646, %v1644
    %v1659 = vpack.c.b16 %v1649, %v1647
    %v1660 = vpack.c.b16 %v1650, %v1648
    %v1661 = vpack.c.b16 %v1653, %v1651
    %v1662 = vpack.c.b16 %v1654, %v1652
    %1671 = vmatprep.subr.bf16.mxu0 %v1656
    %1672 = vmatpush1.bf16.msra.mxu0 %v1655
    %1673 = vmatprep.subr.bf16.mxu0 %v1658
    %1674 = vmatpush1.bf16.msra.mxu0 %v1657
    %1675 = vmatprep.subr.bf16.mxu0 %v1660
    %1676 = vmatpush1.bf16.msra.mxu0 %v1659
    %1677 = vmatprep.subr.bf16.mxu0 %v1662
    %1678 = vmatpush1.bf16.msra.mxu0 %v1661
    %1679 = vmatprep.subr.bf16.mxu0 0
    %1680 = vmatpush1.bf16.msra.mxu0 0
    %1681 = vmatprep.subr.bf16.mxu0 0
    %1682 = vmatpush1.bf16.msra.mxu0 0
    %1683 = vmatprep.subr.bf16.mxu0 0
    %1684 = vmatpush1.bf16.msra.mxu0 0
    %1685 = vmatprep.subr.bf16.mxu0 0
    %1686 = vmatpush1.bf16.msra.mxu0 0
    %1687 = vmatprep.subr.bf16.mxu0 0
    %1688 = vmatpush1.bf16.msra.mxu0 0
    %1689 = vmatprep.subr.bf16.mxu0 0
    %1690 = vmatpush1.bf16.msra.mxu0 0
    %1691 = vmatprep.subr.bf16.mxu0 0
    %1692 = vmatpush1.bf16.msra.mxu0 0
    %1693 = vmatprep.subr.bf16.mxu0 0
    %1694 = vmatpush1.bf16.msra.mxu0 0
    %1695 = vmatprep.subr.bf16.mxu0 0
    %1696 = vmatpush1.bf16.msra.mxu0 0
    %1697 = vmatprep.subr.bf16.mxu0 0
    %1698 = vmatpush1.bf16.msra.mxu0 0
    %1699 = vmatprep.subr.bf16.mxu0 0
    %1700 = vmatpush1.bf16.msra.mxu0 0
    %1701 = vmatprep.subr.bf16.mxu0 0
    %1702 = vmatpush1.bf16.msra.mxu0 0
    %1703 = vmatprep.mubr.bf16.mxu0 0
    %1704 = vmatmul.mubr.bf16.gmra.mrb[0].mxu0 %v675
    %v1705 = vpop.f32.mrb[0].mxu0
    %v1706 = vadd.f32 0.0, %v1705
    %v1707 = vpop.f32.mrb[0].mxu0
    %v1708 = vadd.f32 0.0, %v1707
    %v1709 = vpop.f32.mrb[0].mxu0
    %v1710 = vpop.f32.mrb[0].mxu0
    %1711 = vdwg.mxu0
    %v1712 = vadd.f32 %v1569, %v1706
    %v1713 = vadd.f32 %v1570, %v1708
    %v1714 = vxor.u32 %v1712, 2147483648
    %v1715 = vmul.f32 %v1714, 1.442695
    %v1716 = vpow.pop %v1715
    %v1717 = vadd.f32 %v1716, 1.0
    %v1718 = vrcp.pop %v1717
    %v1719 = vmul.f32 1.0, %v1718
    %v1720 = vtanh.pop %v1713
    %v1721 = vxor.u32 %v1713, 2147483648
    %v1722 = vmul.f32 %v1721, 1.442695
    %v1723 = vpow.pop %v1722
    %v1724 = vadd.f32 %v1723, 1.0
    %v1725 = vrcp.pop %v1724
    %v1726 = vmul.f32 1.0, %v1725
    %v1727 = vmul.f32 %v1719, 0.0
    %v1728 = vmul.f32 %v1719, %v1720
    %1730 = vrot.lane.b32.xlu0 %v1728, 64
    %v1731 = vpop.permute.xlu0 %1730
    %v1733 = vadd.f32 %v1727, %v1731
    %v1734 = vtanh.pop %v1733
    %v1735 = vmul.f32 %v1726, %v1734
    %v1736 = vpack.c.bf16 %v1735, %v1735
    %1738 = vrot.lane.b32.xlu0 %v1736, 64
    %v1739 = vpop.permute.xlu0 %1738
    %v1741 = vsel %vm673, %v1739, 0
    %1743 = vmatprep.subr.bf16.mxu0 %v1656
    %1744 = vmatpush1.bf16.msra.mxu0 %v1655
    %1745 = vmatprep.subr.bf16.mxu0 %v1658
    %1746 = vmatpush1.bf16.msra.mxu0 %v1657
    %1747 = vmatprep.subr.bf16.mxu0 %v1660
    %1748 = vmatpush1.bf16.msra.mxu0 %v1659
    %1749 = vmatprep.subr.bf16.mxu0 %v1662
    %1750 = vmatpush1.bf16.msra.mxu0 %v1661
    %1751 = vmatprep.subr.bf16.mxu0 0
    %1752 = vmatpush1.bf16.msra.mxu0 0
    %1753 = vmatprep.subr.bf16.mxu0 0
    %1754 = vmatpush1.bf16.msra.mxu0 0
    %1755 = vmatprep.subr.bf16.mxu0 0
    %1756 = vmatpush1.bf16.msra.mxu0 0
    %1757 = vmatprep.subr.bf16.mxu0 0
    %1758 = vmatpush1.bf16.msra.mxu0 0
    %1759 = vmatprep.subr.bf16.mxu0 0
    %1760 = vmatpush1.bf16.msra.mxu0 0
    %1761 = vmatprep.subr.bf16.mxu0 0
    %1762 = vmatpush1.bf16.msra.mxu0 0
    %1763 = vmatprep.subr.bf16.mxu0 0
    %1764 = vmatpush1.bf16.msra.mxu0 0
    %1765 = vmatprep.subr.bf16.mxu0 0
    %1766 = vmatpush1.bf16.msra.mxu0 0
    %1767 = vmatprep.subr.bf16.mxu0 0
    %1768 = vmatpush1.bf16.msra.mxu0 0
    %1769 = vmatprep.subr.bf16.mxu0 0
    %1770 = vmatpush1.bf16.msra.mxu0 0
    %1771 = vmatprep.subr.bf16.mxu0 0
    %1772 = vmatpush1.bf16.msra.mxu0 0
    %1773 = vmatprep.subr.bf16.mxu0 0
    %1774 = vmatpush1.bf16.msra.mxu0 0
    %1775 = vmatprep.mubr.bf16.mxu0 0
    %1776 = vmatmul.mubr.bf16.gmra.mrb[0].mxu0 %v1741
    %v1777 = vpop.f32.mrb[0].mxu0
    %v1778 = vadd.f32 0.0, %v1777
    %v1779 = vpop.f32.mrb[0].mxu0
    %v1780 = vadd.f32 0.0, %v1779
    %v1781 = vpop.f32.mrb[0].mxu0
    %v1782 = vpop.f32.mrb[0].mxu0
    %1783 = vdwg.mxu0
    %v1784 = vadd.f32 %v1585, %v1778
    %v1785 = vadd.f32 %v1586, %v1780
    %v1786 = vxor.u32 %v1784, 2147483648
    %v1787 = vmul.f32 %v1786, 1.442695
    %v1788 = vpow.pop %v1787
    %v1789 = vadd.f32 %v1788, 1.0
    %v1790 = vrcp.pop %v1789
    %v1791 = vmul.f32 1.0, %v1790
    %v1792 = vtanh.pop %v1785
    %v1793 = vxor.u32 %v1785, 2147483648
    %v1794 = vmul.f32 %v1793, 1.442695
    %v1795 = vpow.pop %v1794
    %v1796 = vadd.f32 %v1795, 1.0
    %v1797 = vrcp.pop %v1796
    %v1798 = vmul.f32 1.0, %v1797
    %v1799 = vmul.f32 %v1791, %v1733
    %v1800 = vmul.f32 %v1791, %v1792
    %1802 = vrot.lane.b32.xlu0 %v1800, 64
    %v1803 = vpop.permute.xlu0 %1802
    %v1805 = vadd.f32 %v1799, %v1803
    %v1806 = vtanh.pop %v1805
    %v1807 = vmul.f32 %v1798, %v1806
    %v1808 = vmax.f32 %v1735, %v1807
    %v1809 = vpack.c.bf16 %v1807, %v1807
    %1811 = vrot.lane.b32.xlu0 %v1809, 64
    %v1812 = vpop.permute.xlu0 %1811
    %v1814 = vsel %vm673, %v1812, 0
    %1816 = vmatprep.subr.bf16.mxu0 %v1656
    %1817 = vmatpush1.bf16.msra.mxu0 %v1655
    %1818 = vmatprep.subr.bf16.mxu0 %v1658
    %1819 = vmatpush1.bf16.msra.mxu0 %v1657
    %1820 = vmatprep.subr.bf16.mxu0 %v1660
    %1821 = vmatpush1.bf16.msra.mxu0 %v1659
    %1822 = vmatprep.subr.bf16.mxu0 %v1662
    %1823 = vmatpush1.bf16.msra.mxu0 %v1661
    %1824 = vmatprep.subr.bf16.mxu0 0
    %1825 = vmatpush1.bf16.msra.mxu0 0
    %1826 = vmatprep.subr.bf16.mxu0 0
    %1827 = vmatpush1.bf16.msra.mxu0 0
    %1828 = vmatprep.subr.bf16.mxu0 0
    %1829 = vmatpush1.bf16.msra.mxu0 0
    %1830 = vmatprep.subr.bf16.mxu0 0
    %1831 = vmatpush1.bf16.msra.mxu0 0
    %1832 = vmatprep.subr.bf16.mxu0 0
    %1833 = vmatpush1.bf16.msra.mxu0 0
    %1834 = vmatprep.subr.bf16.mxu0 0
    %1835 = vmatpush1.bf16.msra.mxu0 0
    %1836 = vmatprep.subr.bf16.mxu0 0
    %1837 = vmatpush1.bf16.msra.mxu0 0
    %1838 = vmatprep.subr.bf16.mxu0 0
    %1839 = vmatpush1.bf16.msra.mxu0 0
    %1840 = vmatprep.subr.bf16.mxu0 0
    %1841 = vmatpush1.bf16.msra.mxu0 0
    %1842 = vmatprep.subr.bf16.mxu0 0
    %1843 = vmatpush1.bf16.msra.mxu0 0
    %1844 = vmatprep.subr.bf16.mxu0 0
    %1845 = vmatpush1.bf16.msra.mxu0 0
    %1846 = vmatprep.subr.bf16.mxu0 0
    %1847 = vmatpush1.bf16.msra.mxu0 0
    %1848 = vmatprep.mubr.bf16.mxu0 0
    %1849 = vmatmul.mubr.bf16.gmra.mrb[0].mxu0 %v1814
    %v1850 = vpop.f32.mrb[0].mxu0
    %v1851 = vadd.f32 0.0, %v1850
    %v1852 = vpop.f32.mrb[0].mxu0
    %v1853 = vadd.f32 0.0, %v1852
    %v1854 = vpop.f32.mrb[0].mxu0
    %v1855 = vpop.f32.mrb[0].mxu0
    %1856 = vdwg.mxu0
    %v1857 = vadd.f32 %v1603, %v1851
    %v1858 = vadd.f32 %v1604, %v1853
    %v1859 = vxor.u32 %v1857, 2147483648
    %v1860 = vmul.f32 %v1859, 1.442695
    %v1861 = vpow.pop %v1860
    %v1862 = vadd.f32 %v1861, 1.0
    %v1863 = vrcp.pop %v1862
    %v1864 = vmul.f32 1.0, %v1863
    %v1865 = vtanh.pop %v1858
    %v1866 = vxor.u32 %v1858, 2147483648
    %v1867 = vmul.f32 %v1866, 1.442695
    %v1868 = vpow.pop %v1867
    %v1869 = vadd.f32 %v1868, 1.0
    %v1870 = vrcp.pop %v1869
    %v1871 = vmul.f32 1.0, %v1870
    %v1872 = vmul.f32 %v1864, %v1805
    %v1873 = vmul.f32 %v1864, %v1865
    %1875 = vrot.lane.b32.xlu0 %v1873, 64
    %v1876 = vpop.permute.xlu0 %1875
    %v1878 = vadd.f32 %v1872, %v1876
    %v1879 = vtanh.pop %v1878
    %v1880 = vmul.f32 %v1871, %v1879
    %v1881 = vmax.f32 %v1808, %v1880
    %v1882 = vpack.c.bf16 %v1880, %v1880
    %1884 = vrot.lane.b32.xlu0 %v1882, 64
    %v1885 = vpop.permute.xlu0 %1884
    %v1887 = vsel %vm673, %v1885, 0
    %1889 = vmatprep.subr.bf16.mxu0 %v1656
    %1890 = vmatpush1.bf16.msra.mxu0 %v1655
    %1891 = vmatprep.subr.bf16.mxu0 %v1658
    %1892 = vmatpush1.bf16.msra.mxu0 %v1657
    %1893 = vmatprep.subr.bf16.mxu0 %v1660
    %1894 = vmatpush1.bf16.msra.mxu0 %v1659
    %1895 = vmatprep.subr.bf16.mxu0 %v1662
    %1896 = vmatpush1.bf16.msra.mxu0 %v1661
    %1897 = vmatprep.subr.bf16.mxu0 0
    %1898 = vmatpush1.bf16.msra.mxu0 0
    %1899 = vmatprep.subr.bf16.mxu0 0
    %1900 = vmatpush1.bf16.msra.mxu0 0
    %1901 = vmatprep.subr.bf16.mxu0 0
    %1902 = vmatpush1.bf16.msra.mxu0 0
    %1903 = vmatprep.subr.bf16.mxu0 0
    %1904 = vmatpush1.bf16.msra.mxu0 0
    %1905 = vmatprep.subr.bf16.mxu0 0
    %1906 = vmatpush1.bf16.msra.mxu0 0
    %1907 = vmatprep.subr.bf16.mxu0 0
    %1908 = vmatpush1.bf16.msra.mxu0 0
    %1909 = vmatprep.subr.bf16.mxu0 0
    %1910 = vmatpush1.bf16.msra.mxu0 0
    %1911 = vmatprep.subr.bf16.mxu0 0
    %1912 = vmatpush1.bf16.msra.mxu0 0
    %1913 = vmatprep.subr.bf16.mxu0 0
    %1914 = vmatpush1.bf16.msra.mxu0 0
    %1915 = vmatprep.subr.bf16.mxu0 0
    %1916 = vmatpush1.bf16.msra.mxu0 0
    %1917 = vmatprep.subr.bf16.mxu0 0
    %1918 = vmatpush1.bf16.msra.mxu0 0
    %1919 = vmatprep.subr.bf16.mxu0 0
    %1920 = vmatpush1.bf16.msra.mxu0 0
    %1921 = vmatprep.mubr.bf16.mxu0 0
    %1922 = vmatmul.mubr.bf16.gmra.mrb[0].mxu0 %v1887
    %v1923 = vpop.f32.mrb[0].mxu0
    %v1924 = vadd.f32 0.0, %v1923
    %v1925 = vpop.f32.mrb[0].mxu0
    %v1926 = vadd.f32 0.0, %v1925
    %v1927 = vpop.f32.mrb[0].mxu0
    %v1928 = vpop.f32.mrb[0].mxu0
    %1929 = vdwg.mxu0
    %v1930 = vadd.f32 %v1621, %v1924
    %v1931 = vadd.f32 %v1622, %v1926
    %v1932 = vxor.u32 %v1930, 2147483648
    %v1933 = vmul.f32 %v1932, 1.442695
    %v1934 = vpow.pop %v1933
    %v1935 = vadd.f32 %v1934, 1.0
    %v1936 = vrcp.pop %v1935
    %v1937 = vmul.f32 1.0, %v1936
    %v1938 = vtanh.pop %v1931
    %v1939 = vxor.u32 %v1931, 2147483648
    %v1940 = vmul.f32 %v1939, 1.442695
    %v1941 = vpow.pop %v1940
    %v1942 = vadd.f32 %v1941, 1.0
    %v1943 = vrcp.pop %v1942
    %v1944 = vmul.f32 1.0, %v1943
    %v1945 = vmul.f32 %v1937, %v1878
    %v1946 = vmul.f32 %v1937, %v1938
    %1948 = vrot.lane.b32.xlu0 %v1946, 64
    %v1949 = vpop.permute.xlu0 %1948
    %v1951 = vadd.f32 %v1945, %v1949
    %v1952 = vtanh.pop %v1951
    %v1953 = vmul.f32 %v1944, %v1952
    %v1954 = vmax.f32 %v1881, %v1953
    %v1955 = vpack.c.bf16 %v1953, %v1953
    %1957 = vrot.lane.b32.xlu0 %v1955, 64
    %v1958 = vpop.permute.xlu0 %1957
    %v1960 = vsel %vm673, %v1958, 0
    %1962 = vmatprep.subr.bf16.mxu0 %v1656
    %1963 = vmatpush1.bf16.msra.mxu0 %v1655
    %1964 = vmatprep.subr.bf16.mxu0 %v1658
    %1965 = vmatpush1.bf16.msra.mxu0 %v1657
    %1966 = vmatprep.subr.bf16.mxu0 %v1660
    %1967 = vmatpush1.bf16.msra.mxu0 %v1659
    %1968 = vmatprep.subr.bf16.mxu0 %v1662
    %1969 = vmatpush1.bf16.msra.mxu0 %v1661
    %1970 = vmatprep.subr.bf16.mxu0 0
    %1971 = vmatpush1.bf16.msra.mxu0 0
    %1972 = vmatprep.subr.bf16.mxu0 0
    %1973 = vmatpush1.bf16.msra.mxu0 0
    %1974 = vmatprep.subr.bf16.mxu0 0
    %1975 = vmatpush1.bf16.msra.mxu0 0
    %1976 = vmatprep.subr.bf16.mxu0 0
    %1977 = vmatpush1.bf16.msra.mxu0 0
    %1978 = vmatprep.subr.bf16.mxu0 0
    %1979 = vmatpush1.bf16.msra.mxu0 0
    %1980 = vmatprep.subr.bf16.mxu0 0
    %1981 = vmatpush1.bf16.msra.mxu0 0
    %1982 = vmatprep.subr.bf16.mxu0 0
    %1983 = vmatpush1.bf16.msra.mxu0 0
    %1984 = vmatprep.subr.bf16.mxu0 0
    %1985 = vmatpush1.bf16.msra.mxu0 0
    %1986 = vmatprep.subr.bf16.mxu0 0
    %1987 = vmatpush1.bf16.msra.mxu0 0
    %1988 = vmatprep.subr.bf16.mxu0 0
    %1989 = vmatpush1.bf16.msra.mxu0 0
    %1990 = vmatprep.subr.bf16.mxu0 0
    %1991 = vmatpush1.bf16.msra.mxu0 0
    %1992 = vmatprep.subr.bf16.mxu0 0
    %1993 = vmatpush1.bf16.msra.mxu0 0
    %1994 = vmatprep.mubr.bf16.mxu0 0
    %1995 = vmatmul.mubr.bf16.gmra.mrb[0].mxu0 %v1960
    %v1996 = vpop.f32.mrb[0].mxu0
    %v1997 = vadd.f32 0.0, %v1996
    %v1998 = vpop.f32.mrb[0].mxu0
    %v1999 = vadd.f32 0.0, %v1998
    %v2000 = vpop.f32.mrb[0].mxu0
    %v2001 = vpop.f32.mrb[0].mxu0
    %2002 = vdwg.mxu0
    %v2003 = vadd.f32 %v1623, %v1997
    %v2004 = vadd.f32 %v1624, %v1999
    %v2005 = vxor.u32 %v2003, 2147483648
    %v2006 = vmul.f32 %v2005, 1.442695
    %v2007 = vpow.pop %v2006
    %v2008 = vadd.f32 %v2007, 1.0
    %v2009 = vrcp.pop %v2008
    %v2010 = vmul.f32 1.0, %v2009
    %v2011 = vtanh.pop %v2004
    %v2012 = vxor.u32 %v2004, 2147483648
    %v2013 = vmul.f32 %v2012, 1.442695
    %v2014 = vpow.pop %v2013
    %v2015 = vadd.f32 %v2014, 1.0
    %v2016 = vrcp.pop %v2015
    %v2017 = vmul.f32 1.0, %v2016
    %v2018 = vmul.f32 %v2010, %v1951
    %v2019 = vmul.f32 %v2010, %v2011
    %2021 = vrot.lane.b32.xlu0 %v2019, 64
    %v2022 = vpop.permute.xlu0 %2021
    %v2024 = vadd.f32 %v2018, %v2022
    %v2025 = vtanh.pop %v2024
    %v2026 = vmul.f32 %v2017, %v2025
    %v2027 = vmax.f32 %v1954, %v2026
    %v2028 = vpack.c.bf16 %v2026, %v2026
    %2030 = vrot.lane.b32.xlu0 %v2028, 64
    %v2031 = vpop.permute.xlu0 %2030
    %v2033 = vsel %vm673, %v2031, 0
    %2035 = vmatprep.subr.bf16.mxu0 %v1656
    %2036 = vmatpush1.bf16.msra.mxu0 %v1655
    %2037 = vmatprep.subr.bf16.mxu0 %v1658
    %2038 = vmatpush1.bf16.msra.mxu0 %v1657
    %2039 = vmatprep.subr.bf16.mxu0 %v1660
    %2040 = vmatpush1.bf16.msra.mxu0 %v1659
    %2041 = vmatprep.subr.bf16.mxu0 %v1662
    %2042 = vmatpush1.bf16.msra.mxu0 %v1661
    %2043 = vmatprep.subr.bf16.mxu0 0
    %2044 = vmatpush1.bf16.msra.mxu0 0
    %2045 = vmatprep.subr.bf16.mxu0 0
    %2046 = vmatpush1.bf16.msra.mxu0 0
    %2047 = vmatprep.subr.bf16.mxu0 0
    %2048 = vmatpush1.bf16.msra.mxu0 0
    %2049 = vmatprep.subr.bf16.mxu0 0
    %2050 = vmatpush1.bf16.msra.mxu0 0
    %2051 = vmatprep.subr.bf16.mxu0 0
    %2052 = vmatpush1.bf16.msra.mxu0 0
    %2053 = vmatprep.subr.bf16.mxu0 0
    %2054 = vmatpush1.bf16.msra.mxu0 0
    %2055 = vmatprep.subr.bf16.mxu0 0
    %2056 = vmatpush1.bf16.msra.mxu0 0
    %2057 = vmatprep.subr.bf16.mxu0 0
    %2058 = vmatpush1.bf16.msra.mxu0 0
    %2059 = vmatprep.subr.bf16.mxu0 0
    %2060 = vmatpush1.bf16.msra.mxu0 0
    %2061 = vmatprep.subr.bf16.mxu0 0
    %2062 = vmatpush1.bf16.msra.mxu0 0
    %2063 = vmatprep.subr.bf16.mxu0 0
    %2064 = vmatpush1.bf16.msra.mxu0 0
    %2065 = vmatprep.subr.bf16.mxu0 0
    %2066 = vmatpush1.bf16.msra.mxu0 0
    %2067 = vmatprep.mubr.bf16.mxu0 0
    %2068 = vmatmul.mubr.bf16.gmra.mrb[0].mxu0 %v2033
    %v2069 = vpop.f32.mrb[0].mxu0
    %v2070 = vadd.f32 0.0, %v2069
    %v2071 = vpop.f32.mrb[0].mxu0
    %v2072 = vadd.f32 0.0, %v2071
    %v2073 = vpop.f32.mrb[0].mxu0
    %v2074 = vpop.f32.mrb[0].mxu0
    %2075 = vdwg.mxu0
    %v2076 = vadd.f32 %v1625, %v2070
    %v2077 = vadd.f32 %v1626, %v2072
    %v2078 = vxor.u32 %v2076, 2147483648
    %v2079 = vmul.f32 %v2078, 1.442695
    %v2080 = vpow.pop %v2079
    %v2081 = vadd.f32 %v2080, 1.0
    %v2082 = vrcp.pop %v2081
    %v2083 = vmul.f32 1.0, %v2082
    %v2084 = vtanh.pop %v2077
    %v2085 = vxor.u32 %v2077, 2147483648
    %v2086 = vmul.f32 %v2085, 1.442695
    %v2087 = vpow.pop %v2086
    %v2088 = vadd.f32 %v2087, 1.0
    %v2089 = vrcp.pop %v2088
    %v2090 = vmul.f32 1.0, %v2089
    %v2091 = vmul.f32 %v2083, %v2024
    %v2092 = vmul.f32 %v2083, %v2084
    %2094 = vrot.lane.b32.xlu0 %v2092, 64
    %v2095 = vpop.permute.xlu0 %2094
    %v2097 = vadd.f32 %v2091, %v2095
    %v2098 = vtanh.pop %v2097
    %v2099 = vmul.f32 %v2090, %v2098
    %v2100 = vmax.f32 %v2027, %v2099
    %v2101 = vpack.c.bf16 %v2099, %v2099
    %2103 = vrot.lane.b32.xlu0 %v2101, 64
    %v2104 = vpop.permute.xlu0 %2103
    %v2106 = vsel %vm673, %v2104, 0
    %2108 = vmatprep.subr.bf16.mxu0 %v1656
    %2109 = vmatpush1.bf16.msra.mxu0 %v1655
    %2110 = vmatprep.subr.bf16.mxu0 %v1658
    %2111 = vmatpush1.bf16.msra.mxu0 %v1657
    %2112 = vmatprep.subr.bf16.mxu0 %v1660
    %2113 = vmatpush1.bf16.msra.mxu0 %v1659
    %2114 = vmatprep.subr.bf16.mxu0 %v1662
    %2115 = vmatpush1.bf16.msra.mxu0 %v1661
    %2116 = vmatprep.subr.bf16.mxu0 0
    %2117 = vmatpush1.bf16.msra.mxu0 0
    %2118 = vmatprep.subr.bf16.mxu0 0
    %2119 = vmatpush1.bf16.msra.mxu0 0
    %2120 = vmatprep.subr.bf16.mxu0 0
    %2121 = vmatpush1.bf16.msra.mxu0 0
    %2122 = vmatprep.subr.bf16.mxu0 0
    %2123 = vmatpush1.bf16.msra.mxu0 0
    %2124 = vmatprep.subr.bf16.mxu0 0
    %2125 = vmatpush1.bf16.msra.mxu0 0
    %2126 = vmatprep.subr.bf16.mxu0 0
    %2127 = vmatpush1.bf16.msra.mxu0 0
    %2128 = vmatprep.subr.bf16.mxu0 0
    %2129 = vmatpush1.bf16.msra.mxu0 0
    %2130 = vmatprep.subr.bf16.mxu0 0
    %2131 = vmatpush1.bf16.msra.mxu0 0
    %2132 = vmatprep.subr.bf16.mxu0 0
    %2133 = vmatpush1.bf16.msra.mxu0 0
    %2134 = vmatprep.subr.bf16.mxu0 0
    %2135 = vmatpush1.bf16.msra.mxu0 0
    %2136 = vmatprep.subr.bf16.mxu0 0
    %2137 = vmatpush1.bf16.msra.mxu0 0
    %2138 = vmatprep.subr.bf16.mxu0 0
    %2139 = vmatpush1.bf16.msra.mxu0 0
    %2140 = vmatprep.mubr.bf16.mxu0 0
    %2141 = vmatmul.mubr.bf16.gmra.mrb[0].mxu0 %v2106
    %v2142 = vpop.f32.mrb[0].mxu0
    %v2143 = vadd.f32 0.0, %v2142
    %v2144 = vpop.f32.mrb[0].mxu0
    %v2145 = vadd.f32 0.0, %v2144
    %v2146 = vpop.f32.mrb[0].mxu0
    %v2147 = vpop.f32.mrb[0].mxu0
    %2148 = vdwg.mxu0
    %v2149 = vadd.f32 %v1627, %v2143
    %v2150 = vadd.f32 %v1628, %v2145
    %v2151 = vxor.u32 %v2149, 2147483648
    %v2152 = vmul.f32 %v2151, 1.442695
    %v2153 = vpow.pop %v2152
    %v2154 = vadd.f32 %v2153, 1.0
    %v2155 = vrcp.pop %v2154
    %v2156 = vmul.f32 1.0, %v2155
    %v2157 = vtanh.pop %v2150
    %v2158 = vxor.u32 %v2150, 2147483648
    %v2159 = vmul.f32 %v2158, 1.442695
    %v2160 = vpow.pop %v2159
    %v2161 = vadd.f32 %v2160, 1.0
    %v2162 = vrcp.pop %v2161
    %v2163 = vmul.f32 1.0, %v2162
    %v2164 = vmul.f32 %v2156, %v2097
    %v2165 = vmul.f32 %v2156, %v2157
    %2167 = vrot.lane.b32.xlu0 %v2165, 64
    %v2168 = vpop.permute.xlu0 %2167
    %v2170 = vadd.f32 %v2164, %v2168
    %v2171 = vtanh.pop %v2170
    %v2172 = vmul.f32 %v2163, %v2171
    %v2173 = vmax.f32 %v2100, %v2172
    %v2174 = vpack.c.bf16 %v2172, %v2172
    %2176 = vrot.lane.b32.xlu0 %v2174, 64
    %v2177 = vpop.permute.xlu0 %2176
    %v2179 = vsel %vm673, %v2177, 0
    %2181 = vmatprep.subr.bf16.mxu0 %v1656
    %2182 = vmatpush1.bf16.msra.mxu0 %v1655
    %2183 = vmatprep.subr.bf16.mxu0 %v1658
    %2184 = vmatpush1.bf16.msra.mxu0 %v1657
    %2185 = vmatprep.subr.bf16.mxu0 %v1660
    %2186 = vmatpush1.bf16.msra.mxu0 %v1659
    %2187 = vmatprep.subr.bf16.mxu0 %v1662
    %2188 = vmatpush1.bf16.msra.mxu0 %v1661
    %2189 = vmatprep.subr.bf16.mxu0 0
    %2190 = vmatpush1.bf16.msra.mxu0 0
    %2191 = vmatprep.subr.bf16.mxu0 0
    %2192 = vmatpush1.bf16.msra.mxu0 0
    %2193 = vmatprep.subr.bf16.mxu0 0
    %2194 = vmatpush1.bf16.msra.mxu0 0
    %2195 = vmatprep.subr.bf16.mxu0 0
    %2196 = vmatpush1.bf16.msra.mxu0 0
    %2197 = vmatprep.subr.bf16.mxu0 0
    %2198 = vmatpush1.bf16.msra.mxu0 0
    %2199 = vmatprep.subr.bf16.mxu0 0
    %2200 = vmatpush1.bf16.msra.mxu0 0
    %2201 = vmatprep.subr.bf16.mxu0 0
    %2202 = vmatpush1.bf16.msra.mxu0 0
    %2203 = vmatprep.subr.bf16.mxu0 0
    %2204 = vmatpush1.bf16.msra.mxu0 0
    %2205 = vmatprep.subr.bf16.mxu0 0
    %2206 = vmatpush1.bf16.msra.mxu0 0
    %2207 = vmatprep.subr.bf16.mxu0 0
    %2208 = vmatpush1.bf16.msra.mxu0 0
    %2209 = vmatprep.subr.bf16.mxu0 0
    %2210 = vmatpush1.bf16.msra.mxu0 0
    %2211 = vmatprep.subr.bf16.mxu0 0
    %2212 = vmatpush1.bf16.msra.mxu0 0
    %2213 = vmatprep.mubr.bf16.mxu0 0
    %2214 = vmatmul.mubr.bf16.gmra.mrb[0].mxu0 %v2179
    %v2215 = vpop.f32.mrb[0].mxu0
    %v2216 = vadd.f32 0.0, %v2215
    %v2217 = vpop.f32.mrb[0].mxu0
    %v2218 = vadd.f32 0.0, %v2217
    %v2219 = vpop.f32.mrb[0].mxu0
    %v2220 = vpop.f32.mrb[0].mxu0
    %2221 = vdwg.mxu0
    %v2222 = vadd.f32 %v1629, %v2216
    %v2223 = vadd.f32 %v1630, %v2218
    %v2224 = vxor.u32 %v2222, 2147483648
    %v2225 = vmul.f32 %v2224, 1.442695
    %v2226 = vpow.pop %v2225
    %v2227 = vadd.f32 %v2226, 1.0
    %v2228 = vrcp.pop %v2227
    %v2229 = vmul.f32 1.0, %v2228
    %v2230 = vtanh.pop %v2223
    %v2231 = vxor.u32 %v2223, 2147483648
    %v2232 = vmul.f32 %v2231, 1.442695
    %v2233 = vpow.pop %v2232
    %v2234 = vadd.f32 %v2233, 1.0
    %v2235 = vrcp.pop %v2234
    %v2236 = vmul.f32 1.0, %v2235
    %v2237 = vmul.f32 %v2229, %v2170
    %v2238 = vmul.f32 %v2229, %v2230
    %2240 = vrot.lane.b32.xlu0 %v2238, 64
    %v2241 = vpop.permute.xlu0 %2240
    %v2243 = vadd.f32 %v2237, %v2241
    %v2244 = vtanh.pop %v2243
    %v2245 = vmul.f32 %v2236, %v2244
    %v2246 = vmax.f32 %v2173, %v2245
    %v2248 = vrot.slane %v2246, 6
    %vm2250 = vcmask 1041408
    %v2251 = vsel %vm2250, %v1467, %v2248
    %v2252 = vpack.c.bf16 %v2251, %v1466
    %v2253 = vld [vmem:[%s10] sm:$0xf]
    %v2254 = vld [vmem:[%s10 + $0x4] sm:$0xf]
    %v2255 = vld [vmem:[%s10 + $0x8] sm:$0xf]
    %v2256 = vld [vmem:[%s10 + $0xc] sm:$0xf]
    %v2257 = vld [vmem:[%s10 + $0x10] sm:$0xf]
    %v2258 = vld [vmem:[%s10 + $0x14] sm:$0xf]
    %v2259 = vld [vmem:[%s10 + $0x18] sm:$0xf]
    %v2260 = vld [vmem:[%s10 + $0x1c] sm:$0xf]
    %v2261 = vld [vmem:[%s11] sm:$0x1]
    %v2263 = vlaneseq
    %v2264 = vshrl.u32 %v2263, 7
    %v2265 = vsub.s32 0, %v2264
    %v2266 = vrot.slane %v2261, %v2265
    %2269 = vrot.lane.b32.xlu0 %v2252, 64
    %v2270 = vpop.permute.xlu0 %2269
    %v2279 = vunpack.c.l.b16 %v2253
    %v2280 = vunpack.c.l.b16 %v2254
    %v2281 = vunpack.c.l.b16 %v2255
    %v2282 = vunpack.c.l.b16 %v2256
    %v2283 = vunpack.c.l.b16 %v2257
    %v2284 = vunpack.c.l.b16 %v2258
    %v2285 = vunpack.c.l.b16 %v2259
    %v2286 = vunpack.c.l.b16 %v2260
    %v2287 = vpack.c.b16 %v2280, %v2279
    %v2288 = vpack.c.b16 %v2282, %v2281
    %v2289 = vpack.c.b16 %v2284, %v2283
    %v2290 = vpack.c.b16 %v2286, %v2285
    %v2296 = vsel %vm673, %v2270, 0
    %2298 = vmatprep.subr.bf16.mxu0 0
    %2299 = vmatpush1.bf16.msra.mxu0 %v2287
    %2300 = vmatprep.subr.bf16.mxu0 0
    %2301 = vmatpush1.bf16.msra.mxu0 %v2288
    %2302 = vmatprep.subr.bf16.mxu0 0
    %2303 = vmatpush1.bf16.msra.mxu0 %v2289
    %2304 = vmatprep.subr.bf16.mxu0 0
    %2305 = vmatpush1.bf16.msra.mxu0 %v2290
    %2306 = vmatprep.subr.bf16.mxu0 0
    %2307 = vmatpush1.bf16.msra.mxu0 0
    %2308 = vmatprep.subr.bf16.mxu0 0
    %2309 = vmatpush1.bf16.msra.mxu0 0
    %2310 = vmatprep.subr.bf16.mxu0 0
    %2311 = vmatpush1.bf16.msra.mxu0 0
    %2312 = vmatprep.subr.bf16.mxu0 0
    %2313 = vmatpush1.bf16.msra.mxu0 0
    %2314 = vmatprep.subr.bf16.mxu0 0
    %2315 = vmatpush1.bf16.msra.mxu0 0
    %2316 = vmatprep.subr.bf16.mxu0 0
    %2317 = vmatpush1.bf16.msra.mxu0 0
    %2318 = vmatprep.subr.bf16.mxu0 0
    %2319 = vmatpush1.bf16.msra.mxu0 0
    %2320 = vmatprep.subr.bf16.mxu0 0
    %2321 = vmatpush1.bf16.msra.mxu0 0
    %2322 = vmatprep.subr.bf16.mxu0 0
    %2323 = vmatpush1.bf16.msra.mxu0 0
    %2324 = vmatprep.subr.bf16.mxu0 0
    %2325 = vmatpush1.bf16.msra.mxu0 0
    %2326 = vmatprep.subr.bf16.mxu0 0
    %2327 = vmatpush1.bf16.msra.mxu0 0
    %2328 = vmatprep.subr.bf16.mxu0 0
    %2329 = vmatpush1.bf16.msra.mxu0 0
    %2330 = vmatprep.mubr.bf16.mxu0 0
    %2331 = vmatmul.mubr.bf16.gmra.mrb[0].mxu0 %v2296
    %v2332 = vpop.f32.mrb[0].mxu0
    %v2333 = vadd.f32 %v2266, %v2332
    %v2334 = vpop.f32.mrb[0].mxu0
    %v2335 = vpop.f32.mrb[0].mxu0
    %v2336 = vadd.f32 %v2266, %v2335
    %v2337 = vpop.f32.mrb[0].mxu0
    %2338 = vdwg.mxu0
    %v2339 = vpack.c.bf16 %v2336, %v2333
    %v2340 = vld [vmem:[%s12] sm:$0xf]
    %v2341 = vld [vmem:[%s12 + $0x4] sm:$0xf]
    %v2342 = vld [vmem:[%s12 + $0x8] sm:$0xf]
    %v2343 = vld [vmem:[%s12 + $0xc] sm:$0xf]
    %v2344 = vld [vmem:[%s13] sm:$0x1]
    %v2346 = vlaneseq
    %v2347 = vshrl.u32 %v2346, 7
    %v2348 = vsub.s32 0, %v2347
    %v2349 = vrot.slane %v2344, %v2348
    %v2355 = vunpack.c.l.b16 %v2340
    %v2356 = vunpack.c.l.b16 %v2341
    %v2357 = vunpack.c.l.b16 %v2342
    %v2358 = vunpack.c.l.b16 %v2343
    %v2359 = vpack.c.b16 %v2356, %v2355
    %v2360 = vpack.c.b16 %v2358, %v2357
    %vm2363 = vcmask 261120
    %v2365 = vsel %vm2363, %v2339, 0
    %2367 = vmatprep.subr.bf16.mxu0 0
    %2368 = vmatpush1.bf16.msra.mxu0 %v2359
    %2369 = vmatprep.subr.bf16.mxu0 0
    %2370 = vmatpush1.bf16.msra.mxu0 %v2360
    %2371 = vmatprep.subr.bf16.mxu0 0
    %2372 = vmatpush1.bf16.msra.mxu0 0
    %2373 = vmatprep.subr.bf16.mxu0 0
    %2374 = vmatpush1.bf16.msra.mxu0 0
    %2375 = vmatprep.subr.bf16.mxu0 0
    %2376 = vmatpush1.bf16.msra.mxu0 0
    %2377 = vmatprep.subr.bf16.mxu0 0
    %2378 = vmatpush1.bf16.msra.mxu0 0
    %2379 = vmatprep.subr.bf16.mxu0 0
    %2380 = vmatpush1.bf16.msra.mxu0 0
    %2381 = vmatprep.subr.bf16.mxu0 0
    %2382 = vmatpush1.bf16.msra.mxu0 0
    %2383 = vmatprep.subr.bf16.mxu0 0
    %2384 = vmatpush1.bf16.msra.mxu0 0
    %2385 = vmatprep.subr.bf16.mxu0 0
    %2386 = vmatpush1.bf16.msra.mxu0 0
    %2387 = vmatprep.subr.bf16.mxu0 0
    %2388 = vmatpush1.bf16.msra.mxu0 0
    %2389 = vmatprep.subr.bf16.mxu0 0
    %2390 = vmatpush1.bf16.msra.mxu0 0
    %2391 = vmatprep.subr.bf16.mxu0 0
    %2392 = vmatpush1.bf16.msra.mxu0 0
    %2393 = vmatprep.subr.bf16.mxu0 0
    %2394 = vmatpush1.bf16.msra.mxu0 0
    %2395 = vmatprep.subr.bf16.mxu0 0
    %2396 = vmatpush1.bf16.msra.mxu0 0
    %2397 = vmatprep.subr.bf16.mxu0 0
    %2398 = vmatpush1.bf16.msra.mxu0 0
    %2399 = vmatprep.mubr.bf16.mxu0 0
    %2400 = vmatmul.mubr.bf16.gmra.mrb[0].mxu0 %v2365
    %v2401 = vpop.f32.mrb[0].mxu0
    %v2402 = vadd.f32 %v2349, %v2401
    %v2403 = vpop.f32.mrb[0].mxu0
    %v2404 = vpop.f32.mrb[0].mxu0
    %v2405 = vadd.f32 %v2349, %v2404
    %v2406 = vpop.f32.mrb[0].mxu0
    %2407 = vdwg.mxu0
    %v2408 = vmax.f32 %v2402, 0.0
    %v2409 = vmax.f32 %v2405, 0.0
    %v2410 = vadd.f32 %v2333, 0.0
    %v2411 = vlaneseq
    %v2412 = vshrl.u32 %v2411, 7
    %v2413 = vsub.s32 0, %v2412
    %v2414 = vrot.slane %v82, %v2413
    %2416 = vbcast.lane.b32.xlu0 %v2414, 256
    %v2417 = vpop.permute.xlu0 %2416
    %v2418 = vlaneseq
    %v2419 = vshrl.u32 %v2418, 7
    %v2420 = vsub.s32 0, %v2419
    %v2421 = vrot.slane %v83, %v2420
    %2423 = vbcast.lane.b32.xlu0 %v2421, 256
    %v2424 = vpop.permute.xlu0 %2423
    %v2427 = vunpack.c.l.s4 1966171168
    %v2428 = vunpack.c.0.s8 %v2427
    %v2429 = vlaneseq
    %v2430 = vshrl.u32 %v2429, 7
    %v2431 = vsub.s32 %v2428, %v2430
    %v2432 = vrot.slane %v2408, %v2431
    %v2433 = vcombine.high %v2432, %v2432
    %v2435 = vunpack.c.l.s4 1966171168
    %v2436 = vunpack.c.0.s8 %v2435
    %v2437 = vlaneseq
    %v2438 = vshrl.u32 %v2437, 7
    %v2439 = vsub.s32 %v2436, %v2438
    %v2440 = vrot.slane %v2432, %v2439
    %v2442 = vunpack.c.l.s4 1966171168
    %v2443 = vunpack.c.0.s8 %v2442
    %v2444 = vlaneseq
    %v2445 = vshrl.u32 %v2444, 7
    %v2446 = vsub.s32 %v2443, %v2445
    %v2447 = vrot.slane %v2433, %v2446
    %v2448 = vlaneseq
    %v2449 = vshrl.u32 %v2448, 7
    %v2450 = vsub.s32 0, %v2449
    %v2451 = vrot.slane %v2440, %v2450
    %v2452 = vlaneseq
    %v2453 = vshrl.u32 %v2452, 7
    %v2454 = vsub.s32 0, %v2453
    %v2455 = vrot.slane %v2447, %v2454
    %v2458 = vmul.f32 %v2451, %v2417
    %v2459 = vmul.f32 %v2455, %v2424
    %v2460 = vsub.f32 1.0, %v2417
    %v2461 = vsub.f32 1.0, %v2424
    %v2462 = vmul.f32 %v2451, %v2460
    %v2463 = vmul.f32 %v2455, %v2461
    %2466 = vrot.lane.b32.xlu0 %v2462, 96
    %v2467 = vpop.permute.xlu0 %2466
    %2468 = vrot.lane.b32.xlu0 %v2463, 96
    %v2469 = vpop.permute.xlu0 %2468
    %v2472 = vadd.f32 %v2458, %v2467
    %v2473 = vadd.f32 %v2459, %v2469
    %v2474 = vmul.f32 %v2472, 0.9
    %v2475 = vmul.f32 %v2473, 0.9
    %v2477 = vrot.slane %v2333, 2
    %v2479 = vadd.f32 %v2410, %v2477
    %v2480 = vlaneseq
    %v2481 = vshrl.u32 %v2480, 7
    %v2482 = vsub.s32 1, %v2481
    %v2483 = vrot.slane %v82, %v2482
    %2485 = vbcast.lane.b32.xlu0 %v2483, 256
    %v2486 = vpop.permute.xlu0 %2485
    %v2487 = vlaneseq
    %v2488 = vshrl.u32 %v2487, 7
    %v2489 = vsub.s32 1, %v2488
    %v2490 = vrot.slane %v83, %v2489
    %2492 = vbcast.lane.b32.xlu0 %v2490, 256
    %v2493 = vpop.permute.xlu0 %2492
    %v2494 = vcombine.high %v2440, %v2440
    %v2495 = vcombine.high %v2447, %v2447
    %v2496 = vlaneseq
    %v2497 = vshrl.u32 %v2496, 7
    %v2498 = vsub.s32 0, %v2497
    %v2499 = vrot.slane %v2494, %v2498
    %v2500 = vlaneseq
    %v2501 = vshrl.u32 %v2500, 7
    %v2502 = vsub.s32 0, %v2501
    %v2503 = vrot.slane %v2495, %v2502
    %v2506 = vmul.f32 %v2499, %v2486
    %v2507 = vmul.f32 %v2503, %v2493
    %v2508 = vsub.f32 1.0, %v2486
    %v2509 = vsub.f32 1.0, %v2493
    %v2510 = vmul.f32 %v2499, %v2508
    %v2511 = vmul.f32 %v2503, %v2509
    %2514 = vrot.lane.b32.xlu0 %v2510, 96
    %v2515 = vpop.permute.xlu0 %2514
    %2516 = vrot.lane.b32.xlu0 %v2511, 96
    %v2517 = vpop.permute.xlu0 %2516
    %v2520 = vadd.f32 %v2506, %v2515
    %v2521 = vadd.f32 %v2507, %v2517
    %v2522 = vmul.f32 %v2520, 0.9
    %v2523 = vmul.f32 %v2521, 0.9
    %v2524 = vrot.slane %v2333, 4
    %v2526 = vadd.f32 %v2479, %v2524
    %v2527 = vlaneseq
    %v2528 = vshrl.u32 %v2527, 7
    %v2529 = vsub.s32 2, %v2528
    %v2530 = vrot.slane %v82, %v2529
    %2532 = vbcast.lane.b32.xlu0 %v2530, 256
    %v2533 = vpop.permute.xlu0 %2532
    %v2534 = vlaneseq
    %v2535 = vshrl.u32 %v2534, 7
    %v2536 = vsub.s32 2, %v2535
    %v2537 = vrot.slane %v83, %v2536
    %2539 = vbcast.lane.b32.xlu0 %v2537, 256
    %v2540 = vpop.permute.xlu0 %2539
    %v2541 = vcombine.high %v2408, %v2408
    %v2543 = vunpack.c.l.s4 1966171168
    %v2544 = vunpack.c.0.s8 %v2543
    %v2545 = vlaneseq
    %v2546 = vshrl.u32 %v2545, 7
    %v2547 = vsub.s32 %v2544, %v2546
    %v2548 = vrot.slane %v2541, %v2547
    %v2549 = vcombine.high %v2548, %v2548
    %v2551 = vunpack.c.l.s4 1966171168
    %v2552 = vunpack.c.0.s8 %v2551
    %v2553 = vlaneseq
    %v2554 = vshrl.u32 %v2553, 7
    %v2555 = vsub.s32 %v2552, %v2554
    %v2556 = vrot.slane %v2548, %v2555
    %v2558 = vunpack.c.l.s4 1966171168
    %v2559 = vunpack.c.0.s8 %v2558
    %v2560 = vlaneseq
    %v2561 = vshrl.u32 %v2560, 7
    %v2562 = vsub.s32 %v2559, %v2561
    %v2563 = vrot.slane %v2549, %v2562
    %v2564 = vlaneseq
    %v2565 = vshrl.u32 %v2564, 7
    %v2566 = vsub.s32 0, %v2565
    %v2567 = vrot.slane %v2556, %v2566
    %v2568 = vlaneseq
    %v2569 = vshrl.u32 %v2568, 7
    %v2570 = vsub.s32 0, %v2569
    %v2571 = vrot.slane %v2563, %v2570
    %v2574 = vmul.f32 %v2567, %v2533
    %v2575 = vmul.f32 %v2571, %v2540
    %v2576 = vsub.f32 1.0, %v2533
    %v2577 = vsub.f32 1.0, %v2540
    %v2578 = vmul.f32 %v2567, %v2576
    %v2579 = vmul.f32 %v2571, %v2577
    %2582 = vrot.lane.b32.xlu0 %v2578, 96
    %v2583 = vpop.permute.xlu0 %2582
    %2584 = vrot.lane.b32.xlu0 %v2579, 96
    %v2585 = vpop.permute.xlu0 %2584
    %v2588 = vadd.f32 %v2574, %v2583
    %v2589 = vadd.f32 %v2575, %v2585
    %v2590 = vmul.f32 %v2588, 0.9
    %v2591 = vmul.f32 %v2589, 0.9
    %v2592 = vrot.slane %v2333, 6
    %v2594 = vadd.f32 %v2526, %v2592
    %v2595 = vlaneseq
    %v2596 = vshrl.u32 %v2595, 7
    %v2597 = vsub.s32 3, %v2596
    %v2598 = vrot.slane %v82, %v2597
    %2600 = vbcast.lane.b32.xlu0 %v2598, 256
    %v2601 = vpop.permute.xlu0 %2600
    %v2602 = vlaneseq
    %v2603 = vshrl.u32 %v2602, 7
    %v2604 = vsub.s32 3, %v2603
    %v2605 = vrot.slane %v83, %v2604
    %2607 = vbcast.lane.b32.xlu0 %v2605, 256
    %v2608 = vpop.permute.xlu0 %2607
    %v2609 = vcombine.high %v2556, %v2556
    %v2610 = vcombine.high %v2563, %v2563
    %v2611 = vlaneseq
    %v2612 = vshrl.u32 %v2611, 7
    %v2613 = vsub.s32 0, %v2612
    %v2614 = vrot.slane %v2609, %v2613
    %v2615 = vlaneseq
    %v2616 = vshrl.u32 %v2615, 7
    %v2617 = vsub.s32 0, %v2616
    %v2618 = vrot.slane %v2610, %v2617
    %v2621 = vmul.f32 %v2614, %v2601
    %v2622 = vmul.f32 %v2618, %v2608
    %v2623 = vsub.f32 1.0, %v2601
    %v2624 = vsub.f32 1.0, %v2608
    %v2625 = vmul.f32 %v2614, %v2623
    %v2626 = vmul.f32 %v2618, %v2624
    %2629 = vrot.lane.b32.xlu0 %v2625, 96
    %v2630 = vpop.permute.xlu0 %2629
    %2631 = vrot.lane.b32.xlu0 %v2626, 96
    %v2632 = vpop.permute.xlu0 %2631
    %v2635 = vadd.f32 %v2621, %v2630
    %v2636 = vadd.f32 %v2622, %v2632
    %v2637 = vmul.f32 %v2635, 0.9
    %v2638 = vmul.f32 %v2636, 0.9
    %v2639 = vadd.f32 %v2594, %v2336
    %v2640 = vlaneseq
    %v2641 = vshrl.u32 %v2640, 7
    %v2642 = vsub.s32 4, %v2641
    %v2643 = vrot.slane %v82, %v2642
    %2645 = vbcast.lane.b32.xlu0 %v2643, 256
    %v2646 = vpop.permute.xlu0 %2645
    %v2647 = vlaneseq
    %v2648 = vshrl.u32 %v2647, 7
    %v2649 = vsub.s32 4, %v2648
    %v2650 = vrot.slane %v83, %v2649
    %2652 = vbcast.lane.b32.xlu0 %v2650, 256
    %v2653 = vpop.permute.xlu0 %2652
    %v2656 = vunpack.c.l.s4 1966171168
    %v2657 = vunpack.c.0.s8 %v2656
    %v2658 = vlaneseq
    %v2659 = vshrl.u32 %v2658, 7
    %v2660 = vsub.s32 %v2657, %v2659
    %v2661 = vrot.slane %v2409, %v2660
    %v2662 = vcombine.high %v2661, %v2661
    %v2664 = vunpack.c.l.s4 1966171168
    %v2665 = vunpack.c.0.s8 %v2664
    %v2666 = vlaneseq
    %v2667 = vshrl.u32 %v2666, 7
    %v2668 = vsub.s32 %v2665, %v2667
    %v2669 = vrot.slane %v2661, %v2668
    %v2671 = vunpack.c.l.s4 1966171168
    %v2672 = vunpack.c.0.s8 %v2671
    %v2673 = vlaneseq
    %v2674 = vshrl.u32 %v2673, 7
    %v2675 = vsub.s32 %v2672, %v2674
    %v2676 = vrot.slane %v2662, %v2675
    %v2677 = vlaneseq
    %v2678 = vshrl.u32 %v2677, 7
    %v2679 = vsub.s32 0, %v2678
    %v2680 = vrot.slane %v2669, %v2679
    %v2681 = vlaneseq
    %v2682 = vshrl.u32 %v2681, 7
    %v2683 = vsub.s32 0, %v2682
    %v2684 = vrot.slane %v2676, %v2683
    %v2687 = vmul.f32 %v2680, %v2646
    %v2688 = vmul.f32 %v2684, %v2653
    %v2689 = vsub.f32 1.0, %v2646
    %v2690 = vsub.f32 1.0, %v2653
    %v2691 = vmul.f32 %v2680, %v2689
    %v2692 = vmul.f32 %v2684, %v2690
    %2695 = vrot.lane.b32.xlu0 %v2691, 96
    %v2696 = vpop.permute.xlu0 %2695
    %2697 = vrot.lane.b32.xlu0 %v2692, 96
    %v2698 = vpop.permute.xlu0 %2697
    %v2701 = vadd.f32 %v2687, %v2696
    %v2702 = vadd.f32 %v2688, %v2698
    %v2703 = vmul.f32 %v2701, 0.9
    %v2704 = vmul.f32 %v2702, 0.9
    %v2705 = vld [vmem:[%s14] sm:$0xf]
    %v2706 = vld [vmem:[%s14 + $0x4] sm:$0xf]
    %v2707 = vld [vmem:[%s14 + $0x8] sm:$0xf]
    %v2708 = vld [vmem:[%s14 + $0xc] sm:$0xf]
    %v2709 = vld [vmem:[%s15] sm:$0x1]
    %v2710 = vadd.f32 %v2474, 0.0
    %v2711 = vadd.f32 %v2475, 0.0
    %v2712 = vpack.c.bf16 %v2710, %v2710
    %v2713 = vpack.c.bf16 %v2711, %v2711
    %v2715 = vlaneseq
    %v2716 = vshrl.u32 %v2715, 7
    %v2717 = vsub.s32 0, %v2716
    %v2718 = vrot.slane %v2709, %v2717
    %v2722 = vunpack.c.l.s4 1966171168
    %v2723 = vunpack.c.0.s8 %v2722
    %v2724 = vlaneseq
    %v2725 = vshrl.u32 %v2724, 7
    %v2726 = vsub.s32 %v2723, %v2725
    %v2727 = vrot.slane %v2712, %v2726
    %v2728 = vcombine.high %v2727, %v2727
    %v2730 = vunpack.c.l.s4 1966171168
    %v2731 = vunpack.c.0.s8 %v2730
    %v2732 = vlaneseq
    %v2733 = vshrl.u32 %v2732, 7
    %v2734 = vsub.s32 %v2731, %v2733
    %v2735 = vrot.slane %v2727, %v2734
    %v2737 = vunpack.c.l.s4 1966171168
    %v2738 = vunpack.c.0.s8 %v2737
    %v2739 = vlaneseq
    %v2740 = vshrl.u32 %v2739, 7
    %v2741 = vsub.s32 %v2738, %v2740
    %v2742 = vrot.slane %v2728, %v2741
    %v2743 = vcombine.high %v2735, %v2735
    %v2745 = vunpack.c.l.s4 1966171168
    %v2746 = vunpack.c.0.s8 %v2745
    %v2747 = vlaneseq
    %v2748 = vshrl.u32 %v2747, 7
    %v2749 = vsub.s32 %v2746, %v2748
    %v2750 = vrot.slane %v2713, %v2749
    %v2751 = vcombine.high %v2750, %v2750
    %v2753 = vunpack.c.l.s4 1966171168
    %v2754 = vunpack.c.0.s8 %v2753
    %v2755 = vlaneseq
    %v2756 = vshrl.u32 %v2755, 7
    %v2757 = vsub.s32 %v2754, %v2756
    %v2758 = vrot.slane %v2750, %v2757
    %v2760 = vunpack.c.l.s4 1966171168
    %v2761 = vunpack.c.0.s8 %v2760
    %v2762 = vlaneseq
    %v2763 = vshrl.u32 %v2762, 7
    %v2764 = vsub.s32 %v2761, %v2763
    %v2765 = vrot.slane %v2751, %v2764
    %v2766 = vcombine.high %v2758, %v2758
    %v2767 = vunpack.i.l.s16 %v2735
    %v2768 = vunpack.i.h.s16 %v2735
    %v2769 = vunpack.i.l.s16 %v2742
    %v2770 = vunpack.i.h.s16 %v2742
    %v2771 = vunpack.i.l.s16 %v2743
    %v2772 = vunpack.i.l.s16 %v2758
    %v2773 = vunpack.i.h.s16 %v2758
    %v2774 = vunpack.i.l.s16 %v2765
    %v2775 = vunpack.i.h.s16 %v2765
    %v2776 = vunpack.i.l.s16 %v2766
    %v2777 = vcombine.high %v2718, %v2718
    %v2779 = vunpack.c.l.s4 1966171168
    %v2780 = vunpack.c.0.s8 %v2779
    %v2781 = vlaneseq
    %v2782 = vshrl.u32 %v2781, 7
    %v2783 = vsub.s32 %v2780, %v2782
    %v2784 = vrot.slane %v2718, %v2783
    %v2786 = vunpack.c.l.s4 1966171168
    %v2787 = vunpack.c.0.s8 %v2786
    %v2788 = vlaneseq
    %v2789 = vshrl.u32 %v2788, 7
    %v2790 = vsub.s32 %v2787, %v2789
    %v2791 = vrot.slane %v2777, %v2790
    %v2792 = vcombine.high %v2784, %v2784
    %v2794 = vunpack.c.l.s4 1966171168
    %v2795 = vunpack.c.0.s8 %v2794
    %v2796 = vlaneseq
    %v2797 = vshrl.u32 %v2796, 7
    %v2798 = vsub.s32 %v2795, %v2797
    %v2799 = vrot.slane %v2784, %v2798
    %v2801 = vunpack.c.l.s4 1966171168
    %v2802 = vunpack.c.0.s8 %v2801
    %v2803 = vlaneseq
    %v2804 = vshrl.u32 %v2803, 7
    %v2805 = vsub.s32 %v2802, %v2804
    %v2806 = vrot.slane %v2791, %v2805
    %v2808 = vunpack.c.l.s4 1966171168
    %v2809 = vunpack.c.0.s8 %v2808
    %v2810 = vlaneseq
    %v2811 = vshrl.u32 %v2810, 7
    %v2812 = vsub.s32 %v2809, %v2811
    %v2813 = vrot.slane %v2792, %v2812
    %v2814 = vcombine.high %v2799, %v2799
    %v2815 = vcombine.high %v2813, %v2813
    %v2816 = vpack.i.b16 %v2768, %v2767
    %v2817 = vpack.i.b16 %v2770, %v2769
    %v2818 = vpack.i.b16 %v2772, %v2771
    %v2819 = vpack.i.b16 %v2774, %v2773
    %v2820 = vpack.i.b16 %v2776, %v2775
    %v2821 = vcombine.low %v2816, %v2817
    %v2822 = vcombine.low %v2818, %v2819
    %v2824 = vunpack.c.l.s4 1966171168
    %v2825 = vunpack.c.0.s8 %v2824
    %v2826 = vlaneseq
    %v2827 = vshrl.u32 %v2826, 7
    %v2828 = vsub.s32 %v2825, %v2827
    %v2829 = vrot.slane %v2821, %v2828
    %v2831 = vunpack.c.l.s4 1966171168
    %v2832 = vunpack.c.0.s8 %v2831
    %v2833 = vlaneseq
    %v2834 = vshrl.u32 %v2833, 7
    %v2835 = vsub.s32 %v2832, %v2834
    %v2836 = vrot.slane %v2822, %v2835
    %v2838 = vunpack.c.l.s4 1966171168
    %v2839 = vunpack.c.0.s8 %v2838
    %v2840 = vlaneseq
    %v2841 = vshrl.u32 %v2840, 7
    %v2842 = vsub.s32 %v2839, %v2841
    %v2843 = vrot.slane %v2820, %v2842
    %v2844 = vcombine.low %v2829, %v2836
    %v2846 = vunpack.c.l.s4 1966171168
    %v2847 = vunpack.c.0.s8 %v2846
    %v2848 = vlaneseq
    %v2849 = vshrl.u32 %v2848, 7
    %v2850 = vsub.s32 %v2847, %v2849
    %v2851 = vrot.slane %v2844, %v2850
    %v2853 = vunpack.c.l.s4 1966171168
    %v2854 = vunpack.c.0.s8 %v2853
    %v2855 = vlaneseq
    %v2856 = vshrl.u32 %v2855, 7
    %v2857 = vsub.s32 %v2854, %v2856
    %v2858 = vrot.slane %v2843, %v2857
    %v2859 = vcombine.low %v2851, %v2858
    %v2864 = vunpack.c.l.b16 %v2705
    %v2865 = vunpack.c.l.b16 %v2706
    %v2866 = vunpack.c.l.b16 %v2707
    %v2867 = vunpack.c.l.b16 %v2708
    %v2868 = vpack.c.b16 %v2865, %v2864
    %v2869 = vpack.c.b16 %v2867, %v2866
    %v2872 = vcombine.low %v2799, %v2813
    %v2873 = vcombine.low %v2814, %v2815
    %v2874 = vcombine.low %v2806, %v2799
    %v2875 = vcombine.low %v2813, %v2814
    %v2877 = vunpack.c.l.s4 1966171168
    %v2878 = vunpack.c.0.s8 %v2877
    %v2879 = vlaneseq
    %v2880 = vshrl.u32 %v2879, 7
    %v2881 = vsub.s32 %v2878, %v2880
    %v2882 = vrot.slane %v2872, %v2881
    %v2884 = vunpack.c.l.s4 1966171168
    %v2885 = vunpack.c.0.s8 %v2884
    %v2886 = vlaneseq
    %v2887 = vshrl.u32 %v2886, 7
    %v2888 = vsub.s32 %v2885, %v2887
    %v2889 = vrot.slane %v2873, %v2888
    %v2891 = vunpack.c.l.s4 1966171168
    %v2892 = vunpack.c.0.s8 %v2891
    %v2893 = vlaneseq
    %v2894 = vshrl.u32 %v2893, 7
    %v2895 = vsub.s32 %v2892, %v2894
    %v2896 = vrot.slane %v2874, %v2895
    %v2898 = vunpack.c.l.s4 1966171168
    %v2899 = vunpack.c.0.s8 %v2898
    %v2900 = vlaneseq
    %v2901 = vshrl.u32 %v2900, 7
    %v2902 = vsub.s32 %v2899, %v2901
    %v2903 = vrot.slane %v2875, %v2902
    %v2904 = vcombine.low %v2882, %v2889
    %v2905 = vcombine.low %v2896, %v2903
    %v2907 = vunpack.c.l.s4 1966171168
    %v2908 = vunpack.c.0.s8 %v2907
    %v2909 = vlaneseq
    %v2910 = vshrl.u32 %v2909, 7
    %v2911 = vsub.s32 %v2908, %v2910
    %v2912 = vrot.slane %v2904, %v2911
    %v2914 = vunpack.c.l.s4 1966171168
    %v2915 = vunpack.c.0.s8 %v2914
    %v2916 = vlaneseq
    %v2917 = vshrl.u32 %v2916, 7
    %v2918 = vsub.s32 %v2915, %v2917
    %v2919 = vrot.slane %v2905, %v2918
    %v2920 = vcombine.low %v2912, %v2919
    %v2921 = vcombine.low %v2815, %v2806
    %v2923 = vunpack.c.l.s4 1966171168
    %v2924 = vunpack.c.0.s8 %v2923
    %v2925 = vlaneseq
    %v2926 = vshrl.u32 %v2925, 7
    %v2927 = vsub.s32 %v2924, %v2926
    %v2928 = vrot.slane %v2921, %v2927
    %v2930 = vunpack.c.l.s4 1966171168
    %v2931 = vunpack.c.0.s8 %v2930
    %v2932 = vlaneseq
    %v2933 = vshrl.u32 %v2932, 7
    %v2934 = vsub.s32 %v2931, %v2933
    %v2935 = vrot.slane %v2928, %v2934
    %v2939 = vsel %vm2363, %v2859, 0
    %2941 = vmatprep.subr.bf16.mxu0 0
    %2942 = vmatpush1.bf16.msra.mxu0 %v2868
    %2943 = vmatprep.subr.bf16.mxu0 0
    %2944 = vmatpush1.bf16.msra.mxu0 %v2869
    %2945 = vmatprep.subr.bf16.mxu0 0
    %2946 = vmatpush1.bf16.msra.mxu0 0
    %2947 = vmatprep.subr.bf16.mxu0 0
    %2948 = vmatpush1.bf16.msra.mxu0 0
    %2949 = vmatprep.subr.bf16.mxu0 0
    %2950 = vmatpush1.bf16.msra.mxu0 0
    %2951 = vmatprep.subr.bf16.mxu0 0
    %2952 = vmatpush1.bf16.msra.mxu0 0
    %2953 = vmatprep.subr.bf16.mxu0 0
    %2954 = vmatpush1.bf16.msra.mxu0 0
    %2955 = vmatprep.subr.bf16.mxu0 0
    %2956 = vmatpush1.bf16.msra.mxu0 0
    %2957 = vmatprep.subr.bf16.mxu0 0
    %2958 = vmatpush1.bf16.msra.mxu0 0
    %2959 = vmatprep.subr.bf16.mxu0 0
    %2960 = vmatpush1.bf16.msra.mxu0 0
    %2961 = vmatprep.subr.bf16.mxu0 0
    %2962 = vmatpush1.bf16.msra.mxu0 0
    %2963 = vmatprep.subr.bf16.mxu0 0
    %2964 = vmatpush1.bf16.msra.mxu0 0
    %2965 = vmatprep.subr.bf16.mxu0 0
    %2966 = vmatpush1.bf16.msra.mxu0 0
    %2967 = vmatprep.subr.bf16.mxu0 0
    %2968 = vmatpush1.bf16.msra.mxu0 0
    %2969 = vmatprep.subr.bf16.mxu0 0
    %2970 = vmatpush1.bf16.msra.mxu0 0
    %2971 = vmatprep.subr.bf16.mxu0 0
    %2972 = vmatpush1.bf16.msra.mxu0 0
    %2973 = vmatprep.mubr.bf16.mxu0 0
    %2974 = vmatmul.mubr.bf16.gmra.mrb[0].mxu0 %v2939
    %v2975 = vpop.f32.mrb[0].mxu0
    %v2976 = vadd.f32 %v2920, %v2975
    %v2977 = vpop.f32.mrb[0].mxu0
    %v2978 = vpop.f32.mrb[0].mxu0
    %v2979 = vadd.f32 %v2935, %v2978
    %v2980 = vpop.f32.mrb[0].mxu0
    %2981 = vdwg.mxu0
    %v2984 = vcombine.high %v2976, %v2976
    %v2986 = vunpack.c.l.s4 1966171168
    %v2987 = vunpack.c.0.s8 %v2986
    %v2988 = vlaneseq
    %v2989 = vshrl.u32 %v2988, 7
    %v2990 = vsub.s32 %v2987, %v2989
    %v2991 = vrot.slane %v2976, %v2990
    %v2993 = vunpack.c.l.s4 1966171168
    %v2994 = vunpack.c.0.s8 %v2993
    %v2995 = vlaneseq
    %v2996 = vshrl.u32 %v2995, 7
    %v2997 = vsub.s32 %v2994, %v2996
    %v2998 = vrot.slane %v2984, %v2997
    %v2999 = vcombine.high %v2991, %v2991
    %v3000 = vcombine.high %v2998, %v2998
    %v3002 = vunpack.c.l.s4 1966171168
    %v3003 = vunpack.c.0.s8 %v3002
    %v3004 = vlaneseq
    %v3005 = vshrl.u32 %v3004, 7
    %v3006 = vsub.s32 %v3003, %v3005
    %v3007 = vrot.slane %v2991, %v3006
    %v3009 = vunpack.c.l.s4 1966171168
    %v3010 = vunpack.c.0.s8 %v3009
    %v3011 = vlaneseq
    %v3012 = vshrl.u32 %v3011, 7
    %v3013 = vsub.s32 %v3010, %v3012
    %v3014 = vrot.slane %v2998, %v3013
    %v3016 = vunpack.c.l.s4 1966171168
    %v3017 = vunpack.c.0.s8 %v3016
    %v3018 = vlaneseq
    %v3019 = vshrl.u32 %v3018, 7
    %v3020 = vsub.s32 %v3017, %v3019
    %v3021 = vrot.slane %v2999, %v3020
    %v3023 = vunpack.c.l.s4 1966171168
    %v3024 = vunpack.c.0.s8 %v3023
    %v3025 = vlaneseq
    %v3026 = vshrl.u32 %v3025, 7
    %v3027 = vsub.s32 %v3024, %v3026
    %v3028 = vrot.slane %v3000, %v3027
    %v3029 = vcombine.high %v3007, %v3007
    %v3030 = vcombine.high %v3014, %v3014
    %v3031 = vcombine.high %v3021, %v3021
    %v3032 = vcombine.high %v3028, %v3028
    %v3034 = vunpack.c.l.s4 1966171168
    %v3035 = vunpack.c.0.s8 %v3034
    %v3036 = vlaneseq
    %v3037 = vshrl.u32 %v3036, 7
    %v3038 = vsub.s32 %v3035, %v3037
    %v3039 = vrot.slane %v2979, %v3038
    %v3040 = vcombine.high %v3039, %v3039
    %v3042 = vunpack.c.l.s4 1966171168
    %v3043 = vunpack.c.0.s8 %v3042
    %v3044 = vlaneseq
    %v3045 = vshrl.u32 %v3044, 7
    %v3046 = vsub.s32 %v3043, %v3045
    %v3047 = vrot.slane %v3039, %v3046
    %v3049 = vunpack.c.l.s4 1966171168
    %v3050 = vunpack.c.0.s8 %v3049
    %v3051 = vlaneseq
    %v3052 = vshrl.u32 %v3051, 7
    %v3053 = vsub.s32 %v3050, %v3052
    %v3054 = vrot.slane %v3040, %v3053
    %vm3065 = vcmp.ge.f32.partialorder %v3007, 0.0
    %vm3066 = vcmp.ge.f32.partialorder %v3021, 0.0
    %vm3067 = vcmp.ge.f32.partialorder %v3029, 0.0
    %vm3068 = vcmp.ge.f32.partialorder %v3031, 0.0
    %vm3069 = vcmp.ge.f32.partialorder %v3014, 0.0
    %vm3070 = vcmp.ge.f32.partialorder %v3028, 0.0
    %vm3071 = vcmp.ge.f32.partialorder %v3030, 0.0
    %vm3072 = vcmp.ge.f32.partialorder %v3032, 0.0
    %vm3073 = vcmp.ge.f32.partialorder %v3047, 0.0
    %vm3074 = vcmp.ge.f32.partialorder %v3054, 0.0
    %v3075 = vmul.f32 %v3007, 0.01
    %v3076 = vmul.f32 %v3021, 0.01
    %v3077 = vmul.f32 %v3029, 0.01
    %v3078 = vmul.f32 %v3031, 0.01
    %v3079 = vmul.f32 %v3014, 0.01
    %v3080 = vmul.f32 %v3028, 0.01
    %v3081 = vmul.f32 %v3030, 0.01
    %v3082 = vmul.f32 %v3032, 0.01
    %v3083 = vmul.f32 %v3047, 0.01
    %v3084 = vmul.f32 %v3054, 0.01
    %v3085 = vsel %vm3065, %v3007, %v3075
    %v3086 = vsel %vm3066, %v3021, %v3076
    %v3087 = vsel %vm3067, %v3029, %v3077
    %v3088 = vsel %vm3068, %v3031, %v3078
    %v3089 = vsel %vm3069, %v3014, %v3079
    %v3090 = vsel %vm3070, %v3028, %v3080
    %v3091 = vsel %vm3071, %v3030, %v3081
    %v3092 = vsel %vm3072, %v3032, %v3082
    %v3093 = vsel %vm3073, %v3047, %v3083
    %v3094 = vsel %vm3074, %v3054, %v3084
    %v3095 = vmul.f32 %v3085, 2.0
    %v3096 = vmul.f32 %v3086, 2.0
    %v3097 = vmul.f32 %v3087, 2.0
    %v3098 = vmul.f32 %v3088, 2.0
    %v3099 = vmul.f32 %v3089, 2.0
    %v3100 = vmul.f32 %v3090, 2.0
    %v3101 = vmul.f32 %v3091, 2.0
    %v3102 = vmul.f32 %v3092, 2.0
    %v3103 = vmul.f32 %v3093, 2.0
    %v3104 = vmul.f32 %v3094, 2.0
    %v3115 = vcombine.low %v3095, %v3096
    %v3116 = vcombine.low %v3097, %v3098
    %v3118 = vunpack.c.l.s4 1966171168
    %v3119 = vunpack.c.0.s8 %v3118
    %v3120 = vlaneseq
    %v3121 = vshrl.u32 %v3120, 7
    %v3122 = vsub.s32 %v3119, %v3121
    %v3123 = vrot.slane %v3115, %v3122
    %v3125 = vunpack.c.l.s4 1966171168
    %v3126 = vunpack.c.0.s8 %v3125
    %v3127 = vlaneseq
    %v3128 = vshrl.u32 %v3127, 7
    %v3129 = vsub.s32 %v3126, %v3128
    %v3130 = vrot.slane %v3116, %v3129
    %v3132 = vunpack.c.l.s4 1966171168
    %v3133 = vunpack.c.0.s8 %v3132
    %v3134 = vlaneseq
    %v3135 = vshrl.u32 %v3134, 7
    %v3136 = vsub.s32 %v3133, %v3135
    %v3137 = vrot.slane %v3099, %v3136
    %v3138 = vcombine.low %v3123, %v3130
    %v3140 = vunpack.c.l.s4 1966171168
    %v3141 = vunpack.c.0.s8 %v3140
    %v3142 = vlaneseq
    %v3143 = vshrl.u32 %v3142, 7
    %v3144 = vsub.s32 %v3141, %v3143
    %v3145 = vrot.slane %v3138, %v3144
    %v3147 = vunpack.c.l.s4 1966171168
    %v3148 = vunpack.c.0.s8 %v3147
    %v3149 = vlaneseq
    %v3150 = vshrl.u32 %v3149, 7
    %v3151 = vsub.s32 %v3148, %v3150
    %v3152 = vrot.slane %v3137, %v3151
    %v3153 = vcombine.low %v3145, %v3152
    %v3154 = vcombine.low %v3100, %v3101
    %v3155 = vcombine.low %v3102, %v3103
    %v3157 = vunpack.c.l.s4 1966171168
    %v3158 = vunpack.c.0.s8 %v3157
    %v3159 = vlaneseq
    %v3160 = vshrl.u32 %v3159, 7
    %v3161 = vsub.s32 %v3158, %v3160
    %v3162 = vrot.slane %v3154, %v3161
    %v3164 = vunpack.c.l.s4 1966171168
    %v3165 = vunpack.c.0.s8 %v3164
    %v3166 = vlaneseq
    %v3167 = vshrl.u32 %v3166, 7
    %v3168 = vsub.s32 %v3165, %v3167
    %v3169 = vrot.slane %v3155, %v3168
    %v3171 = vunpack.c.l.s4 1966171168
    %v3172 = vunpack.c.0.s8 %v3171
    %v3173 = vlaneseq
    %v3174 = vshrl.u32 %v3173, 7
    %v3175 = vsub.s32 %v3172, %v3174
    %v3176 = vrot.slane %v3104, %v3175
    %v3177 = vcombine.low %v3162, %v3169
    %v3179 = vunpack.c.l.s4 1966171168
    %v3180 = vunpack.c.0.s8 %v3179
    %v3181 = vlaneseq
    %v3182 = vshrl.u32 %v3181, 7
    %v3183 = vsub.s32 %v3180, %v3182
    %v3184 = vrot.slane %v3177, %v3183
    %v3186 = vunpack.c.l.s4 1966171168
    %v3187 = vunpack.c.0.s8 %v3186
    %v3188 = vlaneseq
    %v3189 = vshrl.u32 %v3188, 7
    %v3190 = vsub.s32 %v3187, %v3189
    %v3191 = vrot.slane %v3176, %v3190
    %v3192 = vcombine.low %v3184, %v3191
    %v3195 = vadd.f32 %v2522, %v3153
    %v3196 = vadd.f32 %v2523, %v3192
    %v3197 = vpack.c.bf16 %v3195, %v3195
    %v3198 = vpack.c.bf16 %v3196, %v3196
    %v3202 = vunpack.c.l.s4 1966171168
    %v3203 = vunpack.c.0.s8 %v3202
    %v3204 = vlaneseq
    %v3205 = vshrl.u32 %v3204, 7
    %v3206 = vsub.s32 %v3203, %v3205
    %v3207 = vrot.slane %v3197, %v3206
    %v3208 = vcombine.high %v3207, %v3207
    %v3210 = vunpack.c.l.s4 1966171168
    %v3211 = vunpack.c.0.s8 %v3210
    %v3212 = vlaneseq
    %v3213 = vshrl.u32 %v3212, 7
    %v3214 = vsub.s32 %v3211, %v3213
    %v3215 = vrot.slane %v3207, %v3214
    %v3217 = vunpack.c.l.s4 1966171168
    %v3218 = vunpack.c.0.s8 %v3217
    %v3219 = vlaneseq
    %v3220 = vshrl.u32 %v3219, 7
    %v3221 = vsub.s32 %v3218, %v3220
    %v3222 = vrot.slane %v3208, %v3221
    %v3223 = vcombine.high %v3215, %v3215
    %v3225 = vunpack.c.l.s4 1966171168
    %v3226 = vunpack.c.0.s8 %v3225
    %v3227 = vlaneseq
    %v3228 = vshrl.u32 %v3227, 7
    %v3229 = vsub.s32 %v3226, %v3228
    %v3230 = vrot.slane %v3198, %v3229
    %v3231 = vcombine.high %v3230, %v3230
    %v3233 = vunpack.c.l.s4 1966171168
    %v3234 = vunpack.c.0.s8 %v3233
    %v3235 = vlaneseq
    %v3236 = vshrl.u32 %v3235, 7
    %v3237 = vsub.s32 %v3234, %v3236
    %v3238 = vrot.slane %v3230, %v3237
    %v3240 = vunpack.c.l.s4 1966171168
    %v3241 = vunpack.c.0.s8 %v3240
    %v3242 = vlaneseq
    %v3243 = vshrl.u32 %v3242, 7
    %v3244 = vsub.s32 %v3241, %v3243
    %v3245 = vrot.slane %v3231, %v3244
    %v3246 = vcombine.high %v3238, %v3238
    %v3247 = vunpack.i.l.s16 %v3215
    %v3248 = vunpack.i.h.s16 %v3215
    %v3249 = vunpack.i.l.s16 %v3222
    %v3250 = vunpack.i.h.s16 %v3222
    %v3251 = vunpack.i.l.s16 %v3223
    %v3252 = vunpack.i.l.s16 %v3238
    %v3253 = vunpack.i.h.s16 %v3238
    %v3254 = vunpack.i.l.s16 %v3245
    %v3255 = vunpack.i.h.s16 %v3245
    %v3256 = vunpack.i.l.s16 %v3246
    %v3257 = vpack.i.b16 %v3248, %v3247
    %v3258 = vpack.i.b16 %v3250, %v3249
    %v3259 = vpack.i.b16 %v3252, %v3251
    %v3260 = vpack.i.b16 %v3254, %v3253
    %v3261 = vpack.i.b16 %v3256, %v3255
    %v3262 = vcombine.low %v3257, %v3258
    %v3263 = vcombine.low %v3259, %v3260
    %v3265 = vunpack.c.l.s4 1966171168
    %v3266 = vunpack.c.0.s8 %v3265
    %v3267 = vlaneseq
    %v3268 = vshrl.u32 %v3267, 7
    %v3269 = vsub.s32 %v3266, %v3268
    %v3270 = vrot.slane %v3262, %v3269
    %v3272 = vunpack.c.l.s4 1966171168
    %v3273 = vunpack.c.0.s8 %v3272
    %v3274 = vlaneseq
    %v3275 = vshrl.u32 %v3274, 7
    %v3276 = vsub.s32 %v3273, %v3275
    %v3277 = vrot.slane %v3263, %v3276
    %v3279 = vunpack.c.l.s4 1966171168
    %v3280 = vunpack.c.0.s8 %v3279
    %v3281 = vlaneseq
    %v3282 = vshrl.u32 %v3281, 7
    %v3283 = vsub.s32 %v3280, %v3282
    %v3284 = vrot.slane %v3261, %v3283
    %v3285 = vcombine.low %v3270, %v3277
    %v3287 = vunpack.c.l.s4 1966171168
    %v3288 = vunpack.c.0.s8 %v3287
    %v3289 = vlaneseq
    %v3290 = vshrl.u32 %v3289, 7
    %v3291 = vsub.s32 %v3288, %v3290
    %v3292 = vrot.slane %v3285, %v3291
    %v3294 = vunpack.c.l.s4 1966171168
    %v3295 = vunpack.c.0.s8 %v3294
    %v3296 = vlaneseq
    %v3297 = vshrl.u32 %v3296, 7
    %v3298 = vsub.s32 %v3295, %v3297
    %v3299 = vrot.slane %v3284, %v3298
    %v3300 = vcombine.low %v3292, %v3299
    %v3302 = vsel %vm2363, %v3300, 0
    %3304 = vmatprep.subr.bf16.mxu0 0
    %3305 = vmatpush1.bf16.msra.mxu0 %v2868
    %3306 = vmatprep.subr.bf16.mxu0 0
    %3307 = vmatpush1.bf16.msra.mxu0 %v2869
    %3308 = vmatprep.subr.bf16.mxu0 0
    %3309 = vmatpush1.bf16.msra.mxu0 0
    %3310 = vmatprep.subr.bf16.mxu0 0
    %3311 = vmatpush1.bf16.msra.mxu0 0
    %3312 = vmatprep.subr.bf16.mxu0 0
    %3313 = vmatpush1.bf16.msra.mxu0 0
    %3314 = vmatprep.subr.bf16.mxu0 0
    %3315 = vmatpush1.bf16.msra.mxu0 0
    %3316 = vmatprep.subr.bf16.mxu0 0
    %3317 = vmatpush1.bf16.msra.mxu0 0
    %3318 = vmatprep.subr.bf16.mxu0 0
    %3319 = vmatpush1.bf16.msra.mxu0 0
    %3320 = vmatprep.subr.bf16.mxu0 0
    %3321 = vmatpush1.bf16.msra.mxu0 0
    %3322 = vmatprep.subr.bf16.mxu0 0
    %3323 = vmatpush1.bf16.msra.mxu0 0
    %3324 = vmatprep.subr.bf16.mxu0 0
    %3325 = vmatpush1.bf16.msra.mxu0 0
    %3326 = vmatprep.subr.bf16.mxu0 0
    %3327 = vmatpush1.bf16.msra.mxu0 0
    %3328 = vmatprep.subr.bf16.mxu0 0
    %3329 = vmatpush1.bf16.msra.mxu0 0
    %3330 = vmatprep.subr.bf16.mxu0 0
    %3331 = vmatpush1.bf16.msra.mxu0 0
    %3332 = vmatprep.subr.bf16.mxu0 0
    %3333 = vmatpush1.bf16.msra.mxu0 0
    %3334 = vmatprep.subr.bf16.mxu0 0
    %3335 = vmatpush1.bf16.msra.mxu0 0
    %3336 = vmatprep.mubr.bf16.mxu0 0
    %3337 = vmatmul.mubr.bf16.gmra.mrb[0].mxu0 %v3302
    %v3338 = vpop.f32.mrb[0].mxu0
    %v3339 = vadd.f32 %v2920, %v3338
    %v3340 = vpop.f32.mrb[0].mxu0
    %v3341 = vpop.f32.mrb[0].mxu0
    %v3342 = vadd.f32 %v2935, %v3341
    %v3343 = vpop.f32.mrb[0].mxu0
    %3344 = vdwg.mxu0
    %v3347 = vcombine.high %v3339, %v3339
    %v3349 = vunpack.c.l.s4 1966171168
    %v3350 = vunpack.c.0.s8 %v3349
    %v3351 = vlaneseq
    %v3352 = vshrl.u32 %v3351, 7
    %v3353 = vsub.s32 %v3350, %v3352
    %v3354 = vrot.slane %v3339, %v3353
    %v3356 = vunpack.c.l.s4 1966171168
    %v3357 = vunpack.c.0.s8 %v3356
    %v3358 = vlaneseq
    %v3359 = vshrl.u32 %v3358, 7
    %v3360 = vsub.s32 %v3357, %v3359
    %v3361 = vrot.slane %v3347, %v3360
    %v3362 = vcombine.high %v3354, %v3354
    %v3363 = vcombine.high %v3361, %v3361
    %v3365 = vunpack.c.l.s4 1966171168
    %v3366 = vunpack.c.0.s8 %v3365
    %v3367 = vlaneseq
    %v3368 = vshrl.u32 %v3367, 7
    %v3369 = vsub.s32 %v3366, %v3368
    %v3370 = vrot.slane %v3354, %v3369
    %v3372 = vunpack.c.l.s4 1966171168
    %v3373 = vunpack.c.0.s8 %v3372
    %v3374 = vlaneseq
    %v3375 = vshrl.u32 %v3374, 7
    %v3376 = vsub.s32 %v3373, %v3375
    %v3377 = vrot.slane %v3361, %v3376
    %v3379 = vunpack.c.l.s4 1966171168
    %v3380 = vunpack.c.0.s8 %v3379
    %v3381 = vlaneseq
    %v3382 = vshrl.u32 %v3381, 7
    %v3383 = vsub.s32 %v3380, %v3382
    %v3384 = vrot.slane %v3362, %v3383
    %v3386 = vunpack.c.l.s4 1966171168
    %v3387 = vunpack.c.0.s8 %v3386
    %v3388 = vlaneseq
    %v3389 = vshrl.u32 %v3388, 7
    %v3390 = vsub.s32 %v3387, %v3389
    %v3391 = vrot.slane %v3363, %v3390
    %v3392 = vcombine.high %v3370, %v3370
    %v3393 = vcombine.high %v3377, %v3377
    %v3394 = vcombine.high %v3384, %v3384
    %v3395 = vcombine.high %v3391, %v3391
    %v3397 = vunpack.c.l.s4 1966171168
    %v3398 = vunpack.c.0.s8 %v3397
    %v3399 = vlaneseq
    %v3400 = vshrl.u32 %v3399, 7
    %v3401 = vsub.s32 %v3398, %v3400
    %v3402 = vrot.slane %v3342, %v3401
    %v3403 = vcombine.high %v3402, %v3402
    %v3405 = vunpack.c.l.s4 1966171168
    %v3406 = vunpack.c.0.s8 %v3405
    %v3407 = vlaneseq
    %v3408 = vshrl.u32 %v3407, 7
    %v3409 = vsub.s32 %v3406, %v3408
    %v3410 = vrot.slane %v3402, %v3409
    %v3412 = vunpack.c.l.s4 1966171168
    %v3413 = vunpack.c.0.s8 %v3412
    %v3414 = vlaneseq
    %v3415 = vshrl.u32 %v3414, 7
    %v3416 = vsub.s32 %v3413, %v3415
    %v3417 = vrot.slane %v3403, %v3416
    %vm3428 = vcmp.ge.f32.partialorder %v3370, 0.0
    %vm3429 = vcmp.ge.f32.partialorder %v3384, 0.0
    %vm3430 = vcmp.ge.f32.partialorder %v3392, 0.0
    %vm3431 = vcmp.ge.f32.partialorder %v3394, 0.0
    %vm3432 = vcmp.ge.f32.partialorder %v3377, 0.0
    %vm3433 = vcmp.ge.f32.partialorder %v3391, 0.0
    %vm3434 = vcmp.ge.f32.partialorder %v3393, 0.0
    %vm3435 = vcmp.ge.f32.partialorder %v3395, 0.0
    %vm3436 = vcmp.ge.f32.partialorder %v3410, 0.0
    %vm3437 = vcmp.ge.f32.partialorder %v3417, 0.0
    %v3438 = vmul.f32 %v3370, 0.01
    %v3439 = vmul.f32 %v3384, 0.01
    %v3440 = vmul.f32 %v3392, 0.01
    %v3441 = vmul.f32 %v3394, 0.01
    %v3442 = vmul.f32 %v3377, 0.01
    %v3443 = vmul.f32 %v3391, 0.01
    %v3444 = vmul.f32 %v3393, 0.01
    %v3445 = vmul.f32 %v3395, 0.01
    %v3446 = vmul.f32 %v3410, 0.01
    %v3447 = vmul.f32 %v3417, 0.01
    %v3448 = vsel %vm3428, %v3370, %v3438
    %v3449 = vsel %vm3429, %v3384, %v3439
    %v3450 = vsel %vm3430, %v3392, %v3440
    %v3451 = vsel %vm3431, %v3394, %v3441
    %v3452 = vsel %vm3432, %v3377, %v3442
    %v3453 = vsel %vm3433, %v3391, %v3443
    %v3454 = vsel %vm3434, %v3393, %v3444
    %v3455 = vsel %vm3435, %v3395, %v3445
    %v3456 = vsel %vm3436, %v3410, %v3446
    %v3457 = vsel %vm3437, %v3417, %v3447
    %v3458 = vmul.f32 %v3448, 2.0
    %v3459 = vmul.f32 %v3449, 2.0
    %v3460 = vmul.f32 %v3450, 2.0
    %v3461 = vmul.f32 %v3451, 2.0
    %v3462 = vmul.f32 %v3452, 2.0
    %v3463 = vmul.f32 %v3453, 2.0
    %v3464 = vmul.f32 %v3454, 2.0
    %v3465 = vmul.f32 %v3455, 2.0
    %v3466 = vmul.f32 %v3456, 2.0
    %v3467 = vmul.f32 %v3457, 2.0
    %v3478 = vcombine.low %v3458, %v3459
    %v3479 = vcombine.low %v3460, %v3461
    %v3481 = vunpack.c.l.s4 1966171168
    %v3482 = vunpack.c.0.s8 %v3481
    %v3483 = vlaneseq
    %v3484 = vshrl.u32 %v3483, 7
    %v3485 = vsub.s32 %v3482, %v3484
    %v3486 = vrot.slane %v3478, %v3485
    %v3488 = vunpack.c.l.s4 1966171168
    %v3489 = vunpack.c.0.s8 %v3488
    %v3490 = vlaneseq
    %v3491 = vshrl.u32 %v3490, 7
    %v3492 = vsub.s32 %v3489, %v3491
    %v3493 = vrot.slane %v3479, %v3492
    %v3495 = vunpack.c.l.s4 1966171168
    %v3496 = vunpack.c.0.s8 %v3495
    %v3497 = vlaneseq
    %v3498 = vshrl.u32 %v3497, 7
    %v3499 = vsub.s32 %v3496, %v3498
    %v3500 = vrot.slane %v3462, %v3499
    %v3501 = vcombine.low %v3486, %v3493
    %v3503 = vunpack.c.l.s4 1966171168
    %v3504 = vunpack.c.0.s8 %v3503
    %v3505 = vlaneseq
    %v3506 = vshrl.u32 %v3505, 7
    %v3507 = vsub.s32 %v3504, %v3506
    %v3508 = vrot.slane %v3501, %v3507
    %v3510 = vunpack.c.l.s4 1966171168
    %v3511 = vunpack.c.0.s8 %v3510
    %v3512 = vlaneseq
    %v3513 = vshrl.u32 %v3512, 7
    %v3514 = vsub.s32 %v3511, %v3513
    %v3515 = vrot.slane %v3500, %v3514
    %v3516 = vcombine.low %v3508, %v3515
    %v3517 = vcombine.low %v3463, %v3464
    %v3518 = vcombine.low %v3465, %v3466
    %v3520 = vunpack.c.l.s4 1966171168
    %v3521 = vunpack.c.0.s8 %v3520
    %v3522 = vlaneseq
    %v3523 = vshrl.u32 %v3522, 7
    %v3524 = vsub.s32 %v3521, %v3523
    %v3525 = vrot.slane %v3517, %v3524
    %v3527 = vunpack.c.l.s4 1966171168
    %v3528 = vunpack.c.0.s8 %v3527
    %v3529 = vlaneseq
    %v3530 = vshrl.u32 %v3529, 7
    %v3531 = vsub.s32 %v3528, %v3530
    %v3532 = vrot.slane %v3518, %v3531
    %v3534 = vunpack.c.l.s4 1966171168
    %v3535 = vunpack.c.0.s8 %v3534
    %v3536 = vlaneseq
    %v3537 = vshrl.u32 %v3536, 7
    %v3538 = vsub.s32 %v3535, %v3537
    %v3539 = vrot.slane %v3467, %v3538
    %v3540 = vcombine.low %v3525, %v3532
    %v3542 = vunpack.c.l.s4 1966171168
    %v3543 = vunpack.c.0.s8 %v3542
    %v3544 = vlaneseq
    %v3545 = vshrl.u32 %v3544, 7
    %v3546 = vsub.s32 %v3543, %v3545
    %v3547 = vrot.slane %v3540, %v3546
    %v3549 = vunpack.c.l.s4 1966171168
    %v3550 = vunpack.c.0.s8 %v3549
    %v3551 = vlaneseq
    %v3552 = vshrl.u32 %v3551, 7
    %v3553 = vsub.s32 %v3550, %v3552
    %v3554 = vrot.slane %v3539, %v3553
    %v3555 = vcombine.low %v3547, %v3554
    %v3558 = vadd.f32 %v2590, %v3516
    %v3559 = vadd.f32 %v2591, %v3555
    %v3560 = vpack.c.bf16 %v3558, %v3558
    %v3561 = vpack.c.bf16 %v3559, %v3559
    %v3565 = vunpack.c.l.s4 1966171168
    %v3566 = vunpack.c.0.s8 %v3565
    %v3567 = vlaneseq
    %v3568 = vshrl.u32 %v3567, 7
    %v3569 = vsub.s32 %v3566, %v3568
    %v3570 = vrot.slane %v3560, %v3569
    %v3571 = vcombine.high %v3570, %v3570
    %v3573 = vunpack.c.l.s4 1966171168
    %v3574 = vunpack.c.0.s8 %v3573
    %v3575 = vlaneseq
    %v3576 = vshrl.u32 %v3575, 7
    %v3577 = vsub.s32 %v3574, %v3576
    %v3578 = vrot.slane %v3570, %v3577
    %v3580 = vunpack.c.l.s4 1966171168
    %v3581 = vunpack.c.0.s8 %v3580
    %v3582 = vlaneseq
    %v3583 = vshrl.u32 %v3582, 7
    %v3584 = vsub.s32 %v3581, %v3583
    %v3585 = vrot.slane %v3571, %v3584
    %v3586 = vcombine.high %v3578, %v3578
    %v3588 = vunpack.c.l.s4 1966171168
    %v3589 = vunpack.c.0.s8 %v3588
    %v3590 = vlaneseq
    %v3591 = vshrl.u32 %v3590, 7
    %v3592 = vsub.s32 %v3589, %v3591
    %v3593 = vrot.slane %v3561, %v3592
    %v3594 = vcombine.high %v3593, %v3593
    %v3596 = vunpack.c.l.s4 1966171168
    %v3597 = vunpack.c.0.s8 %v3596
    %v3598 = vlaneseq
    %v3599 = vshrl.u32 %v3598, 7
    %v3600 = vsub.s32 %v3597, %v3599
    %v3601 = vrot.slane %v3593, %v3600
    %v3603 = vunpack.c.l.s4 1966171168
    %v3604 = vunpack.c.0.s8 %v3603
    %v3605 = vlaneseq
    %v3606 = vshrl.u32 %v3605, 7
    %v3607 = vsub.s32 %v3604, %v3606
    %v3608 = vrot.slane %v3594, %v3607
    %v3609 = vcombine.high %v3601, %v3601
    %v3610 = vunpack.i.l.s16 %v3578
    %v3611 = vunpack.i.h.s16 %v3578
    %v3612 = vunpack.i.l.s16 %v3585
    %v3613 = vunpack.i.h.s16 %v3585
    %v3614 = vunpack.i.l.s16 %v3586
    %v3615 = vunpack.i.l.s16 %v3601
    %v3616 = vunpack.i.h.s16 %v3601
    %v3617 = vunpack.i.l.s16 %v3608
    %v3618 = vunpack.i.h.s16 %v3608
    %v3619 = vunpack.i.l.s16 %v3609
    %v3620 = vpack.i.b16 %v3611, %v3610
    %v3621 = vpack.i.b16 %v3613, %v3612
    %v3622 = vpack.i.b16 %v3615, %v3614
    %v3623 = vpack.i.b16 %v3617, %v3616
    %v3624 = vpack.i.b16 %v3619, %v3618
    %v3625 = vcombine.low %v3620, %v3621
    %v3626 = vcombine.low %v3622, %v3623
    %v3628 = vunpack.c.l.s4 1966171168
    %v3629 = vunpack.c.0.s8 %v3628
    %v3630 = vlaneseq
    %v3631 = vshrl.u32 %v3630, 7
    %v3632 = vsub.s32 %v3629, %v3631
    %v3633 = vrot.slane %v3625, %v3632
    %v3635 = vunpack.c.l.s4 1966171168
    %v3636 = vunpack.c.0.s8 %v3635
    %v3637 = vlaneseq
    %v3638 = vshrl.u32 %v3637, 7
    %v3639 = vsub.s32 %v3636, %v3638
    %v3640 = vrot.slane %v3626, %v3639
    %v3642 = vunpack.c.l.s4 1966171168
    %v3643 = vunpack.c.0.s8 %v3642
    %v3644 = vlaneseq
    %v3645 = vshrl.u32 %v3644, 7
    %v3646 = vsub.s32 %v3643, %v3645
    %v3647 = vrot.slane %v3624, %v3646
    %v3648 = vcombine.low %v3633, %v3640
    %v3650 = vunpack.c.l.s4 1966171168
    %v3651 = vunpack.c.0.s8 %v3650
    %v3652 = vlaneseq
    %v3653 = vshrl.u32 %v3652, 7
    %v3654 = vsub.s32 %v3651, %v3653
    %v3655 = vrot.slane %v3648, %v3654
    %v3657 = vunpack.c.l.s4 1966171168
    %v3658 = vunpack.c.0.s8 %v3657
    %v3659 = vlaneseq
    %v3660 = vshrl.u32 %v3659, 7
    %v3661 = vsub.s32 %v3658, %v3660
    %v3662 = vrot.slane %v3647, %v3661
    %v3663 = vcombine.low %v3655, %v3662
    %v3665 = vsel %vm2363, %v3663, 0
    %3667 = vmatprep.subr.bf16.mxu0 0
    %3668 = vmatpush1.bf16.msra.mxu0 %v2868
    %3669 = vmatprep.subr.bf16.mxu0 0
    %3670 = vmatpush1.bf16.msra.mxu0 %v2869
    %3671 = vmatprep.subr.bf16.mxu0 0
    %3672 = vmatpush1.bf16.msra.mxu0 0
    %3673 = vmatprep.subr.bf16.mxu0 0
    %3674 = vmatpush1.bf16.msra.mxu0 0
    %3675 = vmatprep.subr.bf16.mxu0 0
    %3676 = vmatpush1.bf16.msra.mxu0 0
    %3677 = vmatprep.subr.bf16.mxu0 0
    %3678 = vmatpush1.bf16.msra.mxu0 0
    %3679 = vmatprep.subr.bf16.mxu0 0
    %3680 = vmatpush1.bf16.msra.mxu0 0
    %3681 = vmatprep.subr.bf16.mxu0 0
    %3682 = vmatpush1.bf16.msra.mxu0 0
    %3683 = vmatprep.subr.bf16.mxu0 0
    %3684 = vmatpush1.bf16.msra.mxu0 0
    %3685 = vmatprep.subr.bf16.mxu0 0
    %3686 = vmatpush1.bf16.msra.mxu0 0
    %3687 = vmatprep.subr.bf16.mxu0 0
    %3688 = vmatpush1.bf16.msra.mxu0 0
    %3689 = vmatprep.subr.bf16.mxu0 0
    %3690 = vmatpush1.bf16.msra.mxu0 0
    %3691 = vmatprep.subr.bf16.mxu0 0
    %3692 = vmatpush1.bf16.msra.mxu0 0
    %3693 = vmatprep.subr.bf16.mxu0 0
    %3694 = vmatpush1.bf16.msra.mxu0 0
    %3695 = vmatprep.subr.bf16.mxu0 0
    %3696 = vmatpush1.bf16.msra.mxu0 0
    %3697 = vmatprep.subr.bf16.mxu0 0
    %3698 = vmatpush1.bf16.msra.mxu0 0
    %3699 = vmatprep.mubr.bf16.mxu0 0
    %3700 = vmatmul.mubr.bf16.gmra.mrb[0].mxu0 %v3665
    %v3701 = vpop.f32.mrb[0].mxu0
    %v3702 = vadd.f32 %v2920, %v3701
    %v3703 = vpop.f32.mrb[0].mxu0
    %v3704 = vpop.f32.mrb[0].mxu0
    %v3705 = vadd.f32 %v2935, %v3704
    %v3706 = vpop.f32.mrb[0].mxu0
    %3707 = vdwg.mxu0
    %v3710 = vcombine.high %v3702, %v3702
    %v3712 = vunpack.c.l.s4 1966171168
    %v3713 = vunpack.c.0.s8 %v3712
    %v3714 = vlaneseq
    %v3715 = vshrl.u32 %v3714, 7
    %v3716 = vsub.s32 %v3713, %v3715
    %v3717 = vrot.slane %v3702, %v3716
    %v3719 = vunpack.c.l.s4 1966171168
    %v3720 = vunpack.c.0.s8 %v3719
    %v3721 = vlaneseq
    %v3722 = vshrl.u32 %v3721, 7
    %v3723 = vsub.s32 %v3720, %v3722
    %v3724 = vrot.slane %v3710, %v3723
    %v3725 = vcombine.high %v3717, %v3717
    %v3726 = vcombine.high %v3724, %v3724
    %v3728 = vunpack.c.l.s4 1966171168
    %v3729 = vunpack.c.0.s8 %v3728
    %v3730 = vlaneseq
    %v3731 = vshrl.u32 %v3730, 7
    %v3732 = vsub.s32 %v3729, %v3731
    %v3733 = vrot.slane %v3717, %v3732
    %v3735 = vunpack.c.l.s4 1966171168
    %v3736 = vunpack.c.0.s8 %v3735
    %v3737 = vlaneseq
    %v3738 = vshrl.u32 %v3737, 7
    %v3739 = vsub.s32 %v3736, %v3738
    %v3740 = vrot.slane %v3724, %v3739
    %v3742 = vunpack.c.l.s4 1966171168
    %v3743 = vunpack.c.0.s8 %v3742
    %v3744 = vlaneseq
    %v3745 = vshrl.u32 %v3744, 7
    %v3746 = vsub.s32 %v3743, %v3745
    %v3747 = vrot.slane %v3725, %v3746
    %v3749 = vunpack.c.l.s4 1966171168
    %v3750 = vunpack.c.0.s8 %v3749
    %v3751 = vlaneseq
    %v3752 = vshrl.u32 %v3751, 7
    %v3753 = vsub.s32 %v3750, %v3752
    %v3754 = vrot.slane %v3726, %v3753
    %v3755 = vcombine.high %v3733, %v3733
    %v3756 = vcombine.high %v3740, %v3740
    %v3757 = vcombine.high %v3747, %v3747
    %v3758 = vcombine.high %v3754, %v3754
    %v3760 = vunpack.c.l.s4 1966171168
    %v3761 = vunpack.c.0.s8 %v3760
    %v3762 = vlaneseq
    %v3763 = vshrl.u32 %v3762, 7
    %v3764 = vsub.s32 %v3761, %v3763
    %v3765 = vrot.slane %v3705, %v3764
    %v3766 = vcombine.high %v3765, %v3765
    %v3768 = vunpack.c.l.s4 1966171168
    %v3769 = vunpack.c.0.s8 %v3768
    %v3770 = vlaneseq
    %v3771 = vshrl.u32 %v3770, 7
    %v3772 = vsub.s32 %v3769, %v3771
    %v3773 = vrot.slane %v3765, %v3772
    %v3775 = vunpack.c.l.s4 1966171168
    %v3776 = vunpack.c.0.s8 %v3775
    %v3777 = vlaneseq
    %v3778 = vshrl.u32 %v3777, 7
    %v3779 = vsub.s32 %v3776, %v3778
    %v3780 = vrot.slane %v3766, %v3779
    %vm3791 = vcmp.ge.f32.partialorder %v3733, 0.0
    %vm3792 = vcmp.ge.f32.partialorder %v3747, 0.0
    %vm3793 = vcmp.ge.f32.partialorder %v3755, 0.0
    %vm3794 = vcmp.ge.f32.partialorder %v3757, 0.0
    %vm3795 = vcmp.ge.f32.partialorder %v3740, 0.0
    %vm3796 = vcmp.ge.f32.partialorder %v3754, 0.0
    %vm3797 = vcmp.ge.f32.partialorder %v3756, 0.0
    %vm3798 = vcmp.ge.f32.partialorder %v3758, 0.0
    %vm3799 = vcmp.ge.f32.partialorder %v3773, 0.0
    %vm3800 = vcmp.ge.f32.partialorder %v3780, 0.0
    %v3801 = vmul.f32 %v3733, 0.01
    %v3802 = vmul.f32 %v3747, 0.01
    %v3803 = vmul.f32 %v3755, 0.01
    %v3804 = vmul.f32 %v3757, 0.01
    %v3805 = vmul.f32 %v3740, 0.01
    %v3806 = vmul.f32 %v3754, 0.01
    %v3807 = vmul.f32 %v3756, 0.01
    %v3808 = vmul.f32 %v3758, 0.01
    %v3809 = vmul.f32 %v3773, 0.01
    %v3810 = vmul.f32 %v3780, 0.01
    %v3811 = vsel %vm3791, %v3733, %v3801
    %v3812 = vsel %vm3792, %v3747, %v3802
    %v3813 = vsel %vm3793, %v3755, %v3803
    %v3814 = vsel %vm3794, %v3757, %v3804
    %v3815 = vsel %vm3795, %v3740, %v3805
    %v3816 = vsel %vm3796, %v3754, %v3806
    %v3817 = vsel %vm3797, %v3756, %v3807
    %v3818 = vsel %vm3798, %v3758, %v3808
    %v3819 = vsel %vm3799, %v3773, %v3809
    %v3820 = vsel %vm3800, %v3780, %v3810
    %v3821 = vmul.f32 %v3811, 2.0
    %v3822 = vmul.f32 %v3812, 2.0
    %v3823 = vmul.f32 %v3813, 2.0
    %v3824 = vmul.f32 %v3814, 2.0
    %v3825 = vmul.f32 %v3815, 2.0
    %v3826 = vmul.f32 %v3816, 2.0
    %v3827 = vmul.f32 %v3817, 2.0
    %v3828 = vmul.f32 %v3818, 2.0
    %v3829 = vmul.f32 %v3819, 2.0
    %v3830 = vmul.f32 %v3820, 2.0
    %v3841 = vcombine.low %v3821, %v3822
    %v3842 = vcombine.low %v3823, %v3824
    %v3844 = vunpack.c.l.s4 1966171168
    %v3845 = vunpack.c.0.s8 %v3844
    %v3846 = vlaneseq
    %v3847 = vshrl.u32 %v3846, 7
    %v3848 = vsub.s32 %v3845, %v3847
    %v3849 = vrot.slane %v3841, %v3848
    %v3851 = vunpack.c.l.s4 1966171168
    %v3852 = vunpack.c.0.s8 %v3851
    %v3853 = vlaneseq
    %v3854 = vshrl.u32 %v3853, 7
    %v3855 = vsub.s32 %v3852, %v3854
    %v3856 = vrot.slane %v3842, %v3855
    %v3858 = vunpack.c.l.s4 1966171168
    %v3859 = vunpack.c.0.s8 %v3858
    %v3860 = vlaneseq
    %v3861 = vshrl.u32 %v3860, 7
    %v3862 = vsub.s32 %v3859, %v3861
    %v3863 = vrot.slane %v3825, %v3862
    %v3864 = vcombine.low %v3849, %v3856
    %v3866 = vunpack.c.l.s4 1966171168
    %v3867 = vunpack.c.0.s8 %v3866
    %v3868 = vlaneseq
    %v3869 = vshrl.u32 %v3868, 7
    %v3870 = vsub.s32 %v3867, %v3869
    %v3871 = vrot.slane %v3864, %v3870
    %v3873 = vunpack.c.l.s4 1966171168
    %v3874 = vunpack.c.0.s8 %v3873
    %v3875 = vlaneseq
    %v3876 = vshrl.u32 %v3875, 7
    %v3877 = vsub.s32 %v3874, %v3876
    %v3878 = vrot.slane %v3863, %v3877
    %v3879 = vcombine.low %v3871, %v3878
    %v3880 = vcombine.low %v3826, %v3827
    %v3881 = vcombine.low %v3828, %v3829
    %v3883 = vunpack.c.l.s4 1966171168
    %v3884 = vunpack.c.0.s8 %v3883
    %v3885 = vlaneseq
    %v3886 = vshrl.u32 %v3885, 7
    %v3887 = vsub.s32 %v3884, %v3886
    %v3888 = vrot.slane %v3880, %v3887
    %v3890 = vunpack.c.l.s4 1966171168
    %v3891 = vunpack.c.0.s8 %v3890
    %v3892 = vlaneseq
    %v3893 = vshrl.u32 %v3892, 7
    %v3894 = vsub.s32 %v3891, %v3893
    %v3895 = vrot.slane %v3881, %v3894
    %v3897 = vunpack.c.l.s4 1966171168
    %v3898 = vunpack.c.0.s8 %v3897
    %v3899 = vlaneseq
    %v3900 = vshrl.u32 %v3899, 7
    %v3901 = vsub.s32 %v3898, %v3900
    %v3902 = vrot.slane %v3830, %v3901
    %v3903 = vcombine.low %v3888, %v3895
    %v3905 = vunpack.c.l.s4 1966171168
    %v3906 = vunpack.c.0.s8 %v3905
    %v3907 = vlaneseq
    %v3908 = vshrl.u32 %v3907, 7
    %v3909 = vsub.s32 %v3906, %v3908
    %v3910 = vrot.slane %v3903, %v3909
    %v3912 = vunpack.c.l.s4 1966171168
    %v3913 = vunpack.c.0.s8 %v3912
    %v3914 = vlaneseq
    %v3915 = vshrl.u32 %v3914, 7
    %v3916 = vsub.s32 %v3913, %v3915
    %v3917 = vrot.slane %v3902, %v3916
    %v3918 = vcombine.low %v3910, %v3917
    %v3921 = vadd.f32 %v2637, %v3879
    %v3922 = vadd.f32 %v2638, %v3918
    %v3923 = vpack.c.bf16 %v3921, %v3921
    %v3924 = vpack.c.bf16 %v3922, %v3922
    %v3928 = vunpack.c.l.s4 1966171168
    %v3929 = vunpack.c.0.s8 %v3928
    %v3930 = vlaneseq
    %v3931 = vshrl.u32 %v3930, 7
    %v3932 = vsub.s32 %v3929, %v3931
    %v3933 = vrot.slane %v3923, %v3932
    %v3934 = vcombine.high %v3933, %v3933
    %v3936 = vunpack.c.l.s4 1966171168
    %v3937 = vunpack.c.0.s8 %v3936
    %v3938 = vlaneseq
    %v3939 = vshrl.u32 %v3938, 7
    %v3940 = vsub.s32 %v3937, %v3939
    %v3941 = vrot.slane %v3933, %v3940
    %v3943 = vunpack.c.l.s4 1966171168
    %v3944 = vunpack.c.0.s8 %v3943
    %v3945 = vlaneseq
    %v3946 = vshrl.u32 %v3945, 7
    %v3947 = vsub.s32 %v3944, %v3946
    %v3948 = vrot.slane %v3934, %v3947
    %v3949 = vcombine.high %v3941, %v3941
    %v3951 = vunpack.c.l.s4 1966171168
    %v3952 = vunpack.c.0.s8 %v3951
    %v3953 = vlaneseq
    %v3954 = vshrl.u32 %v3953, 7
    %v3955 = vsub.s32 %v3952, %v3954
    %v3956 = vrot.slane %v3924, %v3955
    %v3957 = vcombine.high %v3956, %v3956
    %v3959 = vunpack.c.l.s4 1966171168
    %v3960 = vunpack.c.0.s8 %v3959
    %v3961 = vlaneseq
    %v3962 = vshrl.u32 %v3961, 7
    %v3963 = vsub.s32 %v3960, %v3962
    %v3964 = vrot.slane %v3956, %v3963
    %v3966 = vunpack.c.l.s4 1966171168
    %v3967 = vunpack.c.0.s8 %v3966
    %v3968 = vlaneseq
    %v3969 = vshrl.u32 %v3968, 7
    %v3970 = vsub.s32 %v3967, %v3969
    %v3971 = vrot.slane %v3957, %v3970
    %v3972 = vcombine.high %v3964, %v3964
    %v3973 = vunpack.i.l.s16 %v3941
    %v3974 = vunpack.i.h.s16 %v3941
    %v3975 = vunpack.i.l.s16 %v3948
    %v3976 = vunpack.i.h.s16 %v3948
    %v3977 = vunpack.i.l.s16 %v3949
    %v3978 = vunpack.i.l.s16 %v3964
    %v3979 = vunpack.i.h.s16 %v3964
    %v3980 = vunpack.i.l.s16 %v3971
    %v3981 = vunpack.i.h.s16 %v3971
    %v3982 = vunpack.i.l.s16 %v3972
    %v3983 = vpack.i.b16 %v3974, %v3973
    %v3984 = vpack.i.b16 %v3976, %v3975
    %v3985 = vpack.i.b16 %v3978, %v3977
    %v3986 = vpack.i.b16 %v3980, %v3979
    %v3987 = vpack.i.b16 %v3982, %v3981
    %v3988 = vcombine.low %v3983, %v3984
    %v3989 = vcombine.low %v3985, %v3986
    %v3991 = vunpack.c.l.s4 1966171168
    %v3992 = vunpack.c.0.s8 %v3991
    %v3993 = vlaneseq
    %v3994 = vshrl.u32 %v3993, 7
    %v3995 = vsub.s32 %v3992, %v3994
    %v3996 = vrot.slane %v3988, %v3995
    %v3998 = vunpack.c.l.s4 1966171168
    %v3999 = vunpack.c.0.s8 %v3998
    %v4000 = vlaneseq
    %v4001 = vshrl.u32 %v4000, 7
    %v4002 = vsub.s32 %v3999, %v4001
    %v4003 = vrot.slane %v3989, %v4002
    %v4005 = vunpack.c.l.s4 1966171168
    %v4006 = vunpack.c.0.s8 %v4005
    %v4007 = vlaneseq
    %v4008 = vshrl.u32 %v4007, 7
    %v4009 = vsub.s32 %v4006, %v4008
    %v4010 = vrot.slane %v3987, %v4009
    %v4011 = vcombine.low %v3996, %v4003
    %v4013 = vunpack.c.l.s4 1966171168
    %v4014 = vunpack.c.0.s8 %v4013
    %v4015 = vlaneseq
    %v4016 = vshrl.u32 %v4015, 7
    %v4017 = vsub.s32 %v4014, %v4016
    %v4018 = vrot.slane %v4011, %v4017
    %v4020 = vunpack.c.l.s4 1966171168
    %v4021 = vunpack.c.0.s8 %v4020
    %v4022 = vlaneseq
    %v4023 = vshrl.u32 %v4022, 7
    %v4024 = vsub.s32 %v4021, %v4023
    %v4025 = vrot.slane %v4010, %v4024
    %v4026 = vcombine.low %v4018, %v4025
    %v4028 = vsel %vm2363, %v4026, 0
    %4030 = vmatprep.subr.bf16.mxu0 0
    %4031 = vmatpush1.bf16.msra.mxu0 %v2868
    %4032 = vmatprep.subr.bf16.mxu0 0
    %4033 = vmatpush1.bf16.msra.mxu0 %v2869
    %4034 = vmatprep.subr.bf16.mxu0 0
    %4035 = vmatpush1.bf16.msra.mxu0 0
    %4036 = vmatprep.subr.bf16.mxu0 0
    %4037 = vmatpush1.bf16.msra.mxu0 0
    %4038 = vmatprep.subr.bf16.mxu0 0
    %4039 = vmatpush1.bf16.msra.mxu0 0
    %4040 = vmatprep.subr.bf16.mxu0 0
    %4041 = vmatpush1.bf16.msra.mxu0 0
    %4042 = vmatprep.subr.bf16.mxu0 0
    %4043 = vmatpush1.bf16.msra.mxu0 0
    %4044 = vmatprep.subr.bf16.mxu0 0
    %4045 = vmatpush1.bf16.msra.mxu0 0
    %4046 = vmatprep.subr.bf16.mxu0 0
    %4047 = vmatpush1.bf16.msra.mxu0 0
    %4048 = vmatprep.subr.bf16.mxu0 0
    %4049 = vmatpush1.bf16.msra.mxu0 0
    %4050 = vmatprep.subr.bf16.mxu0 0
    %4051 = vmatpush1.bf16.msra.mxu0 0
    %4052 = vmatprep.subr.bf16.mxu0 0
    %4053 = vmatpush1.bf16.msra.mxu0 0
    %4054 = vmatprep.subr.bf16.mxu0 0
    %4055 = vmatpush1.bf16.msra.mxu0 0
    %4056 = vmatprep.subr.bf16.mxu0 0
    %4057 = vmatpush1.bf16.msra.mxu0 0
    %4058 = vmatprep.subr.bf16.mxu0 0
    %4059 = vmatpush1.bf16.msra.mxu0 0
    %4060 = vmatprep.subr.bf16.mxu0 0
    %4061 = vmatpush1.bf16.msra.mxu0 0
    %4062 = vmatprep.mubr.bf16.mxu0 0
    %4063 = vmatmul.mubr.bf16.gmra.mrb[0].mxu0 %v4028
    %v4064 = vpop.f32.mrb[0].mxu0
    %v4065 = vadd.f32 %v2920, %v4064
    %v4066 = vpop.f32.mrb[0].mxu0
    %v4067 = vpop.f32.mrb[0].mxu0
    %v4068 = vadd.f32 %v2935, %v4067
    %v4069 = vpop.f32.mrb[0].mxu0
    %4070 = vdwg.mxu0
    %v4073 = vcombine.high %v4065, %v4065
    %v4075 = vunpack.c.l.s4 1966171168
    %v4076 = vunpack.c.0.s8 %v4075
    %v4077 = vlaneseq
    %v4078 = vshrl.u32 %v4077, 7
    %v4079 = vsub.s32 %v4076, %v4078
    %v4080 = vrot.slane %v4065, %v4079
    %v4082 = vunpack.c.l.s4 1966171168
    %v4083 = vunpack.c.0.s8 %v4082
    %v4084 = vlaneseq
    %v4085 = vshrl.u32 %v4084, 7
    %v4086 = vsub.s32 %v4083, %v4085
    %v4087 = vrot.slane %v4073, %v4086
    %v4088 = vcombine.high %v4080, %v4080
    %v4089 = vcombine.high %v4087, %v4087
    %v4091 = vunpack.c.l.s4 1966171168
    %v4092 = vunpack.c.0.s8 %v4091
    %v4093 = vlaneseq
    %v4094 = vshrl.u32 %v4093, 7
    %v4095 = vsub.s32 %v4092, %v4094
    %v4096 = vrot.slane %v4080, %v4095
    %v4098 = vunpack.c.l.s4 1966171168
    %v4099 = vunpack.c.0.s8 %v4098
    %v4100 = vlaneseq
    %v4101 = vshrl.u32 %v4100, 7
    %v4102 = vsub.s32 %v4099, %v4101
    %v4103 = vrot.slane %v4087, %v4102
    %v4105 = vunpack.c.l.s4 1966171168
    %v4106 = vunpack.c.0.s8 %v4105
    %v4107 = vlaneseq
    %v4108 = vshrl.u32 %v4107, 7
    %v4109 = vsub.s32 %v4106, %v4108
    %v4110 = vrot.slane %v4088, %v4109
    %v4112 = vunpack.c.l.s4 1966171168
    %v4113 = vunpack.c.0.s8 %v4112
    %v4114 = vlaneseq
    %v4115 = vshrl.u32 %v4114, 7
    %v4116 = vsub.s32 %v4113, %v4115
    %v4117 = vrot.slane %v4089, %v4116
    %v4118 = vcombine.high %v4096, %v4096
    %v4119 = vcombine.high %v4103, %v4103
    %v4120 = vcombine.high %v4110, %v4110
    %v4121 = vcombine.high %v4117, %v4117
    %v4123 = vunpack.c.l.s4 1966171168
    %v4124 = vunpack.c.0.s8 %v4123
    %v4125 = vlaneseq
    %v4126 = vshrl.u32 %v4125, 7
    %v4127 = vsub.s32 %v4124, %v4126
    %v4128 = vrot.slane %v4068, %v4127
    %v4129 = vcombine.high %v4128, %v4128
    %v4131 = vunpack.c.l.s4 1966171168
    %v4132 = vunpack.c.0.s8 %v4131
    %v4133 = vlaneseq
    %v4134 = vshrl.u32 %v4133, 7
    %v4135 = vsub.s32 %v4132, %v4134
    %v4136 = vrot.slane %v4128, %v4135
    %v4138 = vunpack.c.l.s4 1966171168
    %v4139 = vunpack.c.0.s8 %v4138
    %v4140 = vlaneseq
    %v4141 = vshrl.u32 %v4140, 7
    %v4142 = vsub.s32 %v4139, %v4141
    %v4143 = vrot.slane %v4129, %v4142
    %vm4154 = vcmp.ge.f32.partialorder %v4096, 0.0
    %vm4155 = vcmp.ge.f32.partialorder %v4110, 0.0
    %vm4156 = vcmp.ge.f32.partialorder %v4118, 0.0
    %vm4157 = vcmp.ge.f32.partialorder %v4120, 0.0
    %vm4158 = vcmp.ge.f32.partialorder %v4103, 0.0
    %vm4159 = vcmp.ge.f32.partialorder %v4117, 0.0
    %vm4160 = vcmp.ge.f32.partialorder %v4119, 0.0
    %vm4161 = vcmp.ge.f32.partialorder %v4121, 0.0
    %vm4162 = vcmp.ge.f32.partialorder %v4136, 0.0
    %vm4163 = vcmp.ge.f32.partialorder %v4143, 0.0
    %v4164 = vmul.f32 %v4096, 0.01
    %v4165 = vmul.f32 %v4110, 0.01
    %v4166 = vmul.f32 %v4118, 0.01
    %v4167 = vmul.f32 %v4120, 0.01
    %v4168 = vmul.f32 %v4103, 0.01
    %v4169 = vmul.f32 %v4117, 0.01
    %v4170 = vmul.f32 %v4119, 0.01
    %v4171 = vmul.f32 %v4121, 0.01
    %v4172 = vmul.f32 %v4136, 0.01
    %v4173 = vmul.f32 %v4143, 0.01
    %v4174 = vsel %vm4154, %v4096, %v4164
    %v4175 = vsel %vm4155, %v4110, %v4165
    %v4176 = vsel %vm4156, %v4118, %v4166
    %v4177 = vsel %vm4157, %v4120, %v4167
    %v4178 = vsel %vm4158, %v4103, %v4168
    %v4179 = vsel %vm4159, %v4117, %v4169
    %v4180 = vsel %vm4160, %v4119, %v4170
    %v4181 = vsel %vm4161, %v4121, %v4171
    %v4182 = vsel %vm4162, %v4136, %v4172
    %v4183 = vsel %vm4163, %v4143, %v4173
    %v4184 = vmul.f32 %v4174, 2.0
    %v4185 = vmul.f32 %v4175, 2.0
    %v4186 = vmul.f32 %v4176, 2.0
    %v4187 = vmul.f32 %v4177, 2.0
    %v4188 = vmul.f32 %v4178, 2.0
    %v4189 = vmul.f32 %v4179, 2.0
    %v4190 = vmul.f32 %v4180, 2.0
    %v4191 = vmul.f32 %v4181, 2.0
    %v4192 = vmul.f32 %v4182, 2.0
    %v4193 = vmul.f32 %v4183, 2.0
    %v4204 = vcombine.low %v4184, %v4185
    %v4205 = vcombine.low %v4186, %v4187
    %v4207 = vunpack.c.l.s4 1966171168
    %v4208 = vunpack.c.0.s8 %v4207
    %v4209 = vlaneseq
    %v4210 = vshrl.u32 %v4209, 7
    %v4211 = vsub.s32 %v4208, %v4210
    %v4212 = vrot.slane %v4204, %v4211
    %v4214 = vunpack.c.l.s4 1966171168
    %v4215 = vunpack.c.0.s8 %v4214
    %v4216 = vlaneseq
    %v4217 = vshrl.u32 %v4216, 7
    %v4218 = vsub.s32 %v4215, %v4217
    %v4219 = vrot.slane %v4205, %v4218
    %v4221 = vunpack.c.l.s4 1966171168
    %v4222 = vunpack.c.0.s8 %v4221
    %v4223 = vlaneseq
    %v4224 = vshrl.u32 %v4223, 7
    %v4225 = vsub.s32 %v4222, %v4224
    %v4226 = vrot.slane %v4188, %v4225
    %v4227 = vcombine.low %v4212, %v4219
    %v4229 = vunpack.c.l.s4 1966171168
    %v4230 = vunpack.c.0.s8 %v4229
    %v4231 = vlaneseq
    %v4232 = vshrl.u32 %v4231, 7
    %v4233 = vsub.s32 %v4230, %v4232
    %v4234 = vrot.slane %v4227, %v4233
    %v4236 = vunpack.c.l.s4 1966171168
    %v4237 = vunpack.c.0.s8 %v4236
    %v4238 = vlaneseq
    %v4239 = vshrl.u32 %v4238, 7
    %v4240 = vsub.s32 %v4237, %v4239
    %v4241 = vrot.slane %v4226, %v4240
    %v4242 = vcombine.low %v4234, %v4241
    %v4243 = vcombine.low %v4189, %v4190
    %v4244 = vcombine.low %v4191, %v4192
    %v4246 = vunpack.c.l.s4 1966171168
    %v4247 = vunpack.c.0.s8 %v4246
    %v4248 = vlaneseq
    %v4249 = vshrl.u32 %v4248, 7
    %v4250 = vsub.s32 %v4247, %v4249
    %v4251 = vrot.slane %v4243, %v4250
    %v4253 = vunpack.c.l.s4 1966171168
    %v4254 = vunpack.c.0.s8 %v4253
    %v4255 = vlaneseq
    %v4256 = vshrl.u32 %v4255, 7
    %v4257 = vsub.s32 %v4254, %v4256
    %v4258 = vrot.slane %v4244, %v4257
    %v4260 = vunpack.c.l.s4 1966171168
    %v4261 = vunpack.c.0.s8 %v4260
    %v4262 = vlaneseq
    %v4263 = vshrl.u32 %v4262, 7
    %v4264 = vsub.s32 %v4261, %v4263
    %v4265 = vrot.slane %v4193, %v4264
    %v4266 = vcombine.low %v4251, %v4258
    %v4268 = vunpack.c.l.s4 1966171168
    %v4269 = vunpack.c.0.s8 %v4268
    %v4270 = vlaneseq
    %v4271 = vshrl.u32 %v4270, 7
    %v4272 = vsub.s32 %v4269, %v4271
    %v4273 = vrot.slane %v4266, %v4272
    %v4275 = vunpack.c.l.s4 1966171168
    %v4276 = vunpack.c.0.s8 %v4275
    %v4277 = vlaneseq
    %v4278 = vshrl.u32 %v4277, 7
    %v4279 = vsub.s32 %v4276, %v4278
    %v4280 = vrot.slane %v4265, %v4279
    %v4281 = vcombine.low %v4273, %v4280
    %v4284 = vadd.f32 %v2703, %v4242
    %v4285 = vadd.f32 %v2704, %v4281
    %v4286 = vpack.c.bf16 %v4284, %v4284
    %v4287 = vpack.c.bf16 %v4285, %v4285
    %v4291 = vunpack.c.l.s4 1966171168
    %v4292 = vunpack.c.0.s8 %v4291
    %v4293 = vlaneseq
    %v4294 = vshrl.u32 %v4293, 7
    %v4295 = vsub.s32 %v4292, %v4294
    %v4296 = vrot.slane %v4286, %v4295
    %v4297 = vcombine.high %v4296, %v4296
    %v4299 = vunpack.c.l.s4 1966171168
    %v4300 = vunpack.c.0.s8 %v4299
    %v4301 = vlaneseq
    %v4302 = vshrl.u32 %v4301, 7
    %v4303 = vsub.s32 %v4300, %v4302
    %v4304 = vrot.slane %v4296, %v4303
    %v4306 = vunpack.c.l.s4 1966171168
    %v4307 = vunpack.c.0.s8 %v4306
    %v4308 = vlaneseq
    %v4309 = vshrl.u32 %v4308, 7
    %v4310 = vsub.s32 %v4307, %v4309
    %v4311 = vrot.slane %v4297, %v4310
    %v4312 = vcombine.high %v4304, %v4304
    %v4314 = vunpack.c.l.s4 1966171168
    %v4315 = vunpack.c.0.s8 %v4314
    %v4316 = vlaneseq
    %v4317 = vshrl.u32 %v4316, 7
    %v4318 = vsub.s32 %v4315, %v4317
    %v4319 = vrot.slane %v4287, %v4318
    %v4320 = vcombine.high %v4319, %v4319
    %v4322 = vunpack.c.l.s4 1966171168
    %v4323 = vunpack.c.0.s8 %v4322
    %v4324 = vlaneseq
    %v4325 = vshrl.u32 %v4324, 7
    %v4326 = vsub.s32 %v4323, %v4325
    %v4327 = vrot.slane %v4319, %v4326
    %v4329 = vunpack.c.l.s4 1966171168
    %v4330 = vunpack.c.0.s8 %v4329
    %v4331 = vlaneseq
    %v4332 = vshrl.u32 %v4331, 7
    %v4333 = vsub.s32 %v4330, %v4332
    %v4334 = vrot.slane %v4320, %v4333
    %v4335 = vcombine.high %v4327, %v4327
    %v4336 = vunpack.i.l.s16 %v4304
    %v4337 = vunpack.i.h.s16 %v4304
    %v4338 = vunpack.i.l.s16 %v4311
    %v4339 = vunpack.i.h.s16 %v4311
    %v4340 = vunpack.i.l.s16 %v4312
    %v4341 = vunpack.i.l.s16 %v4327
    %v4342 = vunpack.i.h.s16 %v4327
    %v4343 = vunpack.i.l.s16 %v4334
    %v4344 = vunpack.i.h.s16 %v4334
    %v4345 = vunpack.i.l.s16 %v4335
    %v4346 = vpack.i.b16 %v4337, %v4336
    %v4347 = vpack.i.b16 %v4339, %v4338
    %v4348 = vpack.i.b16 %v4341, %v4340
    %v4349 = vpack.i.b16 %v4343, %v4342
    %v4350 = vpack.i.b16 %v4345, %v4344
    %v4351 = vcombine.low %v4346, %v4347
    %v4352 = vcombine.low %v4348, %v4349
    %v4354 = vunpack.c.l.s4 1966171168
    %v4355 = vunpack.c.0.s8 %v4354
    %v4356 = vlaneseq
    %v4357 = vshrl.u32 %v4356, 7
    %v4358 = vsub.s32 %v4355, %v4357
    %v4359 = vrot.slane %v4351, %v4358
    %v4361 = vunpack.c.l.s4 1966171168
    %v4362 = vunpack.c.0.s8 %v4361
    %v4363 = vlaneseq
    %v4364 = vshrl.u32 %v4363, 7
    %v4365 = vsub.s32 %v4362, %v4364
    %v4366 = vrot.slane %v4352, %v4365
    %v4368 = vunpack.c.l.s4 1966171168
    %v4369 = vunpack.c.0.s8 %v4368
    %v4370 = vlaneseq
    %v4371 = vshrl.u32 %v4370, 7
    %v4372 = vsub.s32 %v4369, %v4371
    %v4373 = vrot.slane %v4350, %v4372
    %v4374 = vcombine.low %v4359, %v4366
    %v4376 = vunpack.c.l.s4 1966171168
    %v4377 = vunpack.c.0.s8 %v4376
    %v4378 = vlaneseq
    %v4379 = vshrl.u32 %v4378, 7
    %v4380 = vsub.s32 %v4377, %v4379
    %v4381 = vrot.slane %v4374, %v4380
    %v4383 = vunpack.c.l.s4 1966171168
    %v4384 = vunpack.c.0.s8 %v4383
    %v4385 = vlaneseq
    %v4386 = vshrl.u32 %v4385, 7
    %v4387 = vsub.s32 %v4384, %v4386
    %v4388 = vrot.slane %v4373, %v4387
    %v4389 = vcombine.low %v4381, %v4388
    %v4391 = vsel %vm2363, %v4389, 0
    %4393 = vmatprep.subr.bf16.mxu0 0
    %4394 = vmatpush1.bf16.msra.mxu0 %v2868
    %4395 = vmatprep.subr.bf16.mxu0 0
    %4396 = vmatpush1.bf16.msra.mxu0 %v2869
    %4397 = vmatprep.subr.bf16.mxu0 0
    %4398 = vmatpush1.bf16.msra.mxu0 0
    %4399 = vmatprep.subr.bf16.mxu0 0
    %4400 = vmatpush1.bf16.msra.mxu0 0
    %4401 = vmatprep.subr.bf16.mxu0 0
    %4402 = vmatpush1.bf16.msra.mxu0 0
    %4403 = vmatprep.subr.bf16.mxu0 0
    %4404 = vmatpush1.bf16.msra.mxu0 0
    %4405 = vmatprep.subr.bf16.mxu0 0
    %4406 = vmatpush1.bf16.msra.mxu0 0
    %4407 = vmatprep.subr.bf16.mxu0 0
    %4408 = vmatpush1.bf16.msra.mxu0 0
    %4409 = vmatprep.subr.bf16.mxu0 0
    %4410 = vmatpush1.bf16.msra.mxu0 0
    %4411 = vmatprep.subr.bf16.mxu0 0
    %4412 = vmatpush1.bf16.msra.mxu0 0
    %4413 = vmatprep.subr.bf16.mxu0 0
    %4414 = vmatpush1.bf16.msra.mxu0 0
    %4415 = vmatprep.subr.bf16.mxu0 0
    %4416 = vmatpush1.bf16.msra.mxu0 0
    %4417 = vmatprep.subr.bf16.mxu0 0
    %4418 = vmatpush1.bf16.msra.mxu0 0
    %4419 = vmatprep.subr.bf16.mxu0 0
    %4420 = vmatpush1.bf16.msra.mxu0 0
    %4421 = vmatprep.subr.bf16.mxu0 0
    %4422 = vmatpush1.bf16.msra.mxu0 0
    %4423 = vmatprep.subr.bf16.mxu0 0
    %4424 = vmatpush1.bf16.msra.mxu0 0
    %4425 = vmatprep.mubr.bf16.mxu0 0
    %4426 = vmatmul.mubr.bf16.gmra.mrb[0].mxu0 %v4391
    %v4427 = vpop.f32.mrb[0].mxu0
    %v4428 = vadd.f32 %v2920, %v4427
    %v4429 = vpop.f32.mrb[0].mxu0
    %v4430 = vpop.f32.mrb[0].mxu0
    %v4431 = vadd.f32 %v2935, %v4430
    %v4432 = vpop.f32.mrb[0].mxu0
    %4433 = vdwg.mxu0
    %v4436 = vcombine.high %v4428, %v4428
    %v4438 = vunpack.c.l.s4 1966171168
    %v4439 = vunpack.c.0.s8 %v4438
    %v4440 = vlaneseq
    %v4441 = vshrl.u32 %v4440, 7
    %v4442 = vsub.s32 %v4439, %v4441
    %v4443 = vrot.slane %v4428, %v4442
    %v4445 = vunpack.c.l.s4 1966171168
    %v4446 = vunpack.c.0.s8 %v4445
    %v4447 = vlaneseq
    %v4448 = vshrl.u32 %v4447, 7
    %v4449 = vsub.s32 %v4446, %v4448
    %v4450 = vrot.slane %v4436, %v4449
    %v4451 = vcombine.high %v4443, %v4443
    %v4452 = vcombine.high %v4450, %v4450
    %v4454 = vunpack.c.l.s4 1966171168
    %v4455 = vunpack.c.0.s8 %v4454
    %v4456 = vlaneseq
    %v4457 = vshrl.u32 %v4456, 7
    %v4458 = vsub.s32 %v4455, %v4457
    %v4459 = vrot.slane %v4443, %v4458
    %v4461 = vunpack.c.l.s4 1966171168
    %v4462 = vunpack.c.0.s8 %v4461
    %v4463 = vlaneseq
    %v4464 = vshrl.u32 %v4463, 7
    %v4465 = vsub.s32 %v4462, %v4464
    %v4466 = vrot.slane %v4450, %v4465
    %v4468 = vunpack.c.l.s4 1966171168
    %v4469 = vunpack.c.0.s8 %v4468
    %v4470 = vlaneseq
    %v4471 = vshrl.u32 %v4470, 7
    %v4472 = vsub.s32 %v4469, %v4471
    %v4473 = vrot.slane %v4451, %v4472
    %v4475 = vunpack.c.l.s4 1966171168
    %v4476 = vunpack.c.0.s8 %v4475
    %v4477 = vlaneseq
    %v4478 = vshrl.u32 %v4477, 7
    %v4479 = vsub.s32 %v4476, %v4478
    %v4480 = vrot.slane %v4452, %v4479
    %v4481 = vcombine.high %v4459, %v4459
    %v4482 = vcombine.high %v4466, %v4466
    %v4483 = vcombine.high %v4473, %v4473
    %v4484 = vcombine.high %v4480, %v4480
    %v4486 = vunpack.c.l.s4 1966171168
    %v4487 = vunpack.c.0.s8 %v4486
    %v4488 = vlaneseq
    %v4489 = vshrl.u32 %v4488, 7
    %v4490 = vsub.s32 %v4487, %v4489
    %v4491 = vrot.slane %v4431, %v4490
    %v4492 = vcombine.high %v4491, %v4491
    %v4494 = vunpack.c.l.s4 1966171168
    %v4495 = vunpack.c.0.s8 %v4494
    %v4496 = vlaneseq
    %v4497 = vshrl.u32 %v4496, 7
    %v4498 = vsub.s32 %v4495, %v4497
    %v4499 = vrot.slane %v4491, %v4498
    %v4501 = vunpack.c.l.s4 1966171168
    %v4502 = vunpack.c.0.s8 %v4501
    %v4503 = vlaneseq
    %v4504 = vshrl.u32 %v4503, 7
    %v4505 = vsub.s32 %v4502, %v4504
    %v4506 = vrot.slane %v4492, %v4505
    %vm4517 = vcmp.ge.f32.partialorder %v4459, 0.0
    %vm4518 = vcmp.ge.f32.partialorder %v4473, 0.0
    %vm4519 = vcmp.ge.f32.partialorder %v4481, 0.0
    %vm4520 = vcmp.ge.f32.partialorder %v4483, 0.0
    %vm4521 = vcmp.ge.f32.partialorder %v4466, 0.0
    %vm4522 = vcmp.ge.f32.partialorder %v4480, 0.0
    %vm4523 = vcmp.ge.f32.partialorder %v4482, 0.0
    %vm4524 = vcmp.ge.f32.partialorder %v4484, 0.0
    %vm4525 = vcmp.ge.f32.partialorder %v4499, 0.0
    %vm4526 = vcmp.ge.f32.partialorder %v4506, 0.0
    %v4527 = vmul.f32 %v4459, 0.01
    %v4528 = vmul.f32 %v4473, 0.01
    %v4529 = vmul.f32 %v4481, 0.01
    %v4530 = vmul.f32 %v4483, 0.01
    %v4531 = vmul.f32 %v4466, 0.01
    %v4532 = vmul.f32 %v4480, 0.01
    %v4533 = vmul.f32 %v4482, 0.01
    %v4534 = vmul.f32 %v4484, 0.01
    %v4535 = vmul.f32 %v4499, 0.01
    %v4536 = vmul.f32 %v4506, 0.01
    %v4537 = vsel %vm4517, %v4459, %v4527
    %v4538 = vsel %vm4518, %v4473, %v4528
    %v4539 = vsel %vm4519, %v4481, %v4529
    %v4540 = vsel %vm4520, %v4483, %v4530
    %v4541 = vsel %vm4521, %v4466, %v4531
    %v4542 = vsel %vm4522, %v4480, %v4532
    %v4543 = vsel %vm4523, %v4482, %v4533
    %v4544 = vsel %vm4524, %v4484, %v4534
    %v4545 = vsel %vm4525, %v4499, %v4535
    %v4546 = vsel %vm4526, %v4506, %v4536
    %v4547 = vpack.c.bf16 %v2639, %v2639
    %v4548 = vld [vmem:[%s16] sm:$0xf]
    %v4549 = vld [vmem:[%s16 + $0x4] sm:$0xf]
    %v4550 = vld [vmem:[%s16 + $0x8] sm:$0xf]
    %v4551 = vld [vmem:[%s16 + $0xc] sm:$0xf]
    %v4556 = vunpack.c.l.b16 %v4548
    %v4557 = vunpack.c.l.b16 %v4549
    %v4558 = vunpack.c.l.b16 %v4550
    %v4559 = vunpack.c.l.b16 %v4551
    %v4560 = vpack.c.b16 %v4557, %v4556
    %v4561 = vpack.c.b16 %v4559, %v4558
    %v4565 = vsel %vm2363, %v4547, 0
    %4567 = vmatprep.subr.bf16.mxu0 0
    %4568 = vmatpush1.bf16.msra.mxu0 %v4560
    %4569 = vmatprep.subr.bf16.mxu0 0
    %4570 = vmatpush1.bf16.msra.mxu0 %v4561
    %4571 = vmatprep.subr.bf16.mxu0 0
    %4572 = vmatpush1.bf16.msra.mxu0 0
    %4573 = vmatprep.subr.bf16.mxu0 0
    %4574 = vmatpush1.bf16.msra.mxu0 0
    %4575 = vmatprep.subr.bf16.mxu0 0
    %4576 = vmatpush1.bf16.msra.mxu0 0
    %4577 = vmatprep.subr.bf16.mxu0 0
    %4578 = vmatpush1.bf16.msra.mxu0 0
    %4579 = vmatprep.subr.bf16.mxu0 0
    %4580 = vmatpush1.bf16.msra.mxu0 0
    %4581 = vmatprep.subr.bf16.mxu0 0
    %4582 = vmatpush1.bf16.msra.mxu0 0
    %4583 = vmatprep.subr.bf16.mxu0 0
    %4584 = vmatpush1.bf16.msra.mxu0 0
    %4585 = vmatprep.subr.bf16.mxu0 0
    %4586 = vmatpush1.bf16.msra.mxu0 0
    %4587 = vmatprep.subr.bf16.mxu0 0
    %4588 = vmatpush1.bf16.msra.mxu0 0
    %4589 = vmatprep.subr.bf16.mxu0 0
    %4590 = vmatpush1.bf16.msra.mxu0 0
    %4591 = vmatprep.subr.bf16.mxu0 0
    %4592 = vmatpush1.bf16.msra.mxu0 0
    %4593 = vmatprep.subr.bf16.mxu0 0
    %4594 = vmatpush1.bf16.msra.mxu0 0
    %4595 = vmatprep.subr.bf16.mxu0 0
    %4596 = vmatpush1.bf16.msra.mxu0 0
    %4597 = vmatprep.subr.bf16.mxu0 0
    %4598 = vmatpush1.bf16.msra.mxu0 0
    %4599 = vmatprep.mubr.bf16.mxu0 0
    %4600 = vmatmul.mubr.bf16.gmra.mrb[0].mxu0 %v4565
    %v4601 = vpop.f32.mrb[0].mxu0
    %v4602 = vadd.f32 0.0, %v4601
    %v4603 = vpop.f32.mrb[0].mxu0
    %v4604 = vpop.f32.mrb[0].mxu0
    %v4605 = vpop.f32.mrb[0].mxu0
    %4606 = vdwg.mxu0
    %v4607 = vlaneseq
    %v4608 = vshrl.u32 %v4607, 7
    %v4609 = vsub.s32 0, %v4608
    %v4610 = vrot.slane %v84, %v4609
    %4612 = vbcast.lane.b32.xlu0 %v4610, 256
    %v4613 = vpop.permute.xlu0 %4612
    %v4614 = vlaneseq
    %v4615 = vshrl.u32 %v4614, 7
    %v4616 = vsub.s32 1, %v4615
    %v4617 = vrot.slane %v84, %v4616
    %4619 = vbcast.lane.b32.xlu0 %v4617, 256
    %v4620 = vpop.permute.xlu0 %4619
    %v4631 = vcombine.low %v4537, %v4538
    %v4632 = vcombine.low %v4539, %v4540
    %v4634 = vunpack.c.l.s4 1966171168
    %v4635 = vunpack.c.0.s8 %v4634
    %v4636 = vlaneseq
    %v4637 = vshrl.u32 %v4636, 7
    %v4638 = vsub.s32 %v4635, %v4637
    %v4639 = vrot.slane %v4631, %v4638
    %v4641 = vunpack.c.l.s4 1966171168
    %v4642 = vunpack.c.0.s8 %v4641
    %v4643 = vlaneseq
    %v4644 = vshrl.u32 %v4643, 7
    %v4645 = vsub.s32 %v4642, %v4644
    %v4646 = vrot.slane %v4632, %v4645
    %v4648 = vunpack.c.l.s4 1966171168
    %v4649 = vunpack.c.0.s8 %v4648
    %v4650 = vlaneseq
    %v4651 = vshrl.u32 %v4650, 7
    %v4652 = vsub.s32 %v4649, %v4651
    %v4653 = vrot.slane %v4541, %v4652
    %v4654 = vcombine.low %v4639, %v4646
    %v4656 = vunpack.c.l.s4 1966171168
    %v4657 = vunpack.c.0.s8 %v4656
    %v4658 = vlaneseq
    %v4659 = vshrl.u32 %v4658, 7
    %v4660 = vsub.s32 %v4657, %v4659
    %v4661 = vrot.slane %v4654, %v4660
    %v4663 = vunpack.c.l.s4 1966171168
    %v4664 = vunpack.c.0.s8 %v4663
    %v4665 = vlaneseq
    %v4666 = vshrl.u32 %v4665, 7
    %v4667 = vsub.s32 %v4664, %v4666
    %v4668 = vrot.slane %v4653, %v4667
    %v4669 = vcombine.low %v4661, %v4668
    %v4670 = vcombine.low %v4542, %v4543
    %v4671 = vcombine.low %v4544, %v4545
    %v4673 = vunpack.c.l.s4 1966171168
    %v4674 = vunpack.c.0.s8 %v4673
    %v4675 = vlaneseq
    %v4676 = vshrl.u32 %v4675, 7
    %v4677 = vsub.s32 %v4674, %v4676
    %v4678 = vrot.slane %v4670, %v4677
    %v4680 = vunpack.c.l.s4 1966171168
    %v4681 = vunpack.c.0.s8 %v4680
    %v4682 = vlaneseq
    %v4683 = vshrl.u32 %v4682, 7
    %v4684 = vsub.s32 %v4681, %v4683
    %v4685 = vrot.slane %v4671, %v4684
    %v4687 = vunpack.c.l.s4 1966171168
    %v4688 = vunpack.c.0.s8 %v4687
    %v4689 = vlaneseq
    %v4690 = vshrl.u32 %v4689, 7
    %v4691 = vsub.s32 %v4688, %v4690
    %v4692 = vrot.slane %v4546, %v4691
    %v4693 = vcombine.low %v4678, %v4685
    %v4695 = vunpack.c.l.s4 1966171168
    %v4696 = vunpack.c.0.s8 %v4695
    %v4697 = vlaneseq
    %v4698 = vshrl.u32 %v4697, 7
    %v4699 = vsub.s32 %v4696, %v4698
    %v4700 = vrot.slane %v4693, %v4699
    %v4702 = vunpack.c.l.s4 1966171168
    %v4703 = vunpack.c.0.s8 %v4702
    %v4704 = vlaneseq
    %v4705 = vshrl.u32 %v4704, 7
    %v4706 = vsub.s32 %v4703, %v4705
    %v4707 = vrot.slane %v4692, %v4706
    %v4708 = vcombine.low %v4700, %v4707
    %v4711 = vmul.f32 %v4613, %v4669
    %v4712 = vmul.f32 %v4620, %v4708
    %vm4713 = vcmask 258048
    %v4714 = vsel %vm4713, %v4711, 0.0
    %v4715 = vrot.slane %v4714, 4
    %v4716 = vadd.f32 %v4714, %v4715
    %v4717 = vrot.slane %v4716, 2
    %v4718 = vadd.f32 %v4716, %v4717
    %v4719 = vrot.slane %v4718, 1
    %v4720 = vadd.f32 %v4718, %v4719
    %v4721 = vsel %vm4713, %v4712, 0.0
    %v4722 = vrot.slane %v4721, 4
    %v4723 = vadd.f32 %v4721, %v4722
    %v4724 = vrot.slane %v4723, 2
    %v4725 = vadd.f32 %v4723, %v4724
    %v4726 = vrot.slane %v4725, 1
    %v4727 = vadd.f32 %v4725, %v4726
    %v4728 = vld [vmem:[%s17] sm:$0xf]
    %v4729 = vld [vmem:[%s17 + $0x4] sm:$0xf]
    %v4730 = vld [vmem:[%s17 + $0x8] sm:$0xf]
    %v4731 = vld [vmem:[%s17 + $0xc] sm:$0xf]
    %v4732 = vld [vmem:[%s17 + $0x10] sm:$0xf]
    %v4733 = vld [vmem:[%s17 + $0x14] sm:$0xf]
    %v4734 = vld [vmem:[%s17 + $0x18] sm:$0xf]
    %v4735 = vld [vmem:[%s17 + $0x1c] sm:$0xf]
    %v4736 = vld [vmem:[%s17 + $0x20] sm:$0xf]
    %v4737 = vld [vmem:[%s17 + $0x24] sm:$0xf]
    %v4738 = vld [vmem:[%s17 + $0x28] sm:$0xf]
    %v4739 = vld [vmem:[%s17 + $0x2c] sm:$0xf]
    %v4740 = vpack.c.bf16 %v2336, %v2336
    %v4741 = vpack.c.bf16 %v4720, %v4720
    %v4742 = vpack.c.bf16 %v4727, %v4727
    %v4745 = vunpack.c.l.b16 %v4741
    %v4746 = vunpack.c.l.b16 %v4742
    %v4747 = vsel %vm295, %v4746, %v4745
    %v4748 = vpack.c.b16 %v4747, %v4747
    %v4753 = vunpack.c.l.b16 %v4732
    %v4754 = vunpack.c.l.b16 %v4733
    %v4755 = vunpack.c.l.b16 %v4734
    %v4756 = vunpack.c.l.b16 %v4735
    %v4757 = vpack.c.b16 %v4754, %v4753
    %v4758 = vpack.c.b16 %v4756, %v4755
    %v4762 = vsel %vm2363, %v4748, 0
    %4764 = vmatprep.subr.bf16.mxu0 0
    %4765 = vmatpush1.bf16.msra.mxu0 %v4757
    %4766 = vmatprep.subr.bf16.mxu0 0
    %4767 = vmatpush1.bf16.msra.mxu0 %v4758
    %4768 = vmatprep.subr.bf16.mxu0 0
    %4769 = vmatpush1.bf16.msra.mxu0 0
    %4770 = vmatprep.subr.bf16.mxu0 0
    %4771 = vmatpush1.bf16.msra.mxu0 0
    %4772 = vmatprep.subr.bf16.mxu0 0
    %4773 = vmatpush1.bf16.msra.mxu0 0
    %4774 = vmatprep.subr.bf16.mxu0 0
    %4775 = vmatpush1.bf16.msra.mxu0 0
    %4776 = vmatprep.subr.bf16.mxu0 0
    %4777 = vmatpush1.bf16.msra.mxu0 0
    %4778 = vmatprep.subr.bf16.mxu0 0
    %4779 = vmatpush1.bf16.msra.mxu0 0
    %4780 = vmatprep.subr.bf16.mxu0 0
    %4781 = vmatpush1.bf16.msra.mxu0 0
    %4782 = vmatprep.subr.bf16.mxu0 0
    %4783 = vmatpush1.bf16.msra.mxu0 0
    %4784 = vmatprep.subr.bf16.mxu0 0
    %4785 = vmatpush1.bf16.msra.mxu0 0
    %4786 = vmatprep.subr.bf16.mxu0 0
    %4787 = vmatpush1.bf16.msra.mxu0 0
    %4788 = vmatprep.subr.bf16.mxu0 0
    %4789 = vmatpush1.bf16.msra.mxu0 0
    %4790 = vmatprep.subr.bf16.mxu0 0
    %4791 = vmatpush1.bf16.msra.mxu0 0
    %4792 = vmatprep.subr.bf16.mxu0 0
    %4793 = vmatpush1.bf16.msra.mxu0 0
    %4794 = vmatprep.subr.bf16.mxu0 0
    %4795 = vmatpush1.bf16.msra.mxu0 0
    %4796 = vmatprep.mubr.bf16.mxu0 0
    %4797 = vmatmul.mubr.bf16.gmra.mrb[0].mxu0 %v4762
    %v4798 = vpop.f32.mrb[0].mxu0
    %v4799 = vadd.f32 0.0, %v4798
    %v4800 = vpop.f32.mrb[0].mxu0
    %v4801 = vpop.f32.mrb[0].mxu0
    %v4802 = vpop.f32.mrb[0].mxu0
    %4803 = vdwg.mxu0
    %v4805 = vrot.slane %v4740, 1
    %v4810 = vunpack.c.l.b16 %v4728
    %v4811 = vunpack.c.l.b16 %v4729
    %v4812 = vunpack.c.l.b16 %v4730
    %v4813 = vunpack.c.l.b16 %v4731
    %v4814 = vpack.c.b16 %v4811, %v4810
    %v4815 = vpack.c.b16 %v4813, %v4812
    %v4819 = vsel %vm2363, %v4805, 0
    %4821 = vmatprep.subr.bf16.mxu0 0
    %4822 = vmatpush1.bf16.msra.mxu0 %v4814
    %4823 = vmatprep.subr.bf16.mxu0 0
    %4824 = vmatpush1.bf16.msra.mxu0 %v4815
    %4825 = vmatprep.subr.bf16.mxu0 0
    %4826 = vmatpush1.bf16.msra.mxu0 0
    %4827 = vmatprep.subr.bf16.mxu0 0
    %4828 = vmatpush1.bf16.msra.mxu0 0
    %4829 = vmatprep.subr.bf16.mxu0 0
    %4830 = vmatpush1.bf16.msra.mxu0 0
    %4831 = vmatprep.subr.bf16.mxu0 0
    %4832 = vmatpush1.bf16.msra.mxu0 0
    %4833 = vmatprep.subr.bf16.mxu0 0
    %4834 = vmatpush1.bf16.msra.mxu0 0
    %4835 = vmatprep.subr.bf16.mxu0 0
    %4836 = vmatpush1.bf16.msra.mxu0 0
    %4837 = vmatprep.subr.bf16.mxu0 0
    %4838 = vmatpush1.bf16.msra.mxu0 0
    %4839 = vmatprep.subr.bf16.mxu0 0
    %4840 = vmatpush1.bf16.msra.mxu0 0
    %4841 = vmatprep.subr.bf16.mxu0 0
    %4842 = vmatpush1.bf16.msra.mxu0 0
    %4843 = vmatprep.subr.bf16.mxu0 0
    %4844 = vmatpush1.bf16.msra.mxu0 0
    %4845 = vmatprep.subr.bf16.mxu0 0
    %4846 = vmatpush1.bf16.msra.mxu0 0
    %4847 = vmatprep.subr.bf16.mxu0 0
    %4848 = vmatpush1.bf16.msra.mxu0 0
    %4849 = vmatprep.subr.bf16.mxu0 0
    %4850 = vmatpush1.bf16.msra.mxu0 0
    %4851 = vmatprep.subr.bf16.mxu0 0
    %4852 = vmatpush1.bf16.msra.mxu0 0
    %4853 = vmatprep.mubr.bf16.mxu0 0
    %4854 = vmatmul.mubr.bf16.gmra.mrb[0].mxu0 %v4819
    %v4855 = vpop.f32.mrb[0].mxu0
    %v4856 = vadd.f32 %v4799, %v4855
    %v4857 = vpop.f32.mrb[0].mxu0
    %v4858 = vpop.f32.mrb[0].mxu0
    %v4859 = vpop.f32.mrb[0].mxu0
    %4860 = vdwg.mxu0
    %v4861 = vpack.c.bf16 %v4602, %v4602
    %v4866 = vunpack.c.l.b16 %v4736
    %v4867 = vunpack.c.l.b16 %v4737
    %v4868 = vunpack.c.l.b16 %v4738
    %v4869 = vunpack.c.l.b16 %v4739
    %v4870 = vpack.c.b16 %v4867, %v4866
    %v4871 = vpack.c.b16 %v4869, %v4868
    %v4875 = vsel %vm2363, %v4861, 0
    %4877 = vmatprep.subr.bf16.mxu0 0
    %4878 = vmatpush1.bf16.msra.mxu0 %v4870
    %4879 = vmatprep.subr.bf16.mxu0 0
    %4880 = vmatpush1.bf16.msra.mxu0 %v4871
    %4881 = vmatprep.subr.bf16.mxu0 0
    %4882 = vmatpush1.bf16.msra.mxu0 0
    %4883 = vmatprep.subr.bf16.mxu0 0
    %4884 = vmatpush1.bf16.msra.mxu0 0
    %4885 = vmatprep.subr.bf16.mxu0 0
    %4886 = vmatpush1.bf16.msra.mxu0 0
    %4887 = vmatprep.subr.bf16.mxu0 0
    %4888 = vmatpush1.bf16.msra.mxu0 0
    %4889 = vmatprep.subr.bf16.mxu0 0
    %4890 = vmatpush1.bf16.msra.mxu0 0
    %4891 = vmatprep.subr.bf16.mxu0 0
    %4892 = vmatpush1.bf16.msra.mxu0 0
    %4893 = vmatprep.subr.bf16.mxu0 0
    %4894 = vmatpush1.bf16.msra.mxu0 0
    %4895 = vmatprep.subr.bf16.mxu0 0
    %4896 = vmatpush1.bf16.msra.mxu0 0
    %4897 = vmatprep.subr.bf16.mxu0 0
    %4898 = vmatpush1.bf16.msra.mxu0 0
    %4899 = vmatprep.subr.bf16.mxu0 0
    %4900 = vmatpush1.bf16.msra.mxu0 0
    %4901 = vmatprep.subr.bf16.mxu0 0
    %4902 = vmatpush1.bf16.msra.mxu0 0
    %4903 = vmatprep.subr.bf16.mxu0 0
    %4904 = vmatpush1.bf16.msra.mxu0 0
    %4905 = vmatprep.subr.bf16.mxu0 0
    %4906 = vmatpush1.bf16.msra.mxu0 0
    %4907 = vmatprep.subr.bf16.mxu0 0
    %4908 = vmatpush1.bf16.msra.mxu0 0
    %4909 = vmatprep.mubr.bf16.mxu0 0
    %4910 = vmatmul.mubr.bf16.gmra.mrb[0].mxu0 %v4875
    %v4911 = vpop.f32.mrb[0].mxu0
    %v4912 = vadd.f32 0.0, %v4911
    %v4913 = vpop.f32.mrb[0].mxu0
    %v4914 = vpop.f32.mrb[0].mxu0
    %v4915 = vpop.f32.mrb[0].mxu0
    %4916 = vdwg.mxu0
    %v4917 = vadd.f32 %v4856, %v4912
    %v4918 = vld [vmem:[%s18] sm:$0x1]
    %v4920 = vlaneseq
    %v4921 = vshrl.u32 %v4920, 7
    %v4922 = vsub.s32 0, %v4921
    %v4923 = vrot.slane %v4918, %v4922
    %v4925 = vadd.f32 %v4917, %v4923
    %vm4926 = vcmp.ge.f32.partialorder %v4925, 0.0
    %v4927 = vmul.f32 %v4925, 0.01
    %v4928 = vsel %vm4926, %v4925, %v4927
    %v4929 = vpack.c.bf16 %v4928, %v4928
    %v4930 = vld [vmem:[%s19] sm:$0xf]
    %v4931 = vld [vmem:[%s19 + $0x4] sm:$0xf]
    %v4932 = vld [vmem:[%s19 + $0x8] sm:$0xf]
    %v4933 = vld [vmem:[%s19 + $0xc] sm:$0xf]
    %v4934 = vld [vmem:[%s19 + $0x10] sm:$0xf]
    %v4935 = vld [vmem:[%s19 + $0x14] sm:$0xf]
    %v4936 = vld [vmem:[%s20] sm:$0x1]
    %v4938 = vlaneseq
    %v4939 = vshrl.u32 %v4938, 7
    %v4940 = vsub.s32 0, %v4939
    %v4941 = vrot.slane %v4936, %v4940
    %v4949 = vunpack.c.l.b16 %v4930
    %v4950 = vunpack.c.l.b16 %v4931
    %v4951 = vunpack.c.l.b16 %v4932
    %v4952 = vunpack.c.l.b16 %v4933
    %v4953 = vunpack.c.l.b16 %v4934
    %v4954 = vunpack.c.l.b16 %v4935
    %v4955 = vpack.c.b16 %v4950, %v4949
    %v4956 = vpack.c.b16 %v4952, %v4951
    %v4957 = vpack.c.b16 %v4954, %v4953
    %vm4961 = vcmask 392192
    %v4963 = vsel %vm4961, %v4929, 0
    %4965 = vmatprep.subr.bf16.mxu0 0
    %4966 = vmatpush1.bf16.msra.mxu0 %v4955
    %4967 = vmatprep.subr.bf16.mxu0 0
    %4968 = vmatpush1.bf16.msra.mxu0 %v4956
    %4969 = vmatprep.subr.bf16.mxu0 0
    %4970 = vmatpush1.bf16.msra.mxu0 %v4957
    %4971 = vmatprep.subr.bf16.mxu0 0
    %4972 = vmatpush1.bf16.msra.mxu0 0
    %4973 = vmatprep.subr.bf16.mxu0 0
    %4974 = vmatpush1.bf16.msra.mxu0 0
    %4975 = vmatprep.subr.bf16.mxu0 0
    %4976 = vmatpush1.bf16.msra.mxu0 0
    %4977 = vmatprep.subr.bf16.mxu0 0
    %4978 = vmatpush1.bf16.msra.mxu0 0
    %4979 = vmatprep.subr.bf16.mxu0 0
    %4980 = vmatpush1.bf16.msra.mxu0 0
    %4981 = vmatprep.subr.bf16.mxu0 0
    %4982 = vmatpush1.bf16.msra.mxu0 0
    %4983 = vmatprep.subr.bf16.mxu0 0
    %4984 = vmatpush1.bf16.msra.mxu0 0
    %4985 = vmatprep.subr.bf16.mxu0 0
    %4986 = vmatpush1.bf16.msra.mxu0 0
    %4987 = vmatprep.subr.bf16.mxu0 0
    %4988 = vmatpush1.bf16.msra.mxu0 0
    %4989 = vmatprep.subr.bf16.mxu0 0
    %4990 = vmatpush1.bf16.msra.mxu0 0
    %4991 = vmatprep.subr.bf16.mxu0 0
    %4992 = vmatpush1.bf16.msra.mxu0 0
    %4993 = vmatprep.subr.bf16.mxu0 0
    %4994 = vmatpush1.bf16.msra.mxu0 0
    %4995 = vmatprep.subr.bf16.mxu0 0
    %4996 = vmatpush1.bf16.msra.mxu0 0
    %4997 = vmatprep.mubr.bf16.mxu0 0
    %4998 = vmatmul.mubr.bf16.gmra.mrb[0].mxu0 %v4963
    %v4999 = vpop.f32.mrb[0].mxu0
    %v5000 = vadd.f32 %v4941, %v4999
    %v5001 = vpop.f32.mrb[0].mxu0
    %v5002 = vpop.f32.mrb[0].mxu0
    %v5003 = vpop.f32.mrb[0].mxu0
    %5004 = vdwg.mxu0
    %vm5005 = vcmask 17408
    %5006 = vst.msk [vmem:[#allocation2] sm:$0x3] %vm5005, %v5000
    // Predicated region
    $region86: #{hierarchical_forward.1} parent=1 // pred_check
      _
    $region87: #{hierarchical_forward.1} parent=1 // pred_check_branch
      %5008 = sbr.rel (0) target = $region89
    $region88: #{hierarchical_forward.1} parent=1 // pred_region
      %s5010 = ssub.s32 32, 32
      %5011 = vsyncadd [#allocation3], %s5010
      %s5013 = sshll.u32 [#allocation2], 4
      %s5014 = int_to_ptr.vmem [resolvable:$true] %s5013
      %5016 = dma.vmem_to_hbm [thread:$0]  %s5014, 32, %s21, [#allocation3]
    $region89: #{hierarchical_forward.1} parent=1 // pred_fallthru
      _
    // Predicated region
    $region90: #{hierarchical_forward.1} parent=1 // pred_check
      _
    $region91: #{hierarchical_forward.1} parent=1 // pred_check_branch
      %5018 = sbr.rel (0) target = $region93
    $region92: #{hierarchical_forward.1} parent=1 // pred_region
      %5019 = dma.done [#allocation3], 32
    $region93: #{hierarchical_forward.1} parent=1 // pred_fallthru
      _
    %5020 = vsyncpa [#allocation3], 1

</llo_original>
